<compile_context>
chip_gen: v7x
topology: tpu7x:2x2x1
jax: 0.10.0
libtpu: 0.0.40
codegen_flags: <defaults>
</compile_context>

<pallas_src>
import functools

import jax
import jax.numpy as jnp
import numpy as np
from jax.experimental import pallas as pl
from jax.experimental.pallas import tpu as pltpu

# ---- GPTConfig ----
N_EMBD = 8
N_HEAD = 2
HEAD_SIZE = N_EMBD // N_HEAD          # 4
BLOCK_SIZE = 16                        # max T
FF = 4 * N_EMBD                        # 32
LN_EPS = 1e-5                          # torch.nn.LayerNorm default
# dropout = 0 -> identity, omitted


def _round_up(v, m):
    return ((v + m - 1) // m) * m


def _layernorm(x, gamma, beta):
    mu = jnp.mean(x, axis=-1, keepdims=True)
    var = jnp.mean((x - mu) ** 2, axis=-1, keepdims=True)
    return (x - mu) * jax.lax.rsqrt(var + LN_EPS) * gamma + beta


def block_kernel(x_ref,
                 ln1_g_ref, ln1_b_ref,
                 wqkv_ref,                       # (C, 3C) fused q|k|v (head-major cols,
                                                 #  1/sqrt(hs) folded into q)
                 wproj_ref, bproj_ref,           # (H, hs, C), (1, C)
                 ln2_g_ref, ln2_b_ref,
                 w1_ref, b1_ref,                 # (C, 4C), (1, 4C)
                 w2_ref, b2_ref,                 # (4C, C), (1, C)
                 o_ref,
                 *, T, n_head, matmul_dtype):
    C = ln1_g_ref.shape[-1]
    hs = C // n_head
    md = matmul_dtype

    block_shape = x_ref.shape            # (rows, 128) lane-dense OR (B_blk, T, C)
    total = 1
    for d in block_shape:
        total *= d
    M = total // C                        # number of (batch, time) rows
    Bb = M // T                           # sequences in this block

    x2 = x_ref[...].reshape(M, C)         # (M, C) token-major view

    # ---------------- self-attention branch: x + sa(ln1(x)) ----------------
    h = _layernorm(x2, ln1_g_ref[...], ln1_b_ref[...])
    qkv = jnp.dot(h.astype(md), wqkv_ref[...],
                  preferred_element_type=jnp.float32)          # (M, 3C) f32

    def split_heads(col0):
        # (M, hs) lane slices per head -> (H*Bb, T, hs), heads stacked on the
        # leading axis (leading-dim reshape + leading-axis concat only).
        return jnp.concatenate(
            [qkv[:, col0 + hd * hs: col0 + (hd + 1) * hs].reshape(Bb, T, hs)
             for hd in range(n_head)], axis=0)

    q = split_heads(0)
    k = split_heads(C)
    v = split_heads(2 * C)

    # scores for both heads in one batched einsum (scale folded into wq)
    s = jnp.einsum('gtd,gsd->gts', q.astype(md), k.astype(md),
                   preferred_element_type=jnp.float32)         # (H*Bb, T, T)

    row = jax.lax.broadcasted_iota(jnp.int32, (T, T), 0)
    col = jax.lax.broadcasted_iota(jnp.int32, (T, T), 1)
    causal = (row >= col)[None, :, :]                          # (1, T, T), built once
    s = jnp.where(causal, s, -1e30)                            # masked_fill(-inf)
    s = s - jnp.max(s, axis=-1, keepdims=True)
    p = jnp.exp(s)
    p = p * pl.reciprocal(jnp.sum(p, axis=-1, keepdims=True), approx=True)

    oh = jnp.einsum('gts,gsd->gtd', p.astype(md), v.astype(md),
                    preferred_element_type=jnp.float32)        # (H*Bb, T, hs)

    # projection of concatenated heads == sum over heads of out_h @ Wproj[h]
    sa = jnp.zeros((M, C), jnp.float32)
    for hd in range(n_head):
        oh_h = oh[hd * Bb:(hd + 1) * Bb].reshape(M, hs)
        sa = sa + jnp.dot(oh_h.astype(md), wproj_ref[hd],
                          preferred_element_type=jnp.float32)
    x2 = x2 + sa + bproj_ref[...]

    # ---------------- feed-forward branch: x + ffwd(ln2(x)) ----------------
    h2 = _layernorm(x2, ln2_g_ref[...], ln2_b_ref[...])
    f = jnp.dot(h2.astype(md), w1_ref[...],
                preferred_element_type=jnp.float32) + b1_ref[...]
    f = jnp.maximum(f, 0.0)
    f = jnp.dot(f.astype(md), w2_ref[...],
                preferred_element_type=jnp.float32) + b2_ref[...]
    x2 = x2 + f

    o_ref[...] = x2.reshape(block_shape)


def _prep_params(params, matmul_dtype):
    """Fuse QKV weights (scale folded into q) and pre-cast MXU operands."""
    scale = HEAD_SIZE ** -0.5

    def fold(w):                                   # (H, C, hs) -> (C, H*hs)
        return jnp.transpose(w, (1, 0, 2)).reshape(N_EMBD, N_HEAD * HEAD_SIZE)

    wqkv = jnp.concatenate([fold(params['wq'] * scale),
                            fold(params['wk']),
                            fold(params['wv'])], axis=-1).astype(matmul_dtype)
    return [params['ln1_g'], params['ln1_b'],
            wqkv,
            params['wproj'].astype(matmul_dtype), params['bproj'],
            params['ln2_g'], params['ln2_b'],
            params['w1'].astype(matmul_dtype), params['b1'],
            params['w2'].astype(matmul_dtype), params['b2']]


def _block_forward(x, params, *, batch_block, matmul_dtype, lane_dense):
    B, T, C = x.shape
    assert C == N_EMBD and T <= BLOCK_SIZE

    # Pad T only to the sublane multiple (8); causal mask keeps real rows exact.
    T_pad = _round_up(T, 8)
    row_elems = T_pad * C
    if lane_dense and row_elems <= 128 and 128 % row_elems == 0:
        lane_pack = 128 // row_elems              # sequences packed per 128-lane row
    else:
        lane_pack = 1
    align = 8 * lane_pack                         # batch granularity (sublane-aligned)

    B_aligned = _round_up(B, align)
    B_blk = _round_up(min(batch_block, B_aligned), align)
    # v7x megacore: keep >=2 grid steps when the batch allows it so the
    # "parallel" axis can shard across both TensorCores.
    if B_aligned >= 2 * align:
        B_blk = min(B_blk, _round_up(B_aligned // 2, align))
    B_pad = _round_up(B, B_blk)
    grid = (B_pad // B_blk,)

    xp = jnp.pad(x.astype(jnp.float32),
                 ((0, B_pad - B), (0, T_pad - T), (0, 0)))

    param_arrays = _prep_params(params, matmul_dtype)
    full = lambda a: pl.BlockSpec(a.shape, lambda b: (0,) * a.ndim)

    if lane_dense:
        # Free metadata reshape of the contiguous HBM buffer -> lane-dense slab.
        lane_dim = lane_pack * row_elems
        xp_io = xp.reshape(B_pad // lane_pack, lane_dim)
        in0_spec = pl.BlockSpec((B_blk // lane_pack, lane_dim), lambda b: (b, 0))
        out_spec = pl.BlockSpec((B_blk // lane_pack, lane_dim), lambda b: (b, 0))
        out_shape = jax.ShapeDtypeStruct(xp_io.shape, jnp.float32)
    else:
        xp_io = xp
        in0_spec = pl.BlockSpec((B_blk, T_pad, C), lambda b: (b, 0, 0))
        out_spec = pl.BlockSpec((B_blk, T_pad, C), lambda b: (b, 0, 0))
        out_shape = jax.ShapeDtypeStruct((B_pad, T_pad, C), jnp.float32)

    # Advisory cost estimate so XLA schedules the custom call sensibly.
    M_tot = B_pad * T_pad
    flops = int(2 * M_tot * C * (3 * C)                               # fused QKV
                + 2 * 2 * N_HEAD * B_pad * T_pad * T_pad * HEAD_SIZE  # scores + PV
                + 2 * M_tot * C * C                                   # head projection
                + 2 * 2 * M_tot * C * FF)                             # FFN
    transcendentals = int(N_HEAD * B_pad * T_pad * T_pad             # exp
                          + 2 * M_tot                                # rsqrt (2 LN)
                          + N_HEAD * B_pad * T_pad)                  # reciprocal
    param_bytes = sum(int(np.prod(a.shape)) * a.dtype.itemsize for a in param_arrays)
    bytes_accessed = int(2 * M_tot * C * 4 + param_bytes)

    out = pl.pallas_call(
        functools.partial(block_kernel, T=T_pad, n_head=N_HEAD,
                          matmul_dtype=matmul_dtype),
        out_shape=out_shape,
        grid_spec=pltpu.PrefetchScalarGridSpec(
            num_scalar_prefetch=0,
            grid=grid,
            in_specs=[in0_spec] + [full(a) for a in param_arrays],
            out_specs=out_spec,
        ),
        compiler_params=pltpu.CompilerParams(
            dimension_semantics=("parallel",),
            vmem_limit_bytes=32 * 1024 * 1024),
        cost_estimate=pl.CostEstimate(flops=flops,
                                      transcendentals=transcendentals,
                                      bytes_accessed=bytes_accessed),
    )(xp_io, *param_arrays)

    out = out.reshape(B_pad, T_pad, C)
    return out[:B, :T]


def block_forward(x, params, *, batch_block=128, matmul_dtype=jnp.bfloat16):
    # Prefer the lane-dense I/O layout (unmasked 128-wide stores); fall back to
    # the 3-D block layout if this Mosaic build cannot lower the in-kernel
    # (rows,128)<->(M,C) relayout, so the kernel always compiles and runs.
    try:
        return _block_forward(x, params, batch_block=batch_block,
                              matmul_dtype=matmul_dtype, lane_dense=True)
    except Exception:
        return _block_forward(x, params, batch_block=batch_block,
                              matmul_dtype=matmul_dtype, lane_dense=False)


# ----------------------- pure-JAX reference -----------------------
def block_reference(x, p):
    def ln(v, g, b):
        mu = jnp.mean(v, axis=-1, keepdims=True)
        var = jnp.mean((v - mu) ** 2, axis=-1, keepdims=True)
        return (v - mu) / jnp.sqrt(var + LN_EPS) * g + b

    B, T, C = x.shape
    h = ln(x, p["ln1_g"][0], p["ln1_b"][0])
    causal = jnp.tril(jnp.ones((T, T), dtype=bool))
    heads = []
    for hd in range(N_HEAD):
        q = h @ p["wq"][hd]
        k = h @ p["wk"][hd]
        v = h @ p["wv"][hd]
        wei = (q @ jnp.swapaxes(k, -1, -2)) * (HEAD_SIZE ** -0.5)
        wei = jnp.where(causal, wei, -jnp.inf)
        wei = jax.nn.softmax(wei, axis=-1)
        heads.append(wei @ v)
    cat = jnp.concatenate(heads, axis=-1)
    wproj_full = p["wproj"].reshape(N_HEAD * HEAD_SIZE, N_EMBD)
    sa = cat @ wproj_full + p["bproj"][0]
    x = x + sa
    h2 = ln(x, p["ln2_g"][0], p["ln2_b"][0])
    f = jnp.maximum(h2 @ p["w1"] + p["b1"][0], 0.0)
    f = f @ p["w2"] + p["b2"][0]
    return x + f


def init_params(key):
    ks = jax.random.split(key, 10)
    s = 0.2
    return {
        "ln1_g": jnp.ones((1, N_EMBD), jnp.float32),
        "ln1_b": jnp.zeros((1, N_EMBD), jnp.float32),
        "wq": s * jax.random.normal(ks[0], (N_HEAD, N_EMBD, HEAD_SIZE), jnp.float32),
        "wk": s * jax.random.normal(ks[1], (N_HEAD, N_EMBD, HEAD_SIZE), jnp.float32),
        "wv": s * jax.random.normal(ks[2], (N_HEAD, N_EMBD, HEAD_SIZE), jnp.float32),
        "wproj": s * jax.random.normal(ks[3], (N_HEAD, HEAD_SIZE, N_EMBD), jnp.float32),
        "bproj": s * jax.random.normal(ks[4], (1, N_EMBD), jnp.float32),
        "ln2_g": jnp.ones((1, N_EMBD), jnp.float32),
        "ln2_b": jnp.zeros((1, N_EMBD), jnp.float32),
        "w1": s * jax.random.normal(ks[5], (N_EMBD, 4 * N_EMBD), jnp.float32),
        "b1": s * jax.random.normal(ks[6], (1, 4 * N_EMBD), jnp.float32),
        "w2": s * jax.random.normal(ks[7], (4 * N_EMBD, N_EMBD), jnp.float32),
        "b2": s * jax.random.normal(ks[8], (1, N_EMBD), jnp.float32),
    }


if __name__ == "__main__":
    key = jax.random.PRNGKey(0)
    pkey, xkey = jax.random.split(key)
    params = init_params(pkey)

    B, T = 2, 8                         # T <= block_size (16)
    x = jax.random.normal(xkey, (B, T, N_EMBD), jnp.float32)

    ref = block_reference(x, params)

    # Exact-math path (f32 MXU inputs): tight tolerance.
    out_f32 = jax.block_until_ready(
        block_forward(x, params, matmul_dtype=jnp.float32))
    np.testing.assert_allclose(np.asarray(out_f32), np.asarray(ref),
                               rtol=5e-3, atol=5e-3)

    # Default path (bf16 MXU inputs, f32 accumulation): bf16-appropriate tolerance.
    out_bf16 = jax.block_until_ready(block_forward(x, params))
    np.testing.assert_allclose(np.asarray(out_bf16), np.asarray(ref),
                               rtol=3e-2, atol=3e-2)

    print("KERNEL_OK")
</pallas_src>

<mosaic_0001>
module attributes {stable_mosaic.version = 11 : i64} {
  func.func @block_kernel(%arg0: i32, %arg1: memref<8x128xf32, #tpu.memory_space<vmem>>, %arg2: memref<1x8xf32, #tpu.memory_space<vmem>>, %arg3: memref<1x8xf32, #tpu.memory_space<vmem>>, %arg4: memref<8x24xf32, #tpu.memory_space<vmem>>, %arg5: memref<2x4x8xf32, #tpu.memory_space<vmem>>, %arg6: memref<1x8xf32, #tpu.memory_space<vmem>>, %arg7: memref<1x8xf32, #tpu.memory_space<vmem>>, %arg8: memref<1x8xf32, #tpu.memory_space<vmem>>, %arg9: memref<8x32xf32, #tpu.memory_space<vmem>>, %arg10: memref<1x32xf32, #tpu.memory_space<vmem>>, %arg11: memref<32x8xf32, #tpu.memory_space<vmem>>, %arg12: memref<1x8xf32, #tpu.memory_space<vmem>>, %arg13: memref<8x128xf32, #tpu.memory_space<vmem>>) attributes {dimension_semantics = [#tpu.dimension_semantics<parallel>], iteration_bounds = array<i64: 1>, scalar_prefetch = 0 : i64, scratch_operands = 0 : i64, tpu.core_type = #tpu.core_type<tc>, window_params = [{transform_indices = @transform_0, window_bounds = array<i64: 8, 128>}, {pipeline_mode = #tpu.pipeline_mode<synchronous>, transform_indices = @transform_1, window_bounds = array<i64: 1, 8>}, {pipeline_mode = #tpu.pipeline_mode<synchronous>, transform_indices = @transform_2, window_bounds = array<i64: 1, 8>}, {pipeline_mode = #tpu.pipeline_mode<synchronous>, transform_indices = @transform_3, window_bounds = array<i64: 8, 24>}, {pipeline_mode = #tpu.pipeline_mode<synchronous>, transform_indices = @transform_4, window_bounds = array<i64: 2, 4, 8>}, {pipeline_mode = #tpu.pipeline_mode<synchronous>, transform_indices = @transform_5, window_bounds = array<i64: 1, 8>}, {pipeline_mode = #tpu.pipeline_mode<synchronous>, transform_indices = @transform_6, window_bounds = array<i64: 1, 8>}, {pipeline_mode = #tpu.pipeline_mode<synchronous>, transform_indices = @transform_7, window_bounds = array<i64: 1, 8>}, {pipeline_mode = #tpu.pipeline_mode<synchronous>, transform_indices = @transform_8, window_bounds = array<i64: 8, 32>}, {pipeline_mode = #tpu.pipeline_mode<synchronous>, transform_indices = @transform_9, window_bounds = array<i64: 1, 32>}, {pipeline_mode = #tpu.pipeline_mode<synchronous>, transform_indices = @transform_10, window_bounds = array<i64: 32, 8>}, {pipeline_mode = #tpu.pipeline_mode<synchronous>, transform_indices = @transform_11, window_bounds = array<i64: 1, 8>}, {transform_indices = @transform_12, window_bounds = array<i64: 8, 128>}]} {
    %c0 = arith.constant 0 : index
    %c0_0 = arith.constant 0 : index
    %0 = vector.load %arg1[%c0, %c0_0] : memref<8x128xf32, #tpu.memory_space<vmem>>, vector<8x128xf32>
    %1 = vector.shape_cast %0 : vector<8x128xf32> to vector<128x8xf32>
    %c0_1 = arith.constant 0 : index
    %c0_2 = arith.constant 0 : index
    %2 = vector.load %arg2[%c0_1, %c0_2] : memref<1x8xf32, #tpu.memory_space<vmem>>, vector<1x8xf32>
    %c0_3 = arith.constant 0 : index
    %c0_4 = arith.constant 0 : index
    %3 = vector.load %arg3[%c0_3, %c0_4] : memref<1x8xf32, #tpu.memory_space<vmem>>, vector<1x8xf32>
    %cst = arith.constant dense<0.000000e+00> : vector<128xf32>
    %4 = vector.multi_reduction <add>, %1, %cst [1] : vector<128x8xf32> to vector<128xf32>
    %5 = vector.shape_cast %4 : vector<128xf32> to vector<128x1xf32>
    %cst_5 = arith.constant 8.000000e+00 : f32
    %6 = vector.broadcast %cst_5 : f32 to vector<128x1xf32>
    %7 = arith.divf %5, %6 : vector<128x1xf32>
    %8 = vector.broadcast %7 : vector<128x1xf32> to vector<128x8xf32>
    %9 = arith.subf %1, %8 : vector<128x8xf32>
    %10 = arith.mulf %9, %9 : vector<128x8xf32>
    %cst_6 = arith.constant dense<0.000000e+00> : vector<128xf32>
    %11 = vector.multi_reduction <add>, %10, %cst_6 [1] : vector<128x8xf32> to vector<128xf32>
    %12 = vector.shape_cast %11 : vector<128xf32> to vector<128x1xf32>
    %cst_7 = arith.constant 8.000000e+00 : f32
    %13 = vector.broadcast %cst_7 : f32 to vector<128x1xf32>
    %14 = arith.divf %12, %13 : vector<128x1xf32>
    %15 = vector.broadcast %7 : vector<128x1xf32> to vector<128x8xf32>
    %16 = arith.subf %1, %15 : vector<128x8xf32>
    %cst_8 = arith.constant 9.99999974E-6 : f32
    %17 = vector.broadcast %cst_8 : f32 to vector<128x1xf32>
    %18 = arith.addf %14, %17 : vector<128x1xf32>
    %19 = math.rsqrt %18 : vector<128x1xf32>
    %20 = vector.broadcast %19 : vector<128x1xf32> to vector<128x8xf32>
    %21 = arith.mulf %16, %20 : vector<128x8xf32>
    %22 = vector.broadcast %2 : vector<1x8xf32> to vector<128x8xf32>
    %23 = arith.mulf %21, %22 : vector<128x8xf32>
    %24 = vector.broadcast %3 : vector<1x8xf32> to vector<128x8xf32>
    %25 = arith.addf %23, %24 : vector<128x8xf32>
    %c0_9 = arith.constant 0 : index
    %c0_10 = arith.constant 0 : index
    %26 = vector.load %arg4[%c0_9, %c0_10] : memref<8x24xf32, #tpu.memory_space<vmem>>, vector<8x24xf32>
    %cst_11 = arith.constant dense<0.000000e+00> : vector<128x24xf32>
    %27 = tpu.matmul %25, %26, %cst_11 {dimension_numbers = #tpu.dot_dimension_numbers<[1], [0], [0], [1], [0, 0, 1, 1], [], []>} : vector<128x8xf32>, vector<8x24xf32>, vector<128x24xf32> -> vector<128x24xf32>
    %28 = vector.extract_strided_slice %27 {offsets = [0, 0], sizes = [128, 4], strides = [1, 1]} : vector<128x24xf32> to vector<128x4xf32>
    %29 = vector.shape_cast %28 : vector<128x4xf32> to vector<16x8x4xf32>
    %30 = vector.extract_strided_slice %27 {offsets = [0, 4], sizes = [128, 4], strides = [1, 1]} : vector<128x24xf32> to vector<128x4xf32>
    %31 = vector.shape_cast %30 : vector<128x4xf32> to vector<16x8x4xf32>
    %32 = tpu.concatenate %29, %31 in 0 : vector<16x8x4xf32>, vector<16x8x4xf32> -> vector<32x8x4xf32>
    %33 = vector.extract_strided_slice %27 {offsets = [0, 8], sizes = [128, 4], strides = [1, 1]} : vector<128x24xf32> to vector<128x4xf32>
    %34 = vector.shape_cast %33 : vector<128x4xf32> to vector<16x8x4xf32>
    %35 = vector.extract_strided_slice %27 {offsets = [0, 12], sizes = [128, 4], strides = [1, 1]} : vector<128x24xf32> to vector<128x4xf32>
    %36 = vector.shape_cast %35 : vector<128x4xf32> to vector<16x8x4xf32>
    %37 = tpu.concatenate %34, %36 in 0 : vector<16x8x4xf32>, vector<16x8x4xf32> -> vector<32x8x4xf32>
    %38 = vector.extract_strided_slice %27 {offsets = [0, 16], sizes = [128, 4], strides = [1, 1]} : vector<128x24xf32> to vector<128x4xf32>
    %39 = vector.shape_cast %38 : vector<128x4xf32> to vector<16x8x4xf32>
    %40 = vector.extract_strided_slice %27 {offsets = [0, 20], sizes = [128, 4], strides = [1, 1]} : vector<128x24xf32> to vector<128x4xf32>
    %41 = vector.shape_cast %40 : vector<128x4xf32> to vector<16x8x4xf32>
    %42 = tpu.concatenate %39, %41 in 0 : vector<16x8x4xf32>, vector<16x8x4xf32> -> vector<32x8x4xf32>
    "tpu.trace_start"() <{level = 10 : i32, message = "gtd,gsd->gts"}> : () -> ()
    %cst_12 = arith.constant dense<0.000000e+00> : vector<32x8x8xf32>
    %43 = tpu.matmul %32, %37, %cst_12 {dimension_numbers = #tpu.dot_dimension_numbers<[2], [2], [1], [1], [0, 0, 0, 1, 1, 1], [0], [0]>} : vector<32x8x4xf32>, vector<32x8x4xf32>, vector<32x8x8xf32> -> vector<32x8x8xf32>
    "tpu.trace_stop"() : () -> ()
    %44 = tpu.iota {dimensions = array<i32: 0>} : vector<8x8xi32>
    %45 = tpu.iota {dimensions = array<i32: 1>} : vector<8x8xi32>
    %46 = arith.cmpi sge, %44, %45 : vector<8x8xi32>
    %47 = vector.shape_cast %46 : vector<8x8xi1> to vector<1x8x8xi1>
    %cst_13 = arith.constant -1.000000e+30 : f32
    %48 = vector.shape_cast %47 : vector<1x8x8xi1> to vector<1x8x8xi1>
    %49 = vector.broadcast %48 : vector<1x8x8xi1> to vector<32x8x8xi1>
    %50 = vector.broadcast %cst_13 : f32 to vector<32x8x8xf32>
    %51 = arith.select %49, %43, %50 : vector<32x8x8xi1>, vector<32x8x8xf32>
    %cst_14 = arith.constant dense<0xFF800000> : vector<32x8xf32>
    %52 = vector.multi_reduction <maximumf>, %51, %cst_14 [2] : vector<32x8x8xf32> to vector<32x8xf32>
    %53 = vector.shape_cast %52 : vector<32x8xf32> to vector<32x8x1xf32>
    %54 = vector.broadcast %53 : vector<32x8x1xf32> to vector<32x8x8xf32>
    %55 = arith.subf %51, %54 : vector<32x8x8xf32>
    %56 = math.exp %55 : vector<32x8x8xf32>
    %cst_15 = arith.constant dense<0.000000e+00> : vector<32x8xf32>
    %57 = vector.multi_reduction <add>, %56, %cst_15 [2] : vector<32x8x8xf32> to vector<32x8xf32>
    %58 = vector.shape_cast %57 : vector<32x8xf32> to vector<32x8x1xf32>
    %59 = tpu.reciprocal %58 {approx = true} : vector<32x8x1xf32> -> vector<32x8x1xf32>
    %60 = vector.broadcast %59 : vector<32x8x1xf32> to vector<32x8x8xf32>
    %61 = arith.mulf %56, %60 : vector<32x8x8xf32>
    "tpu.trace_start"() <{level = 10 : i32, message = "gts,gsd->gtd"}> : () -> ()
    %cst_16 = arith.constant dense<0.000000e+00> : vector<32x8x4xf32>
    %62 = tpu.matmul %61, %42, %cst_16 {dimension_numbers = #tpu.dot_dimension_numbers<[2], [1], [1], [2], [0, 0, 0, 1, 1, 2], [0], [0]>} : vector<32x8x8xf32>, vector<32x8x4xf32>, vector<32x8x4xf32> -> vector<32x8x4xf32>
    %cst_17 = arith.constant 0.000000e+00 : f32
    "tpu.trace_stop"() : () -> ()
    %63 = vector.broadcast %cst_17 : f32 to vector<128x8xf32>
    %64 = vector.extract_strided_slice %62 {offsets = [0, 0, 0], sizes = [16, 8, 4], strides = [1, 1, 1]} : vector<32x8x4xf32> to vector<16x8x4xf32>
    %65 = vector.shape_cast %64 : vector<16x8x4xf32> to vector<128x4xf32>
    %c0_18 = arith.constant 0 : index
    %c0_19 = arith.constant 0 : index
    %c0_20 = arith.constant 0 : index
    %66 = vector.load %arg5[%c0_18, %c0_19, %c0_20] : memref<2x4x8xf32, #tpu.memory_space<vmem>>, vector<1x4x8xf32>
    %67 = vector.shape_cast %66 : vector<1x4x8xf32> to vector<4x8xf32>
    %cst_21 = arith.constant dense<0.000000e+00> : vector<128x8xf32>
    %68 = tpu.matmul %65, %67, %cst_21 {dimension_numbers = #tpu.dot_dimension_numbers<[1], [0], [0], [1], [0, 0, 1, 1], [], []>} : vector<128x4xf32>, vector<4x8xf32>, vector<128x8xf32> -> vector<128x8xf32>
    %69 = arith.addf %63, %68 : vector<128x8xf32>
    %70 = vector.extract_strided_slice %62 {offsets = [16, 0, 0], sizes = [16, 8, 4], strides = [1, 1, 1]} : vector<32x8x4xf32> to vector<16x8x4xf32>
    %71 = vector.shape_cast %70 : vector<16x8x4xf32> to vector<128x4xf32>
    %c1 = arith.constant 1 : index
    %c0_22 = arith.constant 0 : index
    %c0_23 = arith.constant 0 : index
    %72 = vector.load %arg5[%c1, %c0_22, %c0_23] : memref<2x4x8xf32, #tpu.memory_space<vmem>>, vector<1x4x8xf32>
    %73 = vector.shape_cast %72 : vector<1x4x8xf32> to vector<4x8xf32>
    %cst_24 = arith.constant dense<0.000000e+00> : vector<128x8xf32>
    %74 = tpu.matmul %71, %73, %cst_24 {dimension_numbers = #tpu.dot_dimension_numbers<[1], [0], [0], [1], [0, 0, 1, 1], [], []>} : vector<128x4xf32>, vector<4x8xf32>, vector<128x8xf32> -> vector<128x8xf32>
    %75 = arith.addf %69, %74 : vector<128x8xf32>
    %76 = arith.addf %1, %75 : vector<128x8xf32>
    %c0_25 = arith.constant 0 : index
    %c0_26 = arith.constant 0 : index
    %77 = vector.load %arg6[%c0_25, %c0_26] : memref<1x8xf32, #tpu.memory_space<vmem>>, vector<1x8xf32>
    %78 = vector.broadcast %77 : vector<1x8xf32> to vector<128x8xf32>
    %79 = arith.addf %76, %78 : vector<128x8xf32>
    %c0_27 = arith.constant 0 : index
    %c0_28 = arith.constant 0 : index
    %80 = vector.load %arg7[%c0_27, %c0_28] : memref<1x8xf32, #tpu.memory_space<vmem>>, vector<1x8xf32>
    %c0_29 = arith.constant 0 : index
    %c0_30 = arith.constant 0 : index
    %81 = vector.load %arg8[%c0_29, %c0_30] : memref<1x8xf32, #tpu.memory_space<vmem>>, vector<1x8xf32>
    %cst_31 = arith.constant dense<0.000000e+00> : vector<128xf32>
    %82 = vector.multi_reduction <add>, %79, %cst_31 [1] : vector<128x8xf32> to vector<128xf32>
    %83 = vector.shape_cast %82 : vector<128xf32> to vector<128x1xf32>
    %cst_32 = arith.constant 8.000000e+00 : f32
    %84 = vector.broadcast %cst_32 : f32 to vector<128x1xf32>
    %85 = arith.divf %83, %84 : vector<128x1xf32>
    %86 = vector.broadcast %85 : vector<128x1xf32> to vector<128x8xf32>
    %87 = arith.subf %79, %86 : vector<128x8xf32>
    %88 = arith.mulf %87, %87 : vector<128x8xf32>
    %cst_33 = arith.constant dense<0.000000e+00> : vector<128xf32>
    %89 = vector.multi_reduction <add>, %88, %cst_33 [1] : vector<128x8xf32> to vector<128xf32>
    %90 = vector.shape_cast %89 : vector<128xf32> to vector<128x1xf32>
    %cst_34 = arith.constant 8.000000e+00 : f32
    %91 = vector.broadcast %cst_34 : f32 to vector<128x1xf32>
    %92 = arith.divf %90, %91 : vector<128x1xf32>
    %93 = vector.broadcast %85 : vector<128x1xf32> to vector<128x8xf32>
    %94 = arith.subf %79, %93 : vector<128x8xf32>
    %cst_35 = arith.constant 9.99999974E-6 : f32
    %95 = vector.broadcast %cst_35 : f32 to vector<128x1xf32>
    %96 = arith.addf %92, %95 : vector<128x1xf32>
    %97 = math.rsqrt %96 : vector<128x1xf32>
    %98 = vector.broadcast %97 : vector<128x1xf32> to vector<128x8xf32>
    %99 = arith.mulf %94, %98 : vector<128x8xf32>
    %100 = vector.broadcast %80 : vector<1x8xf32> to vector<128x8xf32>
    %101 = arith.mulf %99, %100 : vector<128x8xf32>
    %102 = vector.broadcast %81 : vector<1x8xf32> to vector<128x8xf32>
    %103 = arith.addf %101, %102 : vector<128x8xf32>
    %c0_36 = arith.constant 0 : index
    %c0_37 = arith.constant 0 : index
    %104 = vector.load %arg9[%c0_36, %c0_37] : memref<8x32xf32, #tpu.memory_space<vmem>>, vector<8x32xf32>
    %cst_38 = arith.constant dense<0.000000e+00> : vector<128x32xf32>
    %105 = tpu.matmul %103, %104, %cst_38 {dimension_numbers = #tpu.dot_dimension_numbers<[1], [0], [0], [1], [0, 0, 1, 1], [], []>} : vector<128x8xf32>, vector<8x32xf32>, vector<128x32xf32> -> vector<128x32xf32>
    %c0_39 = arith.constant 0 : index
    %c0_40 = arith.constant 0 : index
    %106 = vector.load %arg10[%c0_39, %c0_40] : memref<1x32xf32, #tpu.memory_space<vmem>>, vector<1x32xf32>
    %107 = vector.broadcast %106 : vector<1x32xf32> to vector<128x32xf32>
    %108 = arith.addf %105, %107 : vector<128x32xf32>
    %cst_41 = arith.constant 0.000000e+00 : f32
    %109 = vector.broadcast %cst_41 : f32 to vector<128x32xf32>
    %110 = arith.maximumf %108, %109 : vector<128x32xf32>
    %c0_42 = arith.constant 0 : index
    %c0_43 = arith.constant 0 : index
    %111 = vector.load %arg11[%c0_42, %c0_43] : memref<32x8xf32, #tpu.memory_space<vmem>>, vector<32x8xf32>
    %cst_44 = arith.constant dense<0.000000e+00> : vector<128x8xf32>
    %112 = tpu.matmul %110, %111, %cst_44 {dimension_numbers = #tpu.dot_dimension_numbers<[1], [0], [0], [1], [0, 0, 1, 1], [], []>} : vector<128x32xf32>, vector<32x8xf32>, vector<128x8xf32> -> vector<128x8xf32>
    %c0_45 = arith.constant 0 : index
    %c0_46 = arith.constant 0 : index
    %113 = vector.load %arg12[%c0_45, %c0_46] : memref<1x8xf32, #tpu.memory_space<vmem>>, vector<1x8xf32>
    %114 = vector.broadcast %113 : vector<1x8xf32> to vector<128x8xf32>
    %115 = arith.addf %112, %114 : vector<128x8xf32>
    %116 = arith.addf %79, %115 : vector<128x8xf32>
    %117 = vector.shape_cast %116 : vector<128x8xf32> to vector<8x128xf32>
    %c0_47 = arith.constant 0 : index
    %c0_48 = arith.constant 0 : index
    %118 = vector.load %arg13[%c0_47, %c0_48] : memref<8x128xf32, #tpu.memory_space<vmem>>, vector<8x128xf32>
    tpu.vector_store %arg13[%c0_47, %c0_48], %117 {strides = array<i32>} : memref<8x128xf32, #tpu.memory_space<vmem>>, vector<8x128xf32>,
    return
  }
  func.func @transform_0(%arg0: i32) -> (i32, i32) {
    %c0_i32 = arith.constant 0 : i32
    %c0_i32_0 = arith.constant 0 : i32
    return %arg0, %c0_i32 : i32, i32
  }
  func.func @transform_1(%arg0: i32) -> (i32, i32) {
    %c0_i32 = arith.constant 0 : i32
    %c0_i32_0 = arith.constant 0 : i32
    %c0_i32_1 = arith.constant 0 : i32
    return %c0_i32, %c0_i32_0 : i32, i32
  }
  func.func @transform_2(%arg0: i32) -> (i32, i32) {
    %c0_i32 = arith.constant 0 : i32
    %c0_i32_0 = arith.constant 0 : i32
    %c0_i32_1 = arith.constant 0 : i32
    return %c0_i32, %c0_i32_0 : i32, i32
  }
  func.func @transform_3(%arg0: i32) -> (i32, i32) {
    %c0_i32 = arith.constant 0 : i32
    %c0_i32_0 = arith.constant 0 : i32
    %c0_i32_1 = arith.constant 0 : i32
    return %c0_i32, %c0_i32_0 : i32, i32
  }
  func.func @transform_4(%arg0: i32) -> (i32, i32, i32) {
    %c0_i32 = arith.constant 0 : i32
    %c0_i32_0 = arith.constant 0 : i32
    %c0_i32_1 = arith.constant 0 : i32
    %c0_i32_2 = arith.constant 0 : i32
    return %c0_i32, %c0_i32_0, %c0_i32_1 : i32, i32, i32
  }
  func.func @transform_5(%arg0: i32) -> (i32, i32) {
    %c0_i32 = arith.constant 0 : i32
    %c0_i32_0 = arith.constant 0 : i32
    %c0_i32_1 = arith.constant 0 : i32
    return %c0_i32, %c0_i32_0 : i32, i32
  }
  func.func @transform_6(%arg0: i32) -> (i32, i32) {
    %c0_i32 = arith.constant 0 : i32
    %c0_i32_0 = arith.constant 0 : i32
    %c0_i32_1 = arith.constant 0 : i32
    return %c0_i32, %c0_i32_0 : i32, i32
  }
  func.func @transform_7(%arg0: i32) -> (i32, i32) {
    %c0_i32 = arith.constant 0 : i32
    %c0_i32_0 = arith.constant 0 : i32
    %c0_i32_1 = arith.constant 0 : i32
    return %c0_i32, %c0_i32_0 : i32, i32
  }
  func.func @transform_8(%arg0: i32) -> (i32, i32) {
    %c0_i32 = arith.constant 0 : i32
    %c0_i32_0 = arith.constant 0 : i32
    %c0_i32_1 = arith.constant 0 : i32
    return %c0_i32, %c0_i32_0 : i32, i32
  }
  func.func @transform_9(%arg0: i32) -> (i32, i32) {
    %c0_i32 = arith.constant 0 : i32
    %c0_i32_0 = arith.constant 0 : i32
    %c0_i32_1 = arith.constant 0 : i32
    return %c0_i32, %c0_i32_0 : i32, i32
  }
  func.func @transform_10(%arg0: i32) -> (i32, i32) {
    %c0_i32 = arith.constant 0 : i32
    %c0_i32_0 = arith.constant 0 : i32
    %c0_i32_1 = arith.constant 0 : i32
    return %c0_i32, %c0_i32_0 : i32, i32
  }
  func.func @transform_11(%arg0: i32) -> (i32, i32) {
    %c0_i32 = arith.constant 0 : i32
    %c0_i32_0 = arith.constant 0 : i32
    %c0_i32_1 = arith.constant 0 : i32
    return %c0_i32, %c0_i32_0 : i32, i32
  }
  func.func @transform_12(%arg0: i32) -> (i32, i32) {
    %c0_i32 = arith.constant 0 : i32
    %c0_i32_0 = arith.constant 0 : i32
    return %arg0, %c0_i32 : i32, i32
  }
}

module attributes {stable_mosaic.version = 11 : i64} {
  func.func @block_kernel(%arg0: i32, %arg1: memref<8x8x8xf32, #tpu.memory_space<vmem>>, %arg2: memref<1x8xf32, #tpu.memory_space<vmem>>, %arg3: memref<1x8xf32, #tpu.memory_space<vmem>>, %arg4: memref<8x24xf32, #tpu.memory_space<vmem>>, %arg5: memref<2x4x8xf32, #tpu.memory_space<vmem>>, %arg6: memref<1x8xf32, #tpu.memory_space<vmem>>, %arg7: memref<1x8xf32, #tpu.memory_space<vmem>>, %arg8: memref<1x8xf32, #tpu.memory_space<vmem>>, %arg9: memref<8x32xf32, #tpu.memory_space<vmem>>, %arg10: memref<1x32xf32, #tpu.memory_space<vmem>>, %arg11: memref<32x8xf32, #tpu.memory_space<vmem>>, %arg12: memref<1x8xf32, #tpu.memory_space<vmem>>, %arg13: memref<8x8x8xf32, #tpu.memory_space<vmem>>) attributes {dimension_semantics = [#tpu.dimension_semantics<parallel>], iteration_bounds = array<i64: 1>, scalar_prefetch = 0 : i64, scratch_operands = 0 : i64, tpu.core_type = #tpu.core_type<tc>, window_params = [{transform_indices = @transform_0, window_bounds = array<i64: 8, 8, 8>}, {pipeline_mode = #tpu.pipeline_mode<synchronous>, transform_indices = @transform_1, window_bounds = array<i64: 1, 8>}, {pipeline_mode = #tpu.pipeline_mode<synchronous>, transform_indices = @transform_2, window_bounds = array<i64: 1, 8>}, {pipeline_mode = #tpu.pipeline_mode<synchronous>, transform_indices = @transform_3, window_bounds = array<i64: 8, 24>}, {pipeline_mode = #tpu.pipeline_mode<synchronous>, transform_indices = @transform_4, window_bounds = array<i64: 2, 4, 8>}, {pipeline_mode = #tpu.pipeline_mode<synchronous>, transform_indices = @transform_5, window_bounds = array<i64: 1, 8>}, {pipeline_mode = #tpu.pipeline_mode<synchronous>, transform_indices = @transform_6, window_bounds = array<i64: 1, 8>}, {pipeline_mode = #tpu.pipeline_mode<synchronous>, transform_indices = @transform_7, window_bounds = array<i64: 1, 8>}, {pipeline_mode = #tpu.pipeline_mode<synchronous>, transform_indices = @transform_8, window_bounds = array<i64: 8, 32>}, {pipeline_mode = #tpu.pipeline_mode<synchronous>, transform_indices = @transform_9, window_bounds = array<i64: 1, 32>}, {pipeline_mode = #tpu.pipeline_mode<synchronous>, transform_indices = @transform_10, window_bounds = array<i64: 32, 8>}, {pipeline_mode = #tpu.pipeline_mode<synchronous>, transform_indices = @transform_11, window_bounds = array<i64: 1, 8>}, {transform_indices = @transform_12, window_bounds = array<i64: 8, 8, 8>}]} {
    %c0 = arith.constant 0 : index
    %c0_0 = arith.constant 0 : index
    %c0_1 = arith.constant 0 : index
    %0 = vector.load %arg1[%c0, %c0_0, %c0_1] : memref<8x8x8xf32, #tpu.memory_space<vmem>>, vector<8x8x8xf32>
    %1 = vector.shape_cast %0 : vector<8x8x8xf32> to vector<64x8xf32>
    %c0_2 = arith.constant 0 : index
    %c0_3 = arith.constant 0 : index
    %2 = vector.load %arg2[%c0_2, %c0_3] : memref<1x8xf32, #tpu.memory_space<vmem>>, vector<1x8xf32>
    %c0_4 = arith.constant 0 : index
    %c0_5 = arith.constant 0 : index
    %3 = vector.load %arg3[%c0_4, %c0_5] : memref<1x8xf32, #tpu.memory_space<vmem>>, vector<1x8xf32>
    %cst = arith.constant dense<0.000000e+00> : vector<64xf32>
    %4 = vector.multi_reduction <add>, %1, %cst [1] : vector<64x8xf32> to vector<64xf32>
    %5 = vector.shape_cast %4 : vector<64xf32> to vector<64x1xf32>
    %cst_6 = arith.constant 8.000000e+00 : f32
    %6 = vector.broadcast %cst_6 : f32 to vector<64x1xf32>
    %7 = arith.divf %5, %6 : vector<64x1xf32>
    %8 = vector.broadcast %7 : vector<64x1xf32> to vector<64x8xf32>
    %9 = arith.subf %1, %8 : vector<64x8xf32>
    %10 = arith.mulf %9, %9 : vector<64x8xf32>
    %cst_7 = arith.constant dense<0.000000e+00> : vector<64xf32>
    %11 = vector.multi_reduction <add>, %10, %cst_7 [1] : vector<64x8xf32> to vector<64xf32>
    %12 = vector.shape_cast %11 : vector<64xf32> to vector<64x1xf32>
    %cst_8 = arith.constant 8.000000e+00 : f32
    %13 = vector.broadcast %cst_8 : f32 to vector<64x1xf32>
    %14 = arith.divf %12, %13 : vector<64x1xf32>
    %15 = vector.broadcast %7 : vector<64x1xf32> to vector<64x8xf32>
    %16 = arith.subf %1, %15 : vector<64x8xf32>
    %cst_9 = arith.constant 9.99999974E-6 : f32
    %17 = vector.broadcast %cst_9 : f32 to vector<64x1xf32>
    %18 = arith.addf %14, %17 : vector<64x1xf32>
    %19 = math.rsqrt %18 : vector<64x1xf32>
    %20 = vector.broadcast %19 : vector<64x1xf32> to vector<64x8xf32>
    %21 = arith.mulf %16, %20 : vector<64x8xf32>
    %22 = vector.broadcast %2 : vector<1x8xf32> to vector<64x8xf32>
    %23 = arith.mulf %21, %22 : vector<64x8xf32>
    %24 = vector.broadcast %3 : vector<1x8xf32> to vector<64x8xf32>
    %25 = arith.addf %23, %24 : vector<64x8xf32>
    %c0_10 = arith.constant 0 : index
    %c0_11 = arith.constant 0 : index
    %26 = vector.load %arg4[%c0_10, %c0_11] : memref<8x24xf32, #tpu.memory_space<vmem>>, vector<8x24xf32>
    %cst_12 = arith.constant dense<0.000000e+00> : vector<64x24xf32>
    %27 = tpu.matmul %25, %26, %cst_12 {dimension_numbers = #tpu.dot_dimension_numbers<[1], [0], [0], [1], [0, 0, 1, 1], [], []>} : vector<64x8xf32>, vector<8x24xf32>, vector<64x24xf32> -> vector<64x24xf32>
    %28 = vector.extract_strided_slice %27 {offsets = [0, 0], sizes = [64, 4], strides = [1, 1]} : vector<64x24xf32> to vector<64x4xf32>
    %29 = vector.shape_cast %28 : vector<64x4xf32> to vector<8x8x4xf32>
    %30 = vector.extract_strided_slice %27 {offsets = [0, 4], sizes = [64, 4], strides = [1, 1]} : vector<64x24xf32> to vector<64x4xf32>
    %31 = vector.shape_cast %30 : vector<64x4xf32> to vector<8x8x4xf32>
    %32 = tpu.concatenate %29, %31 in 0 : vector<8x8x4xf32>, vector<8x8x4xf32> -> vector<16x8x4xf32>
    %33 = vector.extract_strided_slice %27 {offsets = [0, 8], sizes = [64, 4], strides = [1, 1]} : vector<64x24xf32> to vector<64x4xf32>
    %34 = vector.shape_cast %33 : vector<64x4xf32> to vector<8x8x4xf32>
    %35 = vector.extract_strided_slice %27 {offsets = [0, 12], sizes = [64, 4], strides = [1, 1]} : vector<64x24xf32> to vector<64x4xf32>
    %36 = vector.shape_cast %35 : vector<64x4xf32> to vector<8x8x4xf32>
    %37 = tpu.concatenate %34, %36 in 0 : vector<8x8x4xf32>, vector<8x8x4xf32> -> vector<16x8x4xf32>
    %38 = vector.extract_strided_slice %27 {offsets = [0, 16], sizes = [64, 4], strides = [1, 1]} : vector<64x24xf32> to vector<64x4xf32>
    %39 = vector.shape_cast %38 : vector<64x4xf32> to vector<8x8x4xf32>
    %40 = vector.extract_strided_slice %27 {offsets = [0, 20], sizes = [64, 4], strides = [1, 1]} : vector<64x24xf32> to vector<64x4xf32>
    %41 = vector.shape_cast %40 : vector<64x4xf32> to vector<8x8x4xf32>
    %42 = tpu.concatenate %39, %41 in 0 : vector<8x8x4xf32>, vector<8x8x4xf32> -> vector<16x8x4xf32>
    "tpu.trace_start"() <{level = 10 : i32, message = "gtd,gsd->gts"}> : () -> ()
    %cst_13 = arith.constant dense<0.000000e+00> : vector<16x8x8xf32>
    %43 = tpu.matmul %32, %37, %cst_13 {dimension_numbers = #tpu.dot_dimension_numbers<[2], [2], [1], [1], [0, 0, 0, 1, 1, 1], [0], [0]>} : vector<16x8x4xf32>, vector<16x8x4xf32>, vector<16x8x8xf32> -> vector<16x8x8xf32>
    "tpu.trace_stop"() : () -> ()
    %44 = tpu.iota {dimensions = array<i32: 0>} : vector<8x8xi32>
    %45 = tpu.iota {dimensions = array<i32: 1>} : vector<8x8xi32>
    %46 = arith.cmpi sge, %44, %45 : vector<8x8xi32>
    %47 = vector.shape_cast %46 : vector<8x8xi1> to vector<1x8x8xi1>
    %cst_14 = arith.constant -1.000000e+30 : f32
    %48 = vector.shape_cast %47 : vector<1x8x8xi1> to vector<1x8x8xi1>
    %49 = vector.broadcast %48 : vector<1x8x8xi1> to vector<16x8x8xi1>
    %50 = vector.broadcast %cst_14 : f32 to vector<16x8x8xf32>
    %51 = arith.select %49, %43, %50 : vector<16x8x8xi1>, vector<16x8x8xf32>
    %cst_15 = arith.constant dense<0xFF800000> : vector<16x8xf32>
    %52 = vector.multi_reduction <maximumf>, %51, %cst_15 [2] : vector<16x8x8xf32> to vector<16x8xf32>
    %53 = vector.shape_cast %52 : vector<16x8xf32> to vector<16x8x1xf32>
    %54 = vector.broadcast %53 : vector<16x8x1xf32> to vector<16x8x8xf32>
    %55 = arith.subf %51, %54 : vector<16x8x8xf32>
    %56 = math.exp %55 : vector<16x8x8xf32>
    %cst_16 = arith.constant dense<0.000000e+00> : vector<16x8xf32>
    %57 = vector.multi_reduction <add>, %56, %cst_16 [2] : vector<16x8x8xf32> to vector<16x8xf32>
    %58 = vector.shape_cast %57 : vector<16x8xf32> to vector<16x8x1xf32>
    %59 = tpu.reciprocal %58 {approx = true} : vector<16x8x1xf32> -> vector<16x8x1xf32>
    %60 = vector.broadcast %59 : vector<16x8x1xf32> to vector<16x8x8xf32>
    %61 = arith.mulf %56, %60 : vector<16x8x8xf32>
    "tpu.trace_start"() <{level = 10 : i32, message = "gts,gsd->gtd"}> : () -> ()
    %cst_17 = arith.constant dense<0.000000e+00> : vector<16x8x4xf32>
    %62 = tpu.matmul %61, %42, %cst_17 {dimension_numbers = #tpu.dot_dimension_numbers<[2], [1], [1], [2], [0, 0, 0, 1, 1, 2], [0], [0]>} : vector<16x8x8xf32>, vector<16x8x4xf32>, vector<16x8x4xf32> -> vector<16x8x4xf32>
    %cst_18 = arith.constant 0.000000e+00 : f32
    "tpu.trace_stop"() : () -> ()
    %63 = vector.broadcast %cst_18 : f32 to vector<64x8xf32>
    %64 = vector.extract_strided_slice %62 {offsets = [0, 0, 0], sizes = [8, 8, 4], strides = [1, 1, 1]} : vector<16x8x4xf32> to vector<8x8x4xf32>
    %65 = vector.shape_cast %64 : vector<8x8x4xf32> to vector<64x4xf32>
    %c0_19 = arith.constant 0 : index
    %c0_20 = arith.constant 0 : index
    %c0_21 = arith.constant 0 : index
    %66 = vector.load %arg5[%c0_19, %c0_20, %c0_21] : memref<2x4x8xf32, #tpu.memory_space<vmem>>, vector<1x4x8xf32>
    %67 = vector.shape_cast %66 : vector<1x4x8xf32> to vector<4x8xf32>
    %cst_22 = arith.constant dense<0.000000e+00> : vector<64x8xf32>
    %68 = tpu.matmul %65, %67, %cst_22 {dimension_numbers = #tpu.dot_dimension_numbers<[1], [0], [0], [1], [0, 0, 1, 1], [], []>} : vector<64x4xf32>, vector<4x8xf32>, vector<64x8xf32> -> vector<64x8xf32>
    %69 = arith.addf %63, %68 : vector<64x8xf32>
    %70 = vector.extract_strided_slice %62 {offsets = [8, 0, 0], sizes = [8, 8, 4], strides = [1, 1, 1]} : vector<16x8x4xf32> to vector<8x8x4xf32>
    %71 = vector.shape_cast %70 : vector<8x8x4xf32> to vector<64x4xf32>
    %c1 = arith.constant 1 : index
    %c0_23 = arith.constant 0 : index
    %c0_24 = arith.constant 0 : index
    %72 = vector.load %arg5[%c1, %c0_23, %c0_24] : memref<2x4x8xf32, #tpu.memory_space<vmem>>, vector<1x4x8xf32>
    %73 = vector.shape_cast %72 : vector<1x4x8xf32> to vector<4x8xf32>
    %cst_25 = arith.constant dense<0.000000e+00> : vector<64x8xf32>
    %74 = tpu.matmul %71, %73, %cst_25 {dimension_numbers = #tpu.dot_dimension_numbers<[1], [0], [0], [1], [0, 0, 1, 1], [], []>} : vector<64x4xf32>, vector<4x8xf32>, vector<64x8xf32> -> vector<64x8xf32>
    %75 = arith.addf %69, %74 : vector<64x8xf32>
    %76 = arith.addf %1, %75 : vector<64x8xf32>
    %c0_26 = arith.constant 0 : index
    %c0_27 = arith.constant 0 : index
    %77 = vector.load %arg6[%c0_26, %c0_27] : memref<1x8xf32, #tpu.memory_space<vmem>>, vector<1x8xf32>
    %78 = vector.broadcast %77 : vector<1x8xf32> to vector<64x8xf32>
    %79 = arith.addf %76, %78 : vector<64x8xf32>
    %c0_28 = arith.constant 0 : index
    %c0_29 = arith.constant 0 : index
    %80 = vector.load %arg7[%c0_28, %c0_29] : memref<1x8xf32, #tpu.memory_space<vmem>>, vector<1x8xf32>
    %c0_30 = arith.constant 0 : index
    %c0_31 = arith.constant 0 : index
    %81 = vector.load %arg8[%c0_30, %c0_31] : memref<1x8xf32, #tpu.memory_space<vmem>>, vector<1x8xf32>
    %cst_32 = arith.constant dense<0.000000e+00> : vector<64xf32>
    %82 = vector.multi_reduction <add>, %79, %cst_32 [1] : vector<64x8xf32> to vector<64xf32>
    %83 = vector.shape_cast %82 : vector<64xf32> to vector<64x1xf32>
    %cst_33 = arith.constant 8.000000e+00 : f32
    %84 = vector.broadcast %cst_33 : f32 to vector<64x1xf32>
    %85 = arith.divf %83, %84 : vector<64x1xf32>
    %86 = vector.broadcast %85 : vector<64x1xf32> to vector<64x8xf32>
    %87 = arith.subf %79, %86 : vector<64x8xf32>
    %88 = arith.mulf %87, %87 : vector<64x8xf32>
    %cst_34 = arith.constant dense<0.000000e+00> : vector<64xf32>
    %89 = vector.multi_reduction <add>, %88, %cst_34 [1] : vector<64x8xf32> to vector<64xf32>
    %90 = vector.shape_cast %89 : vector<64xf32> to vector<64x1xf32>
    %cst_35 = arith.constant 8.000000e+00 : f32
    %91 = vector.broadcast %cst_35 : f32 to vector<64x1xf32>
    %92 = arith.divf %90, %91 : vector<64x1xf32>
    %93 = vector.broadcast %85 : vector<64x1xf32> to vector<64x8xf32>
    %94 = arith.subf %79, %93 : vector<64x8xf32>
    %cst_36 = arith.constant 9.99999974E-6 : f32
    %95 = vector.broadcast %cst_36 : f32 to vector<64x1xf32>
    %96 = arith.addf %92, %95 : vector<64x1xf32>
    %97 = math.rsqrt %96 : vector<64x1xf32>
    %98 = vector.broadcast %97 : vector<64x1xf32> to vector<64x8xf32>
    %99 = arith.mulf %94, %98 : vector<64x8xf32>
    %100 = vector.broadcast %80 : vector<1x8xf32> to vector<64x8xf32>
    %101 = arith.mulf %99, %100 : vector<64x8xf32>
    %102 = vector.broadcast %81 : vector<1x8xf32> to vector<64x8xf32>
    %103 = arith.addf %101, %102 : vector<64x8xf32>
    %c0_37 = arith.constant 0 : index
    %c0_38 = arith.constant 0 : index
    %104 = vector.load %arg9[%c0_37, %c0_38] : memref<8x32xf32, #tpu.memory_space<vmem>>, vector<8x32xf32>
    %cst_39 = arith.constant dense<0.000000e+00> : vector<64x32xf32>
    %105 = tpu.matmul %103, %104, %cst_39 {dimension_numbers = #tpu.dot_dimension_numbers<[1], [0], [0], [1], [0, 0, 1, 1], [], []>} : vector<64x8xf32>, vector<8x32xf32>, vector<64x32xf32> -> vector<64x32xf32>
    %c0_40 = arith.constant 0 : index
    %c0_41 = arith.constant 0 : index
    %106 = vector.load %arg10[%c0_40, %c0_41] : memref<1x32xf32, #tpu.memory_space<vmem>>, vector<1x32xf32>
    %107 = vector.broadcast %106 : vector<1x32xf32> to vector<64x32xf32>
    %108 = arith.addf %105, %107 : vector<64x32xf32>
    %cst_42 = arith.constant 0.000000e+00 : f32
    %109 = vector.broadcast %cst_42 : f32 to vector<64x32xf32>
    %110 = arith.maximumf %108, %109 : vector<64x32xf32>
    %c0_43 = arith.constant 0 : index
    %c0_44 = arith.constant 0 : index
    %111 = vector.load %arg11[%c0_43, %c0_44] : memref<32x8xf32, #tpu.memory_space<vmem>>, vector<32x8xf32>
    %cst_45 = arith.constant dense<0.000000e+00> : vector<64x8xf32>
    %112 = tpu.matmul %110, %111, %cst_45 {dimension_numbers = #tpu.dot_dimension_numbers<[1], [0], [0], [1], [0, 0, 1, 1], [], []>} : vector<64x32xf32>, vector<32x8xf32>, vector<64x8xf32> -> vector<64x8xf32>
    %c0_46 = arith.constant 0 : index
    %c0_47 = arith.constant 0 : index
    %113 = vector.load %arg12[%c0_46, %c0_47] : memref<1x8xf32, #tpu.memory_space<vmem>>, vector<1x8xf32>
    %114 = vector.broadcast %113 : vector<1x8xf32> to vector<64x8xf32>
    %115 = arith.addf %112, %114 : vector<64x8xf32>
    %116 = arith.addf %79, %115 : vector<64x8xf32>
    %117 = vector.shape_cast %116 : vector<64x8xf32> to vector<8x8x8xf32>
    %c0_48 = arith.constant 0 : index
    %c0_49 = arith.constant 0 : index
    %c0_50 = arith.constant 0 : index
    %118 = vector.load %arg13[%c0_48, %c0_49, %c0_50] : memref<8x8x8xf32, #tpu.memory_space<vmem>>, vector<8x8x8xf32>
    tpu.vector_store %arg13[%c0_48, %c0_49, %c0_50], %117 {strides = array<i32>} : memref<8x8x8xf32, #tpu.memory_space<vmem>>, vector<8x8x8xf32>,
    return
  }
  func.func @transform_0(%arg0: i32) -> (i32, i32, i32) {
    %c0_i32 = arith.constant 0 : i32
    %c0_i32_0 = arith.constant 0 : i32
    %c0_i32_1 = arith.constant 0 : i32
    return %arg0, %c0_i32, %c0_i32_0 : i32, i32, i32
  }
  func.func @transform_1(%arg0: i32) -> (i32, i32) {
    %c0_i32 = arith.constant 0 : i32
    %c0_i32_0 = arith.constant 0 : i32
    %c0_i32_1 = arith.constant 0 : i32
    return %c0_i32, %c0_i32_0 : i32, i32
  }
  func.func @transform_2(%arg0: i32) -> (i32, i32) {
    %c0_i32 = arith.constant 0 : i32
    %c0_i32_0 = arith.constant 0 : i32
    %c0_i32_1 = arith.constant 0 : i32
    return %c0_i32, %c0_i32_0 : i32, i32
  }
  func.func @transform_3(%arg0: i32) -> (i32, i32) {
    %c0_i32 = arith.constant 0 : i32
    %c0_i32_0 = arith.constant 0 : i32
    %c0_i32_1 = arith.constant 0 : i32
    return %c0_i32, %c0_i32_0 : i32, i32
  }
  func.func @transform_4(%arg0: i32) -> (i32, i32, i32) {
    %c0_i32 = arith.constant 0 : i32
    %c0_i32_0 = arith.constant 0 : i32
    %c0_i32_1 = arith.constant 0 : i32
    %c0_i32_2 = arith.constant 0 : i32
    return %c0_i32, %c0_i32_0, %c0_i32_1 : i32, i32, i32
  }
  func.func @transform_5(%arg0: i32) -> (i32, i32) {
    %c0_i32 = arith.constant 0 : i32
    %c0_i32_0 = arith.constant 0 : i32
    %c0_i32_1 = arith.constant 0 : i32
    return %c0_i32, %c0_i32_0 : i32, i32
  }
  func.func @transform_6(%arg0: i32) -> (i32, i32) {
    %c0_i32 = arith.constant 0 : i32
    %c0_i32_0 = arith.constant 0 : i32
    %c0_i32_1 = arith.constant 0 : i32
    return %c0_i32, %c0_i32_0 : i32, i32
  }
  func.func @transform_7(%arg0: i32) -> (i32, i32) {
    %c0_i32 = arith.constant 0 : i32
    %c0_i32_0 = arith.constant 0 : i32
    %c0_i32_1 = arith.constant 0 : i32
    return %c0_i32, %c0_i32_0 : i32, i32
  }
  func.func @transform_8(%arg0: i32) -> (i32, i32) {
    %c0_i32 = arith.constant 0 : i32
    %c0_i32_0 = arith.constant 0 : i32
    %c0_i32_1 = arith.constant 0 : i32
    return %c0_i32, %c0_i32_0 : i32, i32
  }
  func.func @transform_9(%arg0: i32) -> (i32, i32) {
    %c0_i32 = arith.constant 0 : i32
    %c0_i32_0 = arith.constant 0 : i32
    %c0_i32_1 = arith.constant 0 : i32
    return %c0_i32, %c0_i32_0 : i32, i32
  }
  func.func @transform_10(%arg0: i32) -> (i32, i32) {
    %c0_i32 = arith.constant 0 : i32
    %c0_i32_0 = arith.constant 0 : i32
    %c0_i32_1 = arith.constant 0 : i32
    return %c0_i32, %c0_i32_0 : i32, i32
  }
  func.func @transform_11(%arg0: i32) -> (i32, i32) {
    %c0_i32 = arith.constant 0 : i32
    %c0_i32_0 = arith.constant 0 : i32
    %c0_i32_1 = arith.constant 0 : i32
    return %c0_i32, %c0_i32_0 : i32, i32
  }
  func.func @transform_12(%arg0: i32) -> (i32, i32, i32) {
    %c0_i32 = arith.constant 0 : i32
    %c0_i32_0 = arith.constant 0 : i32
    %c0_i32_1 = arith.constant 0 : i32
    return %arg0, %c0_i32, %c0_i32_0 : i32, i32, i32
  }
}

</mosaic_0001>

<llo_original>
// kernel: tpu_custom_call.1
$region0: #{tpu_custom_call.1}
  #allocation0 [shape = 'u32[]', space=smem, size = 0x4, offset = 0x4, fixed_abs, tag = 'smem constant byte address 0x4 - core index']
  #allocation1 [shape = 'u32[144,128]{1,0:T(1,128)}', space=vmem, size = 0x12000, scoped, tag = 'internal scratch']
  %s0 = inlined_call_operand.hbm [shape: f32[8,8,8], index: 0, kind: input, shape index: {}]
  %s1 = inlined_call_operand.vmem [shape: f32[1,8], index: 1, kind: input, shape index: {}]
  %s2 = inlined_call_operand.vmem [shape: f32[1,8], index: 2, kind: input, shape index: {}]
  %s3 = inlined_call_operand.vmem [shape: f32[8,24], index: 3, kind: input, shape index: {}]
  %s4 = inlined_call_operand.vmem [shape: f32[2,4,8], index: 4, kind: input, shape index: {}]
  %s5 = inlined_call_operand.vmem [shape: f32[1,8], index: 5, kind: input, shape index: {}]
  %s6 = inlined_call_operand.vmem [shape: f32[1,8], index: 6, kind: input, shape index: {}]
  %s7 = inlined_call_operand.vmem [shape: f32[1,8], index: 7, kind: input, shape index: {}]
  %s8 = inlined_call_operand.vmem [shape: f32[8,32], index: 8, kind: input, shape index: {}]
  %s9 = inlined_call_operand.vmem [shape: f32[1,32], index: 9, kind: input, shape index: {}]
  %s10 = inlined_call_operand.vmem [shape: f32[32,8], index: 10, kind: input, shape index: {}]
  %s11 = inlined_call_operand.vmem [shape: f32[1,8], index: 11, kind: input, shape index: {}]
  %s12 = inlined_call_operand.hbm [shape: f32[8,8,8], index: 12, kind: output, shape index: {}]
  %s13 = sld [smem:[#allocation0]]
  $region62: #{tpu_custom_call.1} parent=0
    _
  %s15 = ssub.s32 1, %s13
  %s16 = scalar_select 0, %s15, %s13
  $region1: #{tpu_custom_call.1} parent=0
    #allocation2 [shape = 'u8[32768]{0}', space=vmem, size = 0x8000, scoped, tag = 'input window, operand 0, single buffered']
    #allocation3 [shape = 's32[1]{0}', space=sflag, size = 0x4, scoped, tag = 'scoped memory for tpu_custom_call.1']
    #allocation4 [shape = 's32[1]{0}', space=sflag, size = 0x4, scoped, tag = 'scoped memory for tpu_custom_call.1']
    #allocation5 [shape = 'u8[32768]{0}', space=vmem, size = 0x8000, scoped, tag = 'output window, operand 0, single buffered']
    %17 = vsyncpa [#allocation3], 0
    %18 = vsyncpa [#allocation4], 0
    // Predicated region
    $region2: #{tpu_custom_call.1} parent=1 // pred_check
      _
    $region3: #{tpu_custom_call.1} parent=1 // pred_check_branch
      %20 = sbr.rel (0) target = $region5
    $region4: #{tpu_custom_call.1} parent=1 // pred_region
      %s22 = ssub.s32 1024, 1024
      %23 = vsyncadd [#allocation3], %s22
      %s24 = sshll.u32 [#allocation2], 4
      %s25 = int_to_ptr.vmem [resolvable:$true] %s24
      %30 = dma.hbm_to_vmem [thread:$0]  %s0, 1024, %s25, [#allocation3], 128, 128, 8
    $region5: #{tpu_custom_call.1} parent=1 // pred_fallthru
      _
    // Predicated region
    $region6: #{tpu_custom_call.1} parent=1 // pred_check
      _
    $region7: #{tpu_custom_call.1} parent=1 // pred_check_branch
      %32 = sbr.rel (0) target = $region9
    $region8: #{tpu_custom_call.1} parent=1 // pred_region
      _
    $region9: #{tpu_custom_call.1} parent=1 // pred_fallthru
      _
    // Predicated region
    $region10: #{tpu_custom_call.1} parent=1 // pred_check
      _
    $region11: #{tpu_custom_call.1} parent=1 // pred_check_branch
      %34 = sbr.rel (0) target = $region13
    $region12: #{tpu_custom_call.1} parent=1 // pred_region
      _
    $region13: #{tpu_custom_call.1} parent=1 // pred_fallthru
      _
    // Predicated region
    $region14: #{tpu_custom_call.1} parent=1 // pred_check
      _
    $region15: #{tpu_custom_call.1} parent=1 // pred_check_branch
      %36 = sbr.rel (0) target = $region17
    $region16: #{tpu_custom_call.1} parent=1 // pred_region
      _
    $region17: #{tpu_custom_call.1} parent=1 // pred_fallthru
      _
    // Predicated region
    $region18: #{tpu_custom_call.1} parent=1 // pred_check
      _
    $region19: #{tpu_custom_call.1} parent=1 // pred_check_branch
      %38 = sbr.rel (0) target = $region21
    $region20: #{tpu_custom_call.1} parent=1 // pred_region
      _
    $region21: #{tpu_custom_call.1} parent=1 // pred_fallthru
      _
    // Predicated region
    $region22: #{tpu_custom_call.1} parent=1 // pred_check
      _
    $region23: #{tpu_custom_call.1} parent=1 // pred_check_branch
      %40 = sbr.rel (0) target = $region25
    $region24: #{tpu_custom_call.1} parent=1 // pred_region
      _
    $region25: #{tpu_custom_call.1} parent=1 // pred_fallthru
      _
    // Predicated region
    $region26: #{tpu_custom_call.1} parent=1 // pred_check
      _
    $region27: #{tpu_custom_call.1} parent=1 // pred_check_branch
      %42 = sbr.rel (0) target = $region29
    $region28: #{tpu_custom_call.1} parent=1 // pred_region
      _
    $region29: #{tpu_custom_call.1} parent=1 // pred_fallthru
      _
    // Predicated region
    $region30: #{tpu_custom_call.1} parent=1 // pred_check
      _
    $region31: #{tpu_custom_call.1} parent=1 // pred_check_branch
      %44 = sbr.rel (0) target = $region33
    $region32: #{tpu_custom_call.1} parent=1 // pred_region
      _
    $region33: #{tpu_custom_call.1} parent=1 // pred_fallthru
      _
    // Predicated region
    $region34: #{tpu_custom_call.1} parent=1 // pred_check
      _
    $region35: #{tpu_custom_call.1} parent=1 // pred_check_branch
      %46 = sbr.rel (0) target = $region37
    $region36: #{tpu_custom_call.1} parent=1 // pred_region
      _
    $region37: #{tpu_custom_call.1} parent=1 // pred_fallthru
      _
    // Predicated region
    $region38: #{tpu_custom_call.1} parent=1 // pred_check
      _
    $region39: #{tpu_custom_call.1} parent=1 // pred_check_branch
      %48 = sbr.rel (0) target = $region41
    $region40: #{tpu_custom_call.1} parent=1 // pred_region
      _
    $region41: #{tpu_custom_call.1} parent=1 // pred_fallthru
      _
    // Predicated region
    $region42: #{tpu_custom_call.1} parent=1 // pred_check
      _
    $region43: #{tpu_custom_call.1} parent=1 // pred_check_branch
      %50 = sbr.rel (0) target = $region45
    $region44: #{tpu_custom_call.1} parent=1 // pred_region
      _
    $region45: #{tpu_custom_call.1} parent=1 // pred_fallthru
      _
    // Predicated region
    $region46: #{tpu_custom_call.1} parent=1 // pred_check
      _
    $region47: #{tpu_custom_call.1} parent=1 // pred_check_branch
      %52 = sbr.rel (0) target = $region49
    $region48: #{tpu_custom_call.1} parent=1 // pred_region
      _
    $region49: #{tpu_custom_call.1} parent=1 // pred_fallthru
      _
    // Predicated region
    $region50: #{tpu_custom_call.1} parent=1 // pred_check
      _
    $region51: #{tpu_custom_call.1} parent=1 // pred_check_branch
      %54 = sbr.rel (0) target = $region53
    $region52: #{tpu_custom_call.1} parent=1 // pred_region
      %55 = dma.done [#allocation3], 1024
    $region53: #{tpu_custom_call.1} parent=1 // pred_fallthru
      _
    %v56 = vld [vmem:[#allocation2] sm:$0xff]
    %v57 = vld [vmem:[#allocation2 + $0x8] sm:$0xff]
    %v58 = vld [vmem:[#allocation2 + $0x10] sm:$0xff]
    %v59 = vld [vmem:[#allocation2 + $0x18] sm:$0xff]
    %v60 = vld [vmem:[#allocation2 + $0x20] sm:$0xff]
    %v61 = vld [vmem:[#allocation2 + $0x28] sm:$0xff]
    %v62 = vld [vmem:[#allocation2 + $0x30] sm:$0xff]
    %v63 = vld [vmem:[#allocation2 + $0x38] sm:$0xff]
    %v64 = vld [vmem:[%s1] sm:$0x1]
    %v65 = vld [vmem:[%s2] sm:$0x1]
    %vm66 = vcmask 64512
    %v67 = vsel %vm66, %v56, 0.0
    %68 = vadd.xlane.f32.xlu0 %v67
    %v69 = vpop.xlane.xlu0 %68
    %v70 = vsel %vm66, %v57, 0.0
    %71 = vadd.xlane.f32.xlu0 %v70
    %v72 = vpop.xlane.xlu0 %71
    %v73 = vsel %vm66, %v58, 0.0
    %74 = vadd.xlane.f32.xlu0 %v73
    %v75 = vpop.xlane.xlu0 %74
    %v76 = vsel %vm66, %v59, 0.0
    %77 = vadd.xlane.f32.xlu0 %v76
    %v78 = vpop.xlane.xlu0 %77
    %v79 = vsel %vm66, %v60, 0.0
    %80 = vadd.xlane.f32.xlu0 %v79
    %v81 = vpop.xlane.xlu0 %80
    %v82 = vsel %vm66, %v61, 0.0
    %83 = vadd.xlane.f32.xlu0 %v82
    %v84 = vpop.xlane.xlu0 %83
    %v85 = vsel %vm66, %v62, 0.0
    %86 = vadd.xlane.f32.xlu0 %v85
    %v87 = vpop.xlane.xlu0 %86
    %v88 = vsel %vm66, %v63, 0.0
    %89 = vadd.xlane.f32.xlu0 %v88
    %v90 = vpop.xlane.xlu0 %89
    %v91 = vrcp.pop 8.0
    %v92 = vmul.f32 %v69, %v91
    %v93 = vmul.f32 %v72, %v91
    %v94 = vmul.f32 %v75, %v91
    %v95 = vmul.f32 %v78, %v91
    %v96 = vmul.f32 %v81, %v91
    %v97 = vmul.f32 %v84, %v91
    %v98 = vmul.f32 %v87, %v91
    %v99 = vmul.f32 %v90, %v91
    %v100 = vsub.f32 %v56, %v92
    %v101 = vsub.f32 %v57, %v93
    %v102 = vsub.f32 %v58, %v94
    %v103 = vsub.f32 %v59, %v95
    %v104 = vsub.f32 %v60, %v96
    %v105 = vsub.f32 %v61, %v97
    %v106 = vsub.f32 %v62, %v98
    %v107 = vsub.f32 %v63, %v99
    %v108 = vmul.f32 %v100, %v100
    %v109 = vmul.f32 %v101, %v101
    %v110 = vmul.f32 %v102, %v102
    %v111 = vmul.f32 %v103, %v103
    %v112 = vmul.f32 %v104, %v104
    %v113 = vmul.f32 %v105, %v105
    %v114 = vmul.f32 %v106, %v106
    %v115 = vmul.f32 %v107, %v107
    %v116 = vsel %vm66, %v108, 0.0
    %117 = vadd.xlane.f32.xlu0 %v116
    %v118 = vpop.xlane.xlu0 %117
    %v119 = vsel %vm66, %v109, 0.0
    %120 = vadd.xlane.f32.xlu0 %v119
    %v121 = vpop.xlane.xlu0 %120
    %v122 = vsel %vm66, %v110, 0.0
    %123 = vadd.xlane.f32.xlu0 %v122
    %v124 = vpop.xlane.xlu0 %123
    %v125 = vsel %vm66, %v111, 0.0
    %126 = vadd.xlane.f32.xlu0 %v125
    %v127 = vpop.xlane.xlu0 %126
    %v128 = vsel %vm66, %v112, 0.0
    %129 = vadd.xlane.f32.xlu0 %v128
    %v130 = vpop.xlane.xlu0 %129
    %v131 = vsel %vm66, %v113, 0.0
    %132 = vadd.xlane.f32.xlu0 %v131
    %v133 = vpop.xlane.xlu0 %132
    %v134 = vsel %vm66, %v114, 0.0
    %135 = vadd.xlane.f32.xlu0 %v134
    %v136 = vpop.xlane.xlu0 %135
    %v137 = vsel %vm66, %v115, 0.0
    %138 = vadd.xlane.f32.xlu0 %v137
    %v139 = vpop.xlane.xlu0 %138
    %v140 = vmul.f32 %v118, %v91
    %v141 = vmul.f32 %v121, %v91
    %v142 = vmul.f32 %v124, %v91
    %v143 = vmul.f32 %v127, %v91
    %v144 = vmul.f32 %v130, %v91
    %v145 = vmul.f32 %v133, %v91
    %v146 = vmul.f32 %v136, %v91
    %v147 = vmul.f32 %v139, %v91
    %v148 = vadd.f32 %v140, 1e-05
    %v149 = vadd.f32 %v141, 1e-05
    %v150 = vadd.f32 %v142, 1e-05
    %v151 = vadd.f32 %v143, 1e-05
    %v152 = vadd.f32 %v144, 1e-05
    %v153 = vadd.f32 %v145, 1e-05
    %v154 = vadd.f32 %v146, 1e-05
    %v155 = vadd.f32 %v147, 1e-05
    %v156 = vrsqrt.pop %v148
    %v157 = vrsqrt.pop %v149
    %v158 = vrsqrt.pop %v150
    %v159 = vrsqrt.pop %v151
    %v160 = vrsqrt.pop %v152
    %v161 = vrsqrt.pop %v153
    %v162 = vrsqrt.pop %v154
    %v163 = vrsqrt.pop %v155
    %v164 = vmul.f32 %v100, %v156
    %v165 = vmul.f32 %v101, %v157
    %v166 = vmul.f32 %v102, %v158
    %v167 = vmul.f32 %v103, %v159
    %v168 = vmul.f32 %v104, %v160
    %v169 = vmul.f32 %v105, %v161
    %v170 = vmul.f32 %v106, %v162
    %v171 = vmul.f32 %v107, %v163
    %v173 = vlaneseq
    %v174 = vshrl.u32 %v173, 7
    %v175 = vsub.s32 0, %v174
    %v176 = vrot.slane %v64, %v175
    %v178 = vmul.f32 %v164, %v176
    %v179 = vmul.f32 %v165, %v176
    %v180 = vmul.f32 %v166, %v176
    %v181 = vmul.f32 %v167, %v176
    %v182 = vmul.f32 %v168, %v176
    %v183 = vmul.f32 %v169, %v176
    %v184 = vmul.f32 %v170, %v176
    %v185 = vmul.f32 %v171, %v176
    %v187 = vlaneseq
    %v188 = vshrl.u32 %v187, 7
    %v189 = vsub.s32 0, %v188
    %v190 = vrot.slane %v65, %v189
    %v192 = vadd.f32 %v178, %v190
    %v193 = vadd.f32 %v179, %v190
    %v194 = vadd.f32 %v180, %v190
    %v195 = vadd.f32 %v181, %v190
    %v196 = vadd.f32 %v182, %v190
    %v197 = vadd.f32 %v183, %v190
    %v198 = vadd.f32 %v184, %v190
    %v199 = vadd.f32 %v185, %v190
    %v200 = vld [vmem:[%s3] sm:$0xff]
    %v202 = vsel %vm66, %v192, 0
    %v205 = vsel %vm66, %v193, 0
    %v208 = vsel %vm66, %v194, 0
    %v211 = vsel %vm66, %v195, 0
    %v214 = vsel %vm66, %v196, 0
    %v217 = vsel %vm66, %v197, 0
    %v220 = vsel %vm66, %v198, 0
    %v223 = vsel %vm66, %v199, 0
    %225 = vmatprep.subr.mxu0 0.0
    %226 = vmatpush1.msra.mxu0 %v200
    %227 = vmatprep.subr.mxu0 0.0
    %228 = vmatpush1.msra.mxu0 0.0
    %229 = vmatprep.subr.mxu0 0.0
    %230 = vmatpush1.msra.mxu0 0.0
    %231 = vmatprep.subr.mxu0 0.0
    %232 = vmatpush1.msra.mxu0 0.0
    %233 = vmatprep.subr.mxu0 0.0
    %234 = vmatpush1.msra.mxu0 0.0
    %235 = vmatprep.subr.mxu0 0.0
    %236 = vmatpush1.msra.mxu0 0.0
    %237 = vmatprep.subr.mxu0 0.0
    %238 = vmatpush1.msra.mxu0 0.0
    %239 = vmatprep.subr.mxu0 0.0
    %240 = vmatpush1.msra.mxu0 0.0
    %241 = vmatprep.subr.mxu0 0.0
    %242 = vmatpush1.msra.mxu0 0.0
    %243 = vmatprep.subr.mxu0 0.0
    %244 = vmatpush1.msra.mxu0 0.0
    %245 = vmatprep.subr.mxu0 0.0
    %246 = vmatpush1.msra.mxu0 0.0
    %247 = vmatprep.subr.mxu0 0.0
    %248 = vmatpush1.msra.mxu0 0.0
    %249 = vmatprep.subr.mxu0 0.0
    %250 = vmatpush1.msra.mxu0 0.0
    %251 = vmatprep.subr.mxu0 0.0
    %252 = vmatpush1.msra.mxu0 0.0
    %253 = vmatprep.subr.mxu0 0.0
    %254 = vmatpush1.msra.mxu0 0.0
    %255 = vmatprep.subr.mxu0 0.0
    %256 = vmatpush1.msra.mxu0 0.0
    %257 = vmatprep.subr.mxu0 0.0
    %258 = vmatpush1.msra.mxu0 0.0
    %259 = vmatprep.subr.mxu0 0.0
    %260 = vmatpush1.msra.mxu0 0.0
    %261 = vmatprep.subr.mxu0 0.0
    %262 = vmatpush1.msra.mxu0 0.0
    %263 = vmatprep.subr.mxu0 0.0
    %264 = vmatpush1.msra.mxu0 0.0
    %265 = vmatprep.subr.mxu0 0.0
    %266 = vmatpush1.msra.mxu0 0.0
    %267 = vmatprep.subr.mxu0 0.0
    %268 = vmatpush1.msra.mxu0 0.0
    %269 = vmatprep.subr.mxu0 0.0
    %270 = vmatpush1.msra.mxu0 0.0
    %271 = vmatprep.subr.mxu0 0.0
    %272 = vmatpush1.msra.mxu0 0.0
    %273 = vmatprep.subr.mxu0 0.0
    %274 = vmatpush1.msra.mxu0 0.0
    %275 = vmatprep.subr.mxu0 0.0
    %276 = vmatpush1.msra.mxu0 0.0
    %277 = vmatprep.subr.mxu0 0.0
    %278 = vmatpush1.msra.mxu0 0.0
    %279 = vmatprep.subr.mxu0 0.0
    %280 = vmatpush1.msra.mxu0 0.0
    %281 = vmatprep.subr.mxu0 0.0
    %282 = vmatpush1.msra.mxu0 0.0
    %283 = vmatprep.subr.mxu0 0.0
    %284 = vmatpush1.msra.mxu0 0.0
    %285 = vmatprep.subr.mxu0 0.0
    %286 = vmatpush1.msra.mxu0 0.0
    %287 = vmatprep.subr.mxu0 0.0
    %288 = vmatpush1.msra.mxu0 0.0
    %289 = vmatprep.mubr.f32.mxu0 0.0
    %290 = vmatmul.mubr.f32.gmra.mrb[0].mxu0 %v202
    %v291 = vpop.f32.mrb[0].mxu0
    %v292 = vadd.f32 0.0, %v291
    %v293 = vpop.f32.mrb[0].mxu0
    %294 = vmatprep.mubr.f32.mxu0 0.0
    %295 = vmatmul.mubr.f32.gmra.mrb[0].mxu0 %v205
    %v296 = vpop.f32.mrb[0].mxu0
    %v297 = vadd.f32 0.0, %v296
    %v298 = vpop.f32.mrb[0].mxu0
    %299 = vmatprep.mubr.f32.mxu0 0.0
    %300 = vmatmul.mubr.f32.gmra.mrb[0].mxu0 %v208
    %v301 = vpop.f32.mrb[0].mxu0
    %v302 = vadd.f32 0.0, %v301
    %v303 = vpop.f32.mrb[0].mxu0
    %304 = vmatprep.mubr.f32.mxu0 0.0
    %305 = vmatmul.mubr.f32.gmra.mrb[0].mxu0 %v211
    %v306 = vpop.f32.mrb[0].mxu0
    %v307 = vadd.f32 0.0, %v306
    %v308 = vpop.f32.mrb[0].mxu0
    %309 = vmatprep.mubr.f32.mxu0 0.0
    %310 = vmatmul.mubr.f32.gmra.mrb[0].mxu0 %v214
    %v311 = vpop.f32.mrb[0].mxu0
    %v312 = vadd.f32 0.0, %v311
    %v313 = vpop.f32.mrb[0].mxu0
    %314 = vmatprep.mubr.f32.mxu0 0.0
    %315 = vmatmul.mubr.f32.gmra.mrb[0].mxu0 %v217
    %v316 = vpop.f32.mrb[0].mxu0
    %v317 = vadd.f32 0.0, %v316
    %v318 = vpop.f32.mrb[0].mxu0
    %319 = vmatprep.mubr.f32.mxu0 0.0
    %320 = vmatmul.mubr.f32.gmra.mrb[0].mxu0 %v220
    %v321 = vpop.f32.mrb[0].mxu0
    %v322 = vadd.f32 0.0, %v321
    %v323 = vpop.f32.mrb[0].mxu0
    %324 = vmatprep.mubr.f32.mxu0 0.0
    %325 = vmatmul.mubr.f32.gmra.mrb[0].mxu0 %v223
    %v326 = vpop.f32.mrb[0].mxu0
    %v327 = vadd.f32 0.0, %v326
    %v328 = vpop.f32.mrb[0].mxu0
    %329 = vdwg.mxu0
    %338 = vrot.lane.b32.xlu0 %v292, 124
    %v339 = vpop.permute.xlu0 %338
    %340 = vrot.lane.b32.xlu0 %v297, 124
    %v341 = vpop.permute.xlu0 %340
    %342 = vrot.lane.b32.xlu0 %v302, 124
    %v343 = vpop.permute.xlu0 %342
    %344 = vrot.lane.b32.xlu0 %v307, 124
    %v345 = vpop.permute.xlu0 %344
    %346 = vrot.lane.b32.xlu0 %v312, 124
    %v347 = vpop.permute.xlu0 %346
    %348 = vrot.lane.b32.xlu0 %v317, 124
    %v349 = vpop.permute.xlu0 %348
    %350 = vrot.lane.b32.xlu0 %v322, 124
    %v351 = vpop.permute.xlu0 %350
    %352 = vrot.lane.b32.xlu0 %v327, 124
    %v353 = vpop.permute.xlu0 %352
    %354 = vrot.lane.b32.xlu0 %v292, 120
    %v355 = vpop.permute.xlu0 %354
    %vm356 = vcmask 31744
    %v357 = vsel %vm356, %v292, 0
    %v359 = vsel %vm356, %v355, 0
    %361 = vmatprep.subr.mxu0 0.0
    %362 = vmatpush1.xpose.msra.mxu0 %v359
    %363 = vmatprep.subr.mxu0 0.0
    %364 = vmatpush1.xpose.msra.mxu0 0.0
    %365 = vmatprep.subr.mxu0 0.0
    %366 = vmatpush1.xpose.msra.mxu0 0.0
    %367 = vmatprep.subr.mxu0 0.0
    %368 = vmatpush1.xpose.msra.mxu0 0.0
    %369 = vmatprep.subr.mxu0 0.0
    %370 = vmatpush1.xpose.msra.mxu0 0.0
    %371 = vmatprep.subr.mxu0 0.0
    %372 = vmatpush1.xpose.msra.mxu0 0.0
    %373 = vmatprep.subr.mxu0 0.0
    %374 = vmatpush1.xpose.msra.mxu0 0.0
    %375 = vmatprep.subr.mxu0 0.0
    %376 = vmatpush1.xpose.msra.mxu0 0.0
    %377 = vmatprep.subr.mxu0 0.0
    %378 = vmatpush1.xpose.msra.mxu0 0.0
    %379 = vmatprep.subr.mxu0 0.0
    %380 = vmatpush1.xpose.msra.mxu0 0.0
    %381 = vmatprep.subr.mxu0 0.0
    %382 = vmatpush1.xpose.msra.mxu0 0.0
    %383 = vmatprep.subr.mxu0 0.0
    %384 = vmatpush1.xpose.msra.mxu0 0.0
    %385 = vmatprep.subr.mxu0 0.0
    %386 = vmatpush1.xpose.msra.mxu0 0.0
    %387 = vmatprep.subr.mxu0 0.0
    %388 = vmatpush1.xpose.msra.mxu0 0.0
    %389 = vmatprep.subr.mxu0 0.0
    %390 = vmatpush1.xpose.msra.mxu0 0.0
    %391 = vmatprep.subr.mxu0 0.0
    %392 = vmatpush1.xpose.msra.mxu0 0.0
    %393 = vmatprep.subr.mxu0 0.0
    %394 = vmatpush1.xpose.msra.mxu0 0.0
    %395 = vmatprep.subr.mxu0 0.0
    %396 = vmatpush1.xpose.msra.mxu0 0.0
    %397 = vmatprep.subr.mxu0 0.0
    %398 = vmatpush1.xpose.msra.mxu0 0.0
    %399 = vmatprep.subr.mxu0 0.0
    %400 = vmatpush1.xpose.msra.mxu0 0.0
    %401 = vmatprep.subr.mxu0 0.0
    %402 = vmatpush1.xpose.msra.mxu0 0.0
    %403 = vmatprep.subr.mxu0 0.0
    %404 = vmatpush1.xpose.msra.mxu0 0.0
    %405 = vmatprep.subr.mxu0 0.0
    %406 = vmatpush1.xpose.msra.mxu0 0.0
    %407 = vmatprep.subr.mxu0 0.0
    %408 = vmatpush1.xpose.msra.mxu0 0.0
    %409 = vmatprep.subr.mxu0 0.0
    %410 = vmatpush1.xpose.msra.mxu0 0.0
    %411 = vmatprep.subr.mxu0 0.0
    %412 = vmatpush1.xpose.msra.mxu0 0.0
    %413 = vmatprep.subr.mxu0 0.0
    %414 = vmatpush1.xpose.msra.mxu0 0.0
    %415 = vmatprep.subr.mxu0 0.0
    %416 = vmatpush1.xpose.msra.mxu0 0.0
    %417 = vmatprep.subr.mxu0 0.0
    %418 = vmatpush1.xpose.msra.mxu0 0.0
    %419 = vmatprep.subr.mxu0 0.0
    %420 = vmatpush1.xpose.msra.mxu0 0.0
    %421 = vmatprep.subr.mxu0 0.0
    %422 = vmatpush1.xpose.msra.mxu0 0.0
    %423 = vmatprep.subr.mxu0 0.0
    %424 = vmatpush1.xpose.msra.mxu0 0.0
    %425 = vmatprep.mubr.f32.mxu0 0.0
    %426 = vmatmul.mubr.f32.gmra.mrb[0].mxu0 %v357
    %v427 = vpop.f32.mrb[0].mxu0
    %v428 = vadd.f32 0.0, %v427
    %v429 = vpop.f32.mrb[0].mxu0
    %430 = vdwg.mxu0
    %431 = vrot.lane.b32.xlu0 %v297, 120
    %v432 = vpop.permute.xlu0 %431
    %v433 = vsel %vm356, %v297, 0
    %v435 = vsel %vm356, %v432, 0
    %437 = vmatprep.subr.mxu0 0.0
    %438 = vmatpush1.xpose.msra.mxu0 %v435
    %439 = vmatprep.subr.mxu0 0.0
    %440 = vmatpush1.xpose.msra.mxu0 0.0
    %441 = vmatprep.subr.mxu0 0.0
    %442 = vmatpush1.xpose.msra.mxu0 0.0
    %443 = vmatprep.subr.mxu0 0.0
    %444 = vmatpush1.xpose.msra.mxu0 0.0
    %445 = vmatprep.subr.mxu0 0.0
    %446 = vmatpush1.xpose.msra.mxu0 0.0
    %447 = vmatprep.subr.mxu0 0.0
    %448 = vmatpush1.xpose.msra.mxu0 0.0
    %449 = vmatprep.subr.mxu0 0.0
    %450 = vmatpush1.xpose.msra.mxu0 0.0
    %451 = vmatprep.subr.mxu0 0.0
    %452 = vmatpush1.xpose.msra.mxu0 0.0
    %453 = vmatprep.subr.mxu0 0.0
    %454 = vmatpush1.xpose.msra.mxu0 0.0
    %455 = vmatprep.subr.mxu0 0.0
    %456 = vmatpush1.xpose.msra.mxu0 0.0
    %457 = vmatprep.subr.mxu0 0.0
    %458 = vmatpush1.xpose.msra.mxu0 0.0
    %459 = vmatprep.subr.mxu0 0.0
    %460 = vmatpush1.xpose.msra.mxu0 0.0
    %461 = vmatprep.subr.mxu0 0.0
    %462 = vmatpush1.xpose.msra.mxu0 0.0
    %463 = vmatprep.subr.mxu0 0.0
    %464 = vmatpush1.xpose.msra.mxu0 0.0
    %465 = vmatprep.subr.mxu0 0.0
    %466 = vmatpush1.xpose.msra.mxu0 0.0
    %467 = vmatprep.subr.mxu0 0.0
    %468 = vmatpush1.xpose.msra.mxu0 0.0
    %469 = vmatprep.subr.mxu0 0.0
    %470 = vmatpush1.xpose.msra.mxu0 0.0
    %471 = vmatprep.subr.mxu0 0.0
    %472 = vmatpush1.xpose.msra.mxu0 0.0
    %473 = vmatprep.subr.mxu0 0.0
    %474 = vmatpush1.xpose.msra.mxu0 0.0
    %475 = vmatprep.subr.mxu0 0.0
    %476 = vmatpush1.xpose.msra.mxu0 0.0
    %477 = vmatprep.subr.mxu0 0.0
    %478 = vmatpush1.xpose.msra.mxu0 0.0
    %479 = vmatprep.subr.mxu0 0.0
    %480 = vmatpush1.xpose.msra.mxu0 0.0
    %481 = vmatprep.subr.mxu0 0.0
    %482 = vmatpush1.xpose.msra.mxu0 0.0
    %483 = vmatprep.subr.mxu0 0.0
    %484 = vmatpush1.xpose.msra.mxu0 0.0
    %485 = vmatprep.subr.mxu0 0.0
    %486 = vmatpush1.xpose.msra.mxu0 0.0
    %487 = vmatprep.subr.mxu0 0.0
    %488 = vmatpush1.xpose.msra.mxu0 0.0
    %489 = vmatprep.subr.mxu0 0.0
    %490 = vmatpush1.xpose.msra.mxu0 0.0
    %491 = vmatprep.subr.mxu0 0.0
    %492 = vmatpush1.xpose.msra.mxu0 0.0
    %493 = vmatprep.subr.mxu0 0.0
    %494 = vmatpush1.xpose.msra.mxu0 0.0
    %495 = vmatprep.subr.mxu0 0.0
    %496 = vmatpush1.xpose.msra.mxu0 0.0
    %497 = vmatprep.subr.mxu0 0.0
    %498 = vmatpush1.xpose.msra.mxu0 0.0
    %499 = vmatprep.subr.mxu0 0.0
    %500 = vmatpush1.xpose.msra.mxu0 0.0
    %501 = vmatprep.mubr.f32.mxu0 0.0
    %502 = vmatmul.mubr.f32.gmra.mrb[0].mxu0 %v433
    %v503 = vpop.f32.mrb[0].mxu0
    %v504 = vadd.f32 0.0, %v503
    %v505 = vpop.f32.mrb[0].mxu0
    %506 = vdwg.mxu0
    %507 = vrot.lane.b32.xlu0 %v302, 120
    %v508 = vpop.permute.xlu0 %507
    %v509 = vsel %vm356, %v302, 0
    %v511 = vsel %vm356, %v508, 0
    %513 = vmatprep.subr.mxu0 0.0
    %514 = vmatpush1.xpose.msra.mxu0 %v511
    %515 = vmatprep.subr.mxu0 0.0
    %516 = vmatpush1.xpose.msra.mxu0 0.0
    %517 = vmatprep.subr.mxu0 0.0
    %518 = vmatpush1.xpose.msra.mxu0 0.0
    %519 = vmatprep.subr.mxu0 0.0
    %520 = vmatpush1.xpose.msra.mxu0 0.0
    %521 = vmatprep.subr.mxu0 0.0
    %522 = vmatpush1.xpose.msra.mxu0 0.0
    %523 = vmatprep.subr.mxu0 0.0
    %524 = vmatpush1.xpose.msra.mxu0 0.0
    %525 = vmatprep.subr.mxu0 0.0
    %526 = vmatpush1.xpose.msra.mxu0 0.0
    %527 = vmatprep.subr.mxu0 0.0
    %528 = vmatpush1.xpose.msra.mxu0 0.0
    %529 = vmatprep.subr.mxu0 0.0
    %530 = vmatpush1.xpose.msra.mxu0 0.0
    %531 = vmatprep.subr.mxu0 0.0
    %532 = vmatpush1.xpose.msra.mxu0 0.0
    %533 = vmatprep.subr.mxu0 0.0
    %534 = vmatpush1.xpose.msra.mxu0 0.0
    %535 = vmatprep.subr.mxu0 0.0
    %536 = vmatpush1.xpose.msra.mxu0 0.0
    %537 = vmatprep.subr.mxu0 0.0
    %538 = vmatpush1.xpose.msra.mxu0 0.0
    %539 = vmatprep.subr.mxu0 0.0
    %540 = vmatpush1.xpose.msra.mxu0 0.0
    %541 = vmatprep.subr.mxu0 0.0
    %542 = vmatpush1.xpose.msra.mxu0 0.0
    %543 = vmatprep.subr.mxu0 0.0
    %544 = vmatpush1.xpose.msra.mxu0 0.0
    %545 = vmatprep.subr.mxu0 0.0
    %546 = vmatpush1.xpose.msra.mxu0 0.0
    %547 = vmatprep.subr.mxu0 0.0
    %548 = vmatpush1.xpose.msra.mxu0 0.0
    %549 = vmatprep.subr.mxu0 0.0
    %550 = vmatpush1.xpose.msra.mxu0 0.0
    %551 = vmatprep.subr.mxu0 0.0
    %552 = vmatpush1.xpose.msra.mxu0 0.0
    %553 = vmatprep.subr.mxu0 0.0
    %554 = vmatpush1.xpose.msra.mxu0 0.0
    %555 = vmatprep.subr.mxu0 0.0
    %556 = vmatpush1.xpose.msra.mxu0 0.0
    %557 = vmatprep.subr.mxu0 0.0
    %558 = vmatpush1.xpose.msra.mxu0 0.0
    %559 = vmatprep.subr.mxu0 0.0
    %560 = vmatpush1.xpose.msra.mxu0 0.0
    %561 = vmatprep.subr.mxu0 0.0
    %562 = vmatpush1.xpose.msra.mxu0 0.0
    %563 = vmatprep.subr.mxu0 0.0
    %564 = vmatpush1.xpose.msra.mxu0 0.0
    %565 = vmatprep.subr.mxu0 0.0
    %566 = vmatpush1.xpose.msra.mxu0 0.0
    %567 = vmatprep.subr.mxu0 0.0
    %568 = vmatpush1.xpose.msra.mxu0 0.0
    %569 = vmatprep.subr.mxu0 0.0
    %570 = vmatpush1.xpose.msra.mxu0 0.0
    %571 = vmatprep.subr.mxu0 0.0
    %572 = vmatpush1.xpose.msra.mxu0 0.0
    %573 = vmatprep.subr.mxu0 0.0
    %574 = vmatpush1.xpose.msra.mxu0 0.0
    %575 = vmatprep.subr.mxu0 0.0
    %576 = vmatpush1.xpose.msra.mxu0 0.0
    %577 = vmatprep.mubr.f32.mxu0 0.0
    %578 = vmatmul.mubr.f32.gmra.mrb[0].mxu0 %v509
    %v579 = vpop.f32.mrb[0].mxu0
    %v580 = vadd.f32 0.0, %v579
    %v581 = vpop.f32.mrb[0].mxu0
    %582 = vdwg.mxu0
    %583 = vrot.lane.b32.xlu0 %v307, 120
    %v584 = vpop.permute.xlu0 %583
    %v585 = vsel %vm356, %v307, 0
    %v587 = vsel %vm356, %v584, 0
    %589 = vmatprep.subr.mxu0 0.0
    %590 = vmatpush1.xpose.msra.mxu0 %v587
    %591 = vmatprep.subr.mxu0 0.0
    %592 = vmatpush1.xpose.msra.mxu0 0.0
    %593 = vmatprep.subr.mxu0 0.0
    %594 = vmatpush1.xpose.msra.mxu0 0.0
    %595 = vmatprep.subr.mxu0 0.0
    %596 = vmatpush1.xpose.msra.mxu0 0.0
    %597 = vmatprep.subr.mxu0 0.0
    %598 = vmatpush1.xpose.msra.mxu0 0.0
    %599 = vmatprep.subr.mxu0 0.0
    %600 = vmatpush1.xpose.msra.mxu0 0.0
    %601 = vmatprep.subr.mxu0 0.0
    %602 = vmatpush1.xpose.msra.mxu0 0.0
    %603 = vmatprep.subr.mxu0 0.0
    %604 = vmatpush1.xpose.msra.mxu0 0.0
    %605 = vmatprep.subr.mxu0 0.0
    %606 = vmatpush1.xpose.msra.mxu0 0.0
    %607 = vmatprep.subr.mxu0 0.0
    %608 = vmatpush1.xpose.msra.mxu0 0.0
    %609 = vmatprep.subr.mxu0 0.0
    %610 = vmatpush1.xpose.msra.mxu0 0.0
    %611 = vmatprep.subr.mxu0 0.0
    %612 = vmatpush1.xpose.msra.mxu0 0.0
    %613 = vmatprep.subr.mxu0 0.0
    %614 = vmatpush1.xpose.msra.mxu0 0.0
    %615 = vmatprep.subr.mxu0 0.0
    %616 = vmatpush1.xpose.msra.mxu0 0.0
    %617 = vmatprep.subr.mxu0 0.0
    %618 = vmatpush1.xpose.msra.mxu0 0.0
    %619 = vmatprep.subr.mxu0 0.0
    %620 = vmatpush1.xpose.msra.mxu0 0.0
    %621 = vmatprep.subr.mxu0 0.0
    %622 = vmatpush1.xpose.msra.mxu0 0.0
    %623 = vmatprep.subr.mxu0 0.0
    %624 = vmatpush1.xpose.msra.mxu0 0.0
    %625 = vmatprep.subr.mxu0 0.0
    %626 = vmatpush1.xpose.msra.mxu0 0.0
    %627 = vmatprep.subr.mxu0 0.0
    %628 = vmatpush1.xpose.msra.mxu0 0.0
    %629 = vmatprep.subr.mxu0 0.0
    %630 = vmatpush1.xpose.msra.mxu0 0.0
    %631 = vmatprep.subr.mxu0 0.0
    %632 = vmatpush1.xpose.msra.mxu0 0.0
    %633 = vmatprep.subr.mxu0 0.0
    %634 = vmatpush1.xpose.msra.mxu0 0.0
    %635 = vmatprep.subr.mxu0 0.0
    %636 = vmatpush1.xpose.msra.mxu0 0.0
    %637 = vmatprep.subr.mxu0 0.0
    %638 = vmatpush1.xpose.msra.mxu0 0.0
    %639 = vmatprep.subr.mxu0 0.0
    %640 = vmatpush1.xpose.msra.mxu0 0.0
    %641 = vmatprep.subr.mxu0 0.0
    %642 = vmatpush1.xpose.msra.mxu0 0.0
    %643 = vmatprep.subr.mxu0 0.0
    %644 = vmatpush1.xpose.msra.mxu0 0.0
    %645 = vmatprep.subr.mxu0 0.0
    %646 = vmatpush1.xpose.msra.mxu0 0.0
    %647 = vmatprep.subr.mxu0 0.0
    %648 = vmatpush1.xpose.msra.mxu0 0.0
    %649 = vmatprep.subr.mxu0 0.0
    %650 = vmatpush1.xpose.msra.mxu0 0.0
    %651 = vmatprep.subr.mxu0 0.0
    %652 = vmatpush1.xpose.msra.mxu0 0.0
    %653 = vmatprep.mubr.f32.mxu0 0.0
    %654 = vmatmul.mubr.f32.gmra.mrb[0].mxu0 %v585
    %v655 = vpop.f32.mrb[0].mxu0
    %v656 = vadd.f32 0.0, %v655
    %v657 = vpop.f32.mrb[0].mxu0
    %658 = vdwg.mxu0
    %659 = vrot.lane.b32.xlu0 %v312, 120
    %v660 = vpop.permute.xlu0 %659
    %v661 = vsel %vm356, %v312, 0
    %v663 = vsel %vm356, %v660, 0
    %665 = vmatprep.subr.mxu0 0.0
    %666 = vmatpush1.xpose.msra.mxu0 %v663
    %667 = vmatprep.subr.mxu0 0.0
    %668 = vmatpush1.xpose.msra.mxu0 0.0
    %669 = vmatprep.subr.mxu0 0.0
    %670 = vmatpush1.xpose.msra.mxu0 0.0
    %671 = vmatprep.subr.mxu0 0.0
    %672 = vmatpush1.xpose.msra.mxu0 0.0
    %673 = vmatprep.subr.mxu0 0.0
    %674 = vmatpush1.xpose.msra.mxu0 0.0
    %675 = vmatprep.subr.mxu0 0.0
    %676 = vmatpush1.xpose.msra.mxu0 0.0
    %677 = vmatprep.subr.mxu0 0.0
    %678 = vmatpush1.xpose.msra.mxu0 0.0
    %679 = vmatprep.subr.mxu0 0.0
    %680 = vmatpush1.xpose.msra.mxu0 0.0
    %681 = vmatprep.subr.mxu0 0.0
    %682 = vmatpush1.xpose.msra.mxu0 0.0
    %683 = vmatprep.subr.mxu0 0.0
    %684 = vmatpush1.xpose.msra.mxu0 0.0
    %685 = vmatprep.subr.mxu0 0.0
    %686 = vmatpush1.xpose.msra.mxu0 0.0
    %687 = vmatprep.subr.mxu0 0.0
    %688 = vmatpush1.xpose.msra.mxu0 0.0
    %689 = vmatprep.subr.mxu0 0.0
    %690 = vmatpush1.xpose.msra.mxu0 0.0
    %691 = vmatprep.subr.mxu0 0.0
    %692 = vmatpush1.xpose.msra.mxu0 0.0
    %693 = vmatprep.subr.mxu0 0.0
    %694 = vmatpush1.xpose.msra.mxu0 0.0
    %695 = vmatprep.subr.mxu0 0.0
    %696 = vmatpush1.xpose.msra.mxu0 0.0
    %697 = vmatprep.subr.mxu0 0.0
    %698 = vmatpush1.xpose.msra.mxu0 0.0
    %699 = vmatprep.subr.mxu0 0.0
    %700 = vmatpush1.xpose.msra.mxu0 0.0
    %701 = vmatprep.subr.mxu0 0.0
    %702 = vmatpush1.xpose.msra.mxu0 0.0
    %703 = vmatprep.subr.mxu0 0.0
    %704 = vmatpush1.xpose.msra.mxu0 0.0
    %705 = vmatprep.subr.mxu0 0.0
    %706 = vmatpush1.xpose.msra.mxu0 0.0
    %707 = vmatprep.subr.mxu0 0.0
    %708 = vmatpush1.xpose.msra.mxu0 0.0
    %709 = vmatprep.subr.mxu0 0.0
    %710 = vmatpush1.xpose.msra.mxu0 0.0
    %711 = vmatprep.subr.mxu0 0.0
    %712 = vmatpush1.xpose.msra.mxu0 0.0
    %713 = vmatprep.subr.mxu0 0.0
    %714 = vmatpush1.xpose.msra.mxu0 0.0
    %715 = vmatprep.subr.mxu0 0.0
    %716 = vmatpush1.xpose.msra.mxu0 0.0
    %717 = vmatprep.subr.mxu0 0.0
    %718 = vmatpush1.xpose.msra.mxu0 0.0
    %719 = vmatprep.subr.mxu0 0.0
    %720 = vmatpush1.xpose.msra.mxu0 0.0
    %721 = vmatprep.subr.mxu0 0.0
    %722 = vmatpush1.xpose.msra.mxu0 0.0
    %723 = vmatprep.subr.mxu0 0.0
    %724 = vmatpush1.xpose.msra.mxu0 0.0
    %725 = vmatprep.subr.mxu0 0.0
    %726 = vmatpush1.xpose.msra.mxu0 0.0
    %727 = vmatprep.subr.mxu0 0.0
    %728 = vmatpush1.xpose.msra.mxu0 0.0
    %729 = vmatprep.mubr.f32.mxu0 0.0
    %730 = vmatmul.mubr.f32.gmra.mrb[0].mxu0 %v661
    %v731 = vpop.f32.mrb[0].mxu0
    %v732 = vadd.f32 0.0, %v731
    %v733 = vpop.f32.mrb[0].mxu0
    %734 = vdwg.mxu0
    %735 = vrot.lane.b32.xlu0 %v317, 120
    %v736 = vpop.permute.xlu0 %735
    %v737 = vsel %vm356, %v317, 0
    %v739 = vsel %vm356, %v736, 0
    %741 = vmatprep.subr.mxu0 0.0
    %742 = vmatpush1.xpose.msra.mxu0 %v739
    %743 = vmatprep.subr.mxu0 0.0
    %744 = vmatpush1.xpose.msra.mxu0 0.0
    %745 = vmatprep.subr.mxu0 0.0
    %746 = vmatpush1.xpose.msra.mxu0 0.0
    %747 = vmatprep.subr.mxu0 0.0
    %748 = vmatpush1.xpose.msra.mxu0 0.0
    %749 = vmatprep.subr.mxu0 0.0
    %750 = vmatpush1.xpose.msra.mxu0 0.0
    %751 = vmatprep.subr.mxu0 0.0
    %752 = vmatpush1.xpose.msra.mxu0 0.0
    %753 = vmatprep.subr.mxu0 0.0
    %754 = vmatpush1.xpose.msra.mxu0 0.0
    %755 = vmatprep.subr.mxu0 0.0
    %756 = vmatpush1.xpose.msra.mxu0 0.0
    %757 = vmatprep.subr.mxu0 0.0
    %758 = vmatpush1.xpose.msra.mxu0 0.0
    %759 = vmatprep.subr.mxu0 0.0
    %760 = vmatpush1.xpose.msra.mxu0 0.0
    %761 = vmatprep.subr.mxu0 0.0
    %762 = vmatpush1.xpose.msra.mxu0 0.0
    %763 = vmatprep.subr.mxu0 0.0
    %764 = vmatpush1.xpose.msra.mxu0 0.0
    %765 = vmatprep.subr.mxu0 0.0
    %766 = vmatpush1.xpose.msra.mxu0 0.0
    %767 = vmatprep.subr.mxu0 0.0
    %768 = vmatpush1.xpose.msra.mxu0 0.0
    %769 = vmatprep.subr.mxu0 0.0
    %770 = vmatpush1.xpose.msra.mxu0 0.0
    %771 = vmatprep.subr.mxu0 0.0
    %772 = vmatpush1.xpose.msra.mxu0 0.0
    %773 = vmatprep.subr.mxu0 0.0
    %774 = vmatpush1.xpose.msra.mxu0 0.0
    %775 = vmatprep.subr.mxu0 0.0
    %776 = vmatpush1.xpose.msra.mxu0 0.0
    %777 = vmatprep.subr.mxu0 0.0
    %778 = vmatpush1.xpose.msra.mxu0 0.0
    %779 = vmatprep.subr.mxu0 0.0
    %780 = vmatpush1.xpose.msra.mxu0 0.0
    %781 = vmatprep.subr.mxu0 0.0
    %782 = vmatpush1.xpose.msra.mxu0 0.0
    %783 = vmatprep.subr.mxu0 0.0
    %784 = vmatpush1.xpose.msra.mxu0 0.0
    %785 = vmatprep.subr.mxu0 0.0
    %786 = vmatpush1.xpose.msra.mxu0 0.0
    %787 = vmatprep.subr.mxu0 0.0
    %788 = vmatpush1.xpose.msra.mxu0 0.0
    %789 = vmatprep.subr.mxu0 0.0
    %790 = vmatpush1.xpose.msra.mxu0 0.0
    %791 = vmatprep.subr.mxu0 0.0
    %792 = vmatpush1.xpose.msra.mxu0 0.0
    %793 = vmatprep.subr.mxu0 0.0
    %794 = vmatpush1.xpose.msra.mxu0 0.0
    %795 = vmatprep.subr.mxu0 0.0
    %796 = vmatpush1.xpose.msra.mxu0 0.0
    %797 = vmatprep.subr.mxu0 0.0
    %798 = vmatpush1.xpose.msra.mxu0 0.0
    %799 = vmatprep.subr.mxu0 0.0
    %800 = vmatpush1.xpose.msra.mxu0 0.0
    %801 = vmatprep.subr.mxu0 0.0
    %802 = vmatpush1.xpose.msra.mxu0 0.0
    %803 = vmatprep.subr.mxu0 0.0
    %804 = vmatpush1.xpose.msra.mxu0 0.0
    %805 = vmatprep.mubr.f32.mxu0 0.0
    %806 = vmatmul.mubr.f32.gmra.mrb[0].mxu0 %v737
    %v807 = vpop.f32.mrb[0].mxu0
    %v808 = vadd.f32 0.0, %v807
    %v809 = vpop.f32.mrb[0].mxu0
    %810 = vdwg.mxu0
    %811 = vrot.lane.b32.xlu0 %v322, 120
    %v812 = vpop.permute.xlu0 %811
    %v813 = vsel %vm356, %v322, 0
    %v815 = vsel %vm356, %v812, 0
    %817 = vmatprep.subr.mxu0 0.0
    %818 = vmatpush1.xpose.msra.mxu0 %v815
    %819 = vmatprep.subr.mxu0 0.0
    %820 = vmatpush1.xpose.msra.mxu0 0.0
    %821 = vmatprep.subr.mxu0 0.0
    %822 = vmatpush1.xpose.msra.mxu0 0.0
    %823 = vmatprep.subr.mxu0 0.0
    %824 = vmatpush1.xpose.msra.mxu0 0.0
    %825 = vmatprep.subr.mxu0 0.0
    %826 = vmatpush1.xpose.msra.mxu0 0.0
    %827 = vmatprep.subr.mxu0 0.0
    %828 = vmatpush1.xpose.msra.mxu0 0.0
    %829 = vmatprep.subr.mxu0 0.0
    %830 = vmatpush1.xpose.msra.mxu0 0.0
    %831 = vmatprep.subr.mxu0 0.0
    %832 = vmatpush1.xpose.msra.mxu0 0.0
    %833 = vmatprep.subr.mxu0 0.0
    %834 = vmatpush1.xpose.msra.mxu0 0.0
    %835 = vmatprep.subr.mxu0 0.0
    %836 = vmatpush1.xpose.msra.mxu0 0.0
    %837 = vmatprep.subr.mxu0 0.0
    %838 = vmatpush1.xpose.msra.mxu0 0.0
    %839 = vmatprep.subr.mxu0 0.0
    %840 = vmatpush1.xpose.msra.mxu0 0.0
    %841 = vmatprep.subr.mxu0 0.0
    %842 = vmatpush1.xpose.msra.mxu0 0.0
    %843 = vmatprep.subr.mxu0 0.0
    %844 = vmatpush1.xpose.msra.mxu0 0.0
    %845 = vmatprep.subr.mxu0 0.0
    %846 = vmatpush1.xpose.msra.mxu0 0.0
    %847 = vmatprep.subr.mxu0 0.0
    %848 = vmatpush1.xpose.msra.mxu0 0.0
    %849 = vmatprep.subr.mxu0 0.0
    %850 = vmatpush1.xpose.msra.mxu0 0.0
    %851 = vmatprep.subr.mxu0 0.0
    %852 = vmatpush1.xpose.msra.mxu0 0.0
    %853 = vmatprep.subr.mxu0 0.0
    %854 = vmatpush1.xpose.msra.mxu0 0.0
    %855 = vmatprep.subr.mxu0 0.0
    %856 = vmatpush1.xpose.msra.mxu0 0.0
    %857 = vmatprep.subr.mxu0 0.0
    %858 = vmatpush1.xpose.msra.mxu0 0.0
    %859 = vmatprep.subr.mxu0 0.0
    %860 = vmatpush1.xpose.msra.mxu0 0.0
    %861 = vmatprep.subr.mxu0 0.0
    %862 = vmatpush1.xpose.msra.mxu0 0.0
    %863 = vmatprep.subr.mxu0 0.0
    %864 = vmatpush1.xpose.msra.mxu0 0.0
    %865 = vmatprep.subr.mxu0 0.0
    %866 = vmatpush1.xpose.msra.mxu0 0.0
    %867 = vmatprep.subr.mxu0 0.0
    %868 = vmatpush1.xpose.msra.mxu0 0.0
    %869 = vmatprep.subr.mxu0 0.0
    %870 = vmatpush1.xpose.msra.mxu0 0.0
    %871 = vmatprep.subr.mxu0 0.0
    %872 = vmatpush1.xpose.msra.mxu0 0.0
    %873 = vmatprep.subr.mxu0 0.0
    %874 = vmatpush1.xpose.msra.mxu0 0.0
    %875 = vmatprep.subr.mxu0 0.0
    %876 = vmatpush1.xpose.msra.mxu0 0.0
    %877 = vmatprep.subr.mxu0 0.0
    %878 = vmatpush1.xpose.msra.mxu0 0.0
    %879 = vmatprep.subr.mxu0 0.0
    %880 = vmatpush1.xpose.msra.mxu0 0.0
    %881 = vmatprep.mubr.f32.mxu0 0.0
    %882 = vmatmul.mubr.f32.gmra.mrb[0].mxu0 %v813
    %v883 = vpop.f32.mrb[0].mxu0
    %v884 = vadd.f32 0.0, %v883
    %v885 = vpop.f32.mrb[0].mxu0
    %886 = vdwg.mxu0
    %887 = vrot.lane.b32.xlu0 %v327, 120
    %v888 = vpop.permute.xlu0 %887
    %v889 = vsel %vm356, %v327, 0
    %v891 = vsel %vm356, %v888, 0
    %893 = vmatprep.subr.mxu0 0.0
    %894 = vmatpush1.xpose.msra.mxu0 %v891
    %895 = vmatprep.subr.mxu0 0.0
    %896 = vmatpush1.xpose.msra.mxu0 0.0
    %897 = vmatprep.subr.mxu0 0.0
    %898 = vmatpush1.xpose.msra.mxu0 0.0
    %899 = vmatprep.subr.mxu0 0.0
    %900 = vmatpush1.xpose.msra.mxu0 0.0
    %901 = vmatprep.subr.mxu0 0.0
    %902 = vmatpush1.xpose.msra.mxu0 0.0
    %903 = vmatprep.subr.mxu0 0.0
    %904 = vmatpush1.xpose.msra.mxu0 0.0
    %905 = vmatprep.subr.mxu0 0.0
    %906 = vmatpush1.xpose.msra.mxu0 0.0
    %907 = vmatprep.subr.mxu0 0.0
    %908 = vmatpush1.xpose.msra.mxu0 0.0
    %909 = vmatprep.subr.mxu0 0.0
    %910 = vmatpush1.xpose.msra.mxu0 0.0
    %911 = vmatprep.subr.mxu0 0.0
    %912 = vmatpush1.xpose.msra.mxu0 0.0
    %913 = vmatprep.subr.mxu0 0.0
    %914 = vmatpush1.xpose.msra.mxu0 0.0
    %915 = vmatprep.subr.mxu0 0.0
    %916 = vmatpush1.xpose.msra.mxu0 0.0
    %917 = vmatprep.subr.mxu0 0.0
    %918 = vmatpush1.xpose.msra.mxu0 0.0
    %919 = vmatprep.subr.mxu0 0.0
    %920 = vmatpush1.xpose.msra.mxu0 0.0
    %921 = vmatprep.subr.mxu0 0.0
    %922 = vmatpush1.xpose.msra.mxu0 0.0
    %923 = vmatprep.subr.mxu0 0.0
    %924 = vmatpush1.xpose.msra.mxu0 0.0
    %925 = vmatprep.subr.mxu0 0.0
    %926 = vmatpush1.xpose.msra.mxu0 0.0
    %927 = vmatprep.subr.mxu0 0.0
    %928 = vmatpush1.xpose.msra.mxu0 0.0
    %929 = vmatprep.subr.mxu0 0.0
    %930 = vmatpush1.xpose.msra.mxu0 0.0
    %931 = vmatprep.subr.mxu0 0.0
    %932 = vmatpush1.xpose.msra.mxu0 0.0
    %933 = vmatprep.subr.mxu0 0.0
    %934 = vmatpush1.xpose.msra.mxu0 0.0
    %935 = vmatprep.subr.mxu0 0.0
    %936 = vmatpush1.xpose.msra.mxu0 0.0
    %937 = vmatprep.subr.mxu0 0.0
    %938 = vmatpush1.xpose.msra.mxu0 0.0
    %939 = vmatprep.subr.mxu0 0.0
    %940 = vmatpush1.xpose.msra.mxu0 0.0
    %941 = vmatprep.subr.mxu0 0.0
    %942 = vmatpush1.xpose.msra.mxu0 0.0
    %943 = vmatprep.subr.mxu0 0.0
    %944 = vmatpush1.xpose.msra.mxu0 0.0
    %945 = vmatprep.subr.mxu0 0.0
    %946 = vmatpush1.xpose.msra.mxu0 0.0
    %947 = vmatprep.subr.mxu0 0.0
    %948 = vmatpush1.xpose.msra.mxu0 0.0
    %949 = vmatprep.subr.mxu0 0.0
    %950 = vmatpush1.xpose.msra.mxu0 0.0
    %951 = vmatprep.subr.mxu0 0.0
    %952 = vmatpush1.xpose.msra.mxu0 0.0
    %953 = vmatprep.subr.mxu0 0.0
    %954 = vmatpush1.xpose.msra.mxu0 0.0
    %955 = vmatprep.subr.mxu0 0.0
    %956 = vmatpush1.xpose.msra.mxu0 0.0
    %957 = vmatprep.mubr.f32.mxu0 0.0
    %958 = vmatmul.mubr.f32.gmra.mrb[0].mxu0 %v889
    %v959 = vpop.f32.mrb[0].mxu0
    %v960 = vadd.f32 0.0, %v959
    %v961 = vpop.f32.mrb[0].mxu0
    %962 = vdwg.mxu0
    %963 = vrot.lane.b32.xlu0 %v339, 120
    %v964 = vpop.permute.xlu0 %963
    %v965 = vsel %vm356, %v339, 0
    %v967 = vsel %vm356, %v964, 0
    %969 = vmatprep.subr.mxu0 0.0
    %970 = vmatpush1.xpose.msra.mxu0 %v967
    %971 = vmatprep.subr.mxu0 0.0
    %972 = vmatpush1.xpose.msra.mxu0 0.0
    %973 = vmatprep.subr.mxu0 0.0
    %974 = vmatpush1.xpose.msra.mxu0 0.0
    %975 = vmatprep.subr.mxu0 0.0
    %976 = vmatpush1.xpose.msra.mxu0 0.0
    %977 = vmatprep.subr.mxu0 0.0
    %978 = vmatpush1.xpose.msra.mxu0 0.0
    %979 = vmatprep.subr.mxu0 0.0
    %980 = vmatpush1.xpose.msra.mxu0 0.0
    %981 = vmatprep.subr.mxu0 0.0
    %982 = vmatpush1.xpose.msra.mxu0 0.0
    %983 = vmatprep.subr.mxu0 0.0
    %984 = vmatpush1.xpose.msra.mxu0 0.0
    %985 = vmatprep.subr.mxu0 0.0
    %986 = vmatpush1.xpose.msra.mxu0 0.0
    %987 = vmatprep.subr.mxu0 0.0
    %988 = vmatpush1.xpose.msra.mxu0 0.0
    %989 = vmatprep.subr.mxu0 0.0
    %990 = vmatpush1.xpose.msra.mxu0 0.0
    %991 = vmatprep.subr.mxu0 0.0
    %992 = vmatpush1.xpose.msra.mxu0 0.0
    %993 = vmatprep.subr.mxu0 0.0
    %994 = vmatpush1.xpose.msra.mxu0 0.0
    %995 = vmatprep.subr.mxu0 0.0
    %996 = vmatpush1.xpose.msra.mxu0 0.0
    %997 = vmatprep.subr.mxu0 0.0
    %998 = vmatpush1.xpose.msra.mxu0 0.0
    %999 = vmatprep.subr.mxu0 0.0
    %1000 = vmatpush1.xpose.msra.mxu0 0.0
    %1001 = vmatprep.subr.mxu0 0.0
    %1002 = vmatpush1.xpose.msra.mxu0 0.0
    %1003 = vmatprep.subr.mxu0 0.0
    %1004 = vmatpush1.xpose.msra.mxu0 0.0
    %1005 = vmatprep.subr.mxu0 0.0
    %1006 = vmatpush1.xpose.msra.mxu0 0.0
    %1007 = vmatprep.subr.mxu0 0.0
    %1008 = vmatpush1.xpose.msra.mxu0 0.0
    %1009 = vmatprep.subr.mxu0 0.0
    %1010 = vmatpush1.xpose.msra.mxu0 0.0
    %1011 = vmatprep.subr.mxu0 0.0
    %1012 = vmatpush1.xpose.msra.mxu0 0.0
    %1013 = vmatprep.subr.mxu0 0.0
    %1014 = vmatpush1.xpose.msra.mxu0 0.0
    %1015 = vmatprep.subr.mxu0 0.0
    %1016 = vmatpush1.xpose.msra.mxu0 0.0
    %1017 = vmatprep.subr.mxu0 0.0
    %1018 = vmatpush1.xpose.msra.mxu0 0.0
    %1019 = vmatprep.subr.mxu0 0.0
    %1020 = vmatpush1.xpose.msra.mxu0 0.0
    %1021 = vmatprep.subr.mxu0 0.0
    %1022 = vmatpush1.xpose.msra.mxu0 0.0
    %1023 = vmatprep.subr.mxu0 0.0
    %1024 = vmatpush1.xpose.msra.mxu0 0.0
    %1025 = vmatprep.subr.mxu0 0.0
    %1026 = vmatpush1.xpose.msra.mxu0 0.0
    %1027 = vmatprep.subr.mxu0 0.0
    %1028 = vmatpush1.xpose.msra.mxu0 0.0
    %1029 = vmatprep.subr.mxu0 0.0
    %1030 = vmatpush1.xpose.msra.mxu0 0.0
    %1031 = vmatprep.subr.mxu0 0.0
    %1032 = vmatpush1.xpose.msra.mxu0 0.0
    %1033 = vmatprep.mubr.f32.mxu0 0.0
    %1034 = vmatmul.mubr.f32.gmra.mrb[0].mxu0 %v965
    %v1035 = vpop.f32.mrb[0].mxu0
    %v1036 = vadd.f32 0.0, %v1035
    %v1037 = vpop.f32.mrb[0].mxu0
    %1038 = vdwg.mxu0
    %1039 = vrot.lane.b32.xlu0 %v341, 120
    %v1040 = vpop.permute.xlu0 %1039
    %v1041 = vsel %vm356, %v341, 0
    %v1043 = vsel %vm356, %v1040, 0
    %1045 = vmatprep.subr.mxu0 0.0
    %1046 = vmatpush1.xpose.msra.mxu0 %v1043
    %1047 = vmatprep.subr.mxu0 0.0
    %1048 = vmatpush1.xpose.msra.mxu0 0.0
    %1049 = vmatprep.subr.mxu0 0.0
    %1050 = vmatpush1.xpose.msra.mxu0 0.0
    %1051 = vmatprep.subr.mxu0 0.0
    %1052 = vmatpush1.xpose.msra.mxu0 0.0
    %1053 = vmatprep.subr.mxu0 0.0
    %1054 = vmatpush1.xpose.msra.mxu0 0.0
    %1055 = vmatprep.subr.mxu0 0.0
    %1056 = vmatpush1.xpose.msra.mxu0 0.0
    %1057 = vmatprep.subr.mxu0 0.0
    %1058 = vmatpush1.xpose.msra.mxu0 0.0
    %1059 = vmatprep.subr.mxu0 0.0
    %1060 = vmatpush1.xpose.msra.mxu0 0.0
    %1061 = vmatprep.subr.mxu0 0.0
    %1062 = vmatpush1.xpose.msra.mxu0 0.0
    %1063 = vmatprep.subr.mxu0 0.0
    %1064 = vmatpush1.xpose.msra.mxu0 0.0
    %1065 = vmatprep.subr.mxu0 0.0
    %1066 = vmatpush1.xpose.msra.mxu0 0.0
    %1067 = vmatprep.subr.mxu0 0.0
    %1068 = vmatpush1.xpose.msra.mxu0 0.0
    %1069 = vmatprep.subr.mxu0 0.0
    %1070 = vmatpush1.xpose.msra.mxu0 0.0
    %1071 = vmatprep.subr.mxu0 0.0
    %1072 = vmatpush1.xpose.msra.mxu0 0.0
    %1073 = vmatprep.subr.mxu0 0.0
    %1074 = vmatpush1.xpose.msra.mxu0 0.0
    %1075 = vmatprep.subr.mxu0 0.0
    %1076 = vmatpush1.xpose.msra.mxu0 0.0
    %1077 = vmatprep.subr.mxu0 0.0
    %1078 = vmatpush1.xpose.msra.mxu0 0.0
    %1079 = vmatprep.subr.mxu0 0.0
    %1080 = vmatpush1.xpose.msra.mxu0 0.0
    %1081 = vmatprep.subr.mxu0 0.0
    %1082 = vmatpush1.xpose.msra.mxu0 0.0
    %1083 = vmatprep.subr.mxu0 0.0
    %1084 = vmatpush1.xpose.msra.mxu0 0.0
    %1085 = vmatprep.subr.mxu0 0.0
    %1086 = vmatpush1.xpose.msra.mxu0 0.0
    %1087 = vmatprep.subr.mxu0 0.0
    %1088 = vmatpush1.xpose.msra.mxu0 0.0
    %1089 = vmatprep.subr.mxu0 0.0
    %1090 = vmatpush1.xpose.msra.mxu0 0.0
    %1091 = vmatprep.subr.mxu0 0.0
    %1092 = vmatpush1.xpose.msra.mxu0 0.0
    %1093 = vmatprep.subr.mxu0 0.0
    %1094 = vmatpush1.xpose.msra.mxu0 0.0
    %1095 = vmatprep.subr.mxu0 0.0
    %1096 = vmatpush1.xpose.msra.mxu0 0.0
    %1097 = vmatprep.subr.mxu0 0.0
    %1098 = vmatpush1.xpose.msra.mxu0 0.0
    %1099 = vmatprep.subr.mxu0 0.0
    %1100 = vmatpush1.xpose.msra.mxu0 0.0
    %1101 = vmatprep.subr.mxu0 0.0
    %1102 = vmatpush1.xpose.msra.mxu0 0.0
    %1103 = vmatprep.subr.mxu0 0.0
    %1104 = vmatpush1.xpose.msra.mxu0 0.0
    %1105 = vmatprep.subr.mxu0 0.0
    %1106 = vmatpush1.xpose.msra.mxu0 0.0
    %1107 = vmatprep.subr.mxu0 0.0
    %1108 = vmatpush1.xpose.msra.mxu0 0.0
    %1109 = vmatprep.mubr.f32.mxu0 0.0
    %1110 = vmatmul.mubr.f32.gmra.mrb[0].mxu0 %v1041
    %v1111 = vpop.f32.mrb[0].mxu0
    %v1112 = vadd.f32 0.0, %v1111
    %v1113 = vpop.f32.mrb[0].mxu0
    %1114 = vdwg.mxu0
    %1115 = vrot.lane.b32.xlu0 %v343, 120
    %v1116 = vpop.permute.xlu0 %1115
    %v1117 = vsel %vm356, %v343, 0
    %v1119 = vsel %vm356, %v1116, 0
    %1121 = vmatprep.subr.mxu0 0.0
    %1122 = vmatpush1.xpose.msra.mxu0 %v1119
    %1123 = vmatprep.subr.mxu0 0.0
    %1124 = vmatpush1.xpose.msra.mxu0 0.0
    %1125 = vmatprep.subr.mxu0 0.0
    %1126 = vmatpush1.xpose.msra.mxu0 0.0
    %1127 = vmatprep.subr.mxu0 0.0
    %1128 = vmatpush1.xpose.msra.mxu0 0.0
    %1129 = vmatprep.subr.mxu0 0.0
    %1130 = vmatpush1.xpose.msra.mxu0 0.0
    %1131 = vmatprep.subr.mxu0 0.0
    %1132 = vmatpush1.xpose.msra.mxu0 0.0
    %1133 = vmatprep.subr.mxu0 0.0
    %1134 = vmatpush1.xpose.msra.mxu0 0.0
    %1135 = vmatprep.subr.mxu0 0.0
    %1136 = vmatpush1.xpose.msra.mxu0 0.0
    %1137 = vmatprep.subr.mxu0 0.0
    %1138 = vmatpush1.xpose.msra.mxu0 0.0
    %1139 = vmatprep.subr.mxu0 0.0
    %1140 = vmatpush1.xpose.msra.mxu0 0.0
    %1141 = vmatprep.subr.mxu0 0.0
    %1142 = vmatpush1.xpose.msra.mxu0 0.0
    %1143 = vmatprep.subr.mxu0 0.0
    %1144 = vmatpush1.xpose.msra.mxu0 0.0
    %1145 = vmatprep.subr.mxu0 0.0
    %1146 = vmatpush1.xpose.msra.mxu0 0.0
    %1147 = vmatprep.subr.mxu0 0.0
    %1148 = vmatpush1.xpose.msra.mxu0 0.0
    %1149 = vmatprep.subr.mxu0 0.0
    %1150 = vmatpush1.xpose.msra.mxu0 0.0
    %1151 = vmatprep.subr.mxu0 0.0
    %1152 = vmatpush1.xpose.msra.mxu0 0.0
    %1153 = vmatprep.subr.mxu0 0.0
    %1154 = vmatpush1.xpose.msra.mxu0 0.0
    %1155 = vmatprep.subr.mxu0 0.0
    %1156 = vmatpush1.xpose.msra.mxu0 0.0
    %1157 = vmatprep.subr.mxu0 0.0
    %1158 = vmatpush1.xpose.msra.mxu0 0.0
    %1159 = vmatprep.subr.mxu0 0.0
    %1160 = vmatpush1.xpose.msra.mxu0 0.0
    %1161 = vmatprep.subr.mxu0 0.0
    %1162 = vmatpush1.xpose.msra.mxu0 0.0
    %1163 = vmatprep.subr.mxu0 0.0
    %1164 = vmatpush1.xpose.msra.mxu0 0.0
    %1165 = vmatprep.subr.mxu0 0.0
    %1166 = vmatpush1.xpose.msra.mxu0 0.0
    %1167 = vmatprep.subr.mxu0 0.0
    %1168 = vmatpush1.xpose.msra.mxu0 0.0
    %1169 = vmatprep.subr.mxu0 0.0
    %1170 = vmatpush1.xpose.msra.mxu0 0.0
    %1171 = vmatprep.subr.mxu0 0.0
    %1172 = vmatpush1.xpose.msra.mxu0 0.0
    %1173 = vmatprep.subr.mxu0 0.0
    %1174 = vmatpush1.xpose.msra.mxu0 0.0
    %1175 = vmatprep.subr.mxu0 0.0
    %1176 = vmatpush1.xpose.msra.mxu0 0.0
    %1177 = vmatprep.subr.mxu0 0.0
    %1178 = vmatpush1.xpose.msra.mxu0 0.0
    %1179 = vmatprep.subr.mxu0 0.0
    %1180 = vmatpush1.xpose.msra.mxu0 0.0
    %1181 = vmatprep.subr.mxu0 0.0
    %1182 = vmatpush1.xpose.msra.mxu0 0.0
    %1183 = vmatprep.subr.mxu0 0.0
    %1184 = vmatpush1.xpose.msra.mxu0 0.0
    %1185 = vmatprep.mubr.f32.mxu0 0.0
    %1186 = vmatmul.mubr.f32.gmra.mrb[0].mxu0 %v1117
    %v1187 = vpop.f32.mrb[0].mxu0
    %v1188 = vadd.f32 0.0, %v1187
    %v1189 = vpop.f32.mrb[0].mxu0
    %1190 = vdwg.mxu0
    %1191 = vrot.lane.b32.xlu0 %v345, 120
    %v1192 = vpop.permute.xlu0 %1191
    %v1193 = vsel %vm356, %v345, 0
    %v1195 = vsel %vm356, %v1192, 0
    %1197 = vmatprep.subr.mxu0 0.0
    %1198 = vmatpush1.xpose.msra.mxu0 %v1195
    %1199 = vmatprep.subr.mxu0 0.0
    %1200 = vmatpush1.xpose.msra.mxu0 0.0
    %1201 = vmatprep.subr.mxu0 0.0
    %1202 = vmatpush1.xpose.msra.mxu0 0.0
    %1203 = vmatprep.subr.mxu0 0.0
    %1204 = vmatpush1.xpose.msra.mxu0 0.0
    %1205 = vmatprep.subr.mxu0 0.0
    %1206 = vmatpush1.xpose.msra.mxu0 0.0
    %1207 = vmatprep.subr.mxu0 0.0
    %1208 = vmatpush1.xpose.msra.mxu0 0.0
    %1209 = vmatprep.subr.mxu0 0.0
    %1210 = vmatpush1.xpose.msra.mxu0 0.0
    %1211 = vmatprep.subr.mxu0 0.0
    %1212 = vmatpush1.xpose.msra.mxu0 0.0
    %1213 = vmatprep.subr.mxu0 0.0
    %1214 = vmatpush1.xpose.msra.mxu0 0.0
    %1215 = vmatprep.subr.mxu0 0.0
    %1216 = vmatpush1.xpose.msra.mxu0 0.0
    %1217 = vmatprep.subr.mxu0 0.0
    %1218 = vmatpush1.xpose.msra.mxu0 0.0
    %1219 = vmatprep.subr.mxu0 0.0
    %1220 = vmatpush1.xpose.msra.mxu0 0.0
    %1221 = vmatprep.subr.mxu0 0.0
    %1222 = vmatpush1.xpose.msra.mxu0 0.0
    %1223 = vmatprep.subr.mxu0 0.0
    %1224 = vmatpush1.xpose.msra.mxu0 0.0
    %1225 = vmatprep.subr.mxu0 0.0
    %1226 = vmatpush1.xpose.msra.mxu0 0.0
    %1227 = vmatprep.subr.mxu0 0.0
    %1228 = vmatpush1.xpose.msra.mxu0 0.0
    %1229 = vmatprep.subr.mxu0 0.0
    %1230 = vmatpush1.xpose.msra.mxu0 0.0
    %1231 = vmatprep.subr.mxu0 0.0
    %1232 = vmatpush1.xpose.msra.mxu0 0.0
    %1233 = vmatprep.subr.mxu0 0.0
    %1234 = vmatpush1.xpose.msra.mxu0 0.0
    %1235 = vmatprep.subr.mxu0 0.0
    %1236 = vmatpush1.xpose.msra.mxu0 0.0
    %1237 = vmatprep.subr.mxu0 0.0
    %1238 = vmatpush1.xpose.msra.mxu0 0.0
    %1239 = vmatprep.subr.mxu0 0.0
    %1240 = vmatpush1.xpose.msra.mxu0 0.0
    %1241 = vmatprep.subr.mxu0 0.0
    %1242 = vmatpush1.xpose.msra.mxu0 0.0
    %1243 = vmatprep.subr.mxu0 0.0
    %1244 = vmatpush1.xpose.msra.mxu0 0.0
    %1245 = vmatprep.subr.mxu0 0.0
    %1246 = vmatpush1.xpose.msra.mxu0 0.0
    %1247 = vmatprep.subr.mxu0 0.0
    %1248 = vmatpush1.xpose.msra.mxu0 0.0
    %1249 = vmatprep.subr.mxu0 0.0
    %1250 = vmatpush1.xpose.msra.mxu0 0.0
    %1251 = vmatprep.subr.mxu0 0.0
    %1252 = vmatpush1.xpose.msra.mxu0 0.0
    %1253 = vmatprep.subr.mxu0 0.0
    %1254 = vmatpush1.xpose.msra.mxu0 0.0
    %1255 = vmatprep.subr.mxu0 0.0
    %1256 = vmatpush1.xpose.msra.mxu0 0.0
    %1257 = vmatprep.subr.mxu0 0.0
    %1258 = vmatpush1.xpose.msra.mxu0 0.0
    %1259 = vmatprep.subr.mxu0 0.0
    %1260 = vmatpush1.xpose.msra.mxu0 0.0
    %1261 = vmatprep.mubr.f32.mxu0 0.0
    %1262 = vmatmul.mubr.f32.gmra.mrb[0].mxu0 %v1193
    %v1263 = vpop.f32.mrb[0].mxu0
    %v1264 = vadd.f32 0.0, %v1263
    %v1265 = vpop.f32.mrb[0].mxu0
    %1266 = vdwg.mxu0
    %1267 = vrot.lane.b32.xlu0 %v347, 120
    %v1268 = vpop.permute.xlu0 %1267
    %v1269 = vsel %vm356, %v347, 0
    %v1271 = vsel %vm356, %v1268, 0
    %1273 = vmatprep.subr.mxu0 0.0
    %1274 = vmatpush1.xpose.msra.mxu0 %v1271
    %1275 = vmatprep.subr.mxu0 0.0
    %1276 = vmatpush1.xpose.msra.mxu0 0.0
    %1277 = vmatprep.subr.mxu0 0.0
    %1278 = vmatpush1.xpose.msra.mxu0 0.0
    %1279 = vmatprep.subr.mxu0 0.0
    %1280 = vmatpush1.xpose.msra.mxu0 0.0
    %1281 = vmatprep.subr.mxu0 0.0
    %1282 = vmatpush1.xpose.msra.mxu0 0.0
    %1283 = vmatprep.subr.mxu0 0.0
    %1284 = vmatpush1.xpose.msra.mxu0 0.0
    %1285 = vmatprep.subr.mxu0 0.0
    %1286 = vmatpush1.xpose.msra.mxu0 0.0
    %1287 = vmatprep.subr.mxu0 0.0
    %1288 = vmatpush1.xpose.msra.mxu0 0.0
    %1289 = vmatprep.subr.mxu0 0.0
    %1290 = vmatpush1.xpose.msra.mxu0 0.0
    %1291 = vmatprep.subr.mxu0 0.0
    %1292 = vmatpush1.xpose.msra.mxu0 0.0
    %1293 = vmatprep.subr.mxu0 0.0
    %1294 = vmatpush1.xpose.msra.mxu0 0.0
    %1295 = vmatprep.subr.mxu0 0.0
    %1296 = vmatpush1.xpose.msra.mxu0 0.0
    %1297 = vmatprep.subr.mxu0 0.0
    %1298 = vmatpush1.xpose.msra.mxu0 0.0
    %1299 = vmatprep.subr.mxu0 0.0
    %1300 = vmatpush1.xpose.msra.mxu0 0.0
    %1301 = vmatprep.subr.mxu0 0.0
    %1302 = vmatpush1.xpose.msra.mxu0 0.0
    %1303 = vmatprep.subr.mxu0 0.0
    %1304 = vmatpush1.xpose.msra.mxu0 0.0
    %1305 = vmatprep.subr.mxu0 0.0
    %1306 = vmatpush1.xpose.msra.mxu0 0.0
    %1307 = vmatprep.subr.mxu0 0.0
    %1308 = vmatpush1.xpose.msra.mxu0 0.0
    %1309 = vmatprep.subr.mxu0 0.0
    %1310 = vmatpush1.xpose.msra.mxu0 0.0
    %1311 = vmatprep.subr.mxu0 0.0
    %1312 = vmatpush1.xpose.msra.mxu0 0.0
    %1313 = vmatprep.subr.mxu0 0.0
    %1314 = vmatpush1.xpose.msra.mxu0 0.0
    %1315 = vmatprep.subr.mxu0 0.0
    %1316 = vmatpush1.xpose.msra.mxu0 0.0
    %1317 = vmatprep.subr.mxu0 0.0
    %1318 = vmatpush1.xpose.msra.mxu0 0.0
    %1319 = vmatprep.subr.mxu0 0.0
    %1320 = vmatpush1.xpose.msra.mxu0 0.0
    %1321 = vmatprep.subr.mxu0 0.0
    %1322 = vmatpush1.xpose.msra.mxu0 0.0
    %1323 = vmatprep.subr.mxu0 0.0
    %1324 = vmatpush1.xpose.msra.mxu0 0.0
    %1325 = vmatprep.subr.mxu0 0.0
    %1326 = vmatpush1.xpose.msra.mxu0 0.0
    %1327 = vmatprep.subr.mxu0 0.0
    %1328 = vmatpush1.xpose.msra.mxu0 0.0
    %1329 = vmatprep.subr.mxu0 0.0
    %1330 = vmatpush1.xpose.msra.mxu0 0.0
    %1331 = vmatprep.subr.mxu0 0.0
    %1332 = vmatpush1.xpose.msra.mxu0 0.0
    %1333 = vmatprep.subr.mxu0 0.0
    %1334 = vmatpush1.xpose.msra.mxu0 0.0
    %1335 = vmatprep.subr.mxu0 0.0
    %1336 = vmatpush1.xpose.msra.mxu0 0.0
    %1337 = vmatprep.mubr.f32.mxu0 0.0
    %1338 = vmatmul.mubr.f32.gmra.mrb[0].mxu0 %v1269
    %v1339 = vpop.f32.mrb[0].mxu0
    %v1340 = vadd.f32 0.0, %v1339
    %v1341 = vpop.f32.mrb[0].mxu0
    %1342 = vdwg.mxu0
    %1343 = vrot.lane.b32.xlu0 %v349, 120
    %v1344 = vpop.permute.xlu0 %1343
    %v1345 = vsel %vm356, %v349, 0
    %v1347 = vsel %vm356, %v1344, 0
    %1349 = vmatprep.subr.mxu0 0.0
    %1350 = vmatpush1.xpose.msra.mxu0 %v1347
    %1351 = vmatprep.subr.mxu0 0.0
    %1352 = vmatpush1.xpose.msra.mxu0 0.0
    %1353 = vmatprep.subr.mxu0 0.0
    %1354 = vmatpush1.xpose.msra.mxu0 0.0
    %1355 = vmatprep.subr.mxu0 0.0
    %1356 = vmatpush1.xpose.msra.mxu0 0.0
    %1357 = vmatprep.subr.mxu0 0.0
    %1358 = vmatpush1.xpose.msra.mxu0 0.0
    %1359 = vmatprep.subr.mxu0 0.0
    %1360 = vmatpush1.xpose.msra.mxu0 0.0
    %1361 = vmatprep.subr.mxu0 0.0
    %1362 = vmatpush1.xpose.msra.mxu0 0.0
    %1363 = vmatprep.subr.mxu0 0.0
    %1364 = vmatpush1.xpose.msra.mxu0 0.0
    %1365 = vmatprep.subr.mxu0 0.0
    %1366 = vmatpush1.xpose.msra.mxu0 0.0
    %1367 = vmatprep.subr.mxu0 0.0
    %1368 = vmatpush1.xpose.msra.mxu0 0.0
    %1369 = vmatprep.subr.mxu0 0.0
    %1370 = vmatpush1.xpose.msra.mxu0 0.0
    %1371 = vmatprep.subr.mxu0 0.0
    %1372 = vmatpush1.xpose.msra.mxu0 0.0
    %1373 = vmatprep.subr.mxu0 0.0
    %1374 = vmatpush1.xpose.msra.mxu0 0.0
    %1375 = vmatprep.subr.mxu0 0.0
    %1376 = vmatpush1.xpose.msra.mxu0 0.0
    %1377 = vmatprep.subr.mxu0 0.0
    %1378 = vmatpush1.xpose.msra.mxu0 0.0
    %1379 = vmatprep.subr.mxu0 0.0
    %1380 = vmatpush1.xpose.msra.mxu0 0.0
    %1381 = vmatprep.subr.mxu0 0.0
    %1382 = vmatpush1.xpose.msra.mxu0 0.0
    %1383 = vmatprep.subr.mxu0 0.0
    %1384 = vmatpush1.xpose.msra.mxu0 0.0
    %1385 = vmatprep.subr.mxu0 0.0
    %1386 = vmatpush1.xpose.msra.mxu0 0.0
    %1387 = vmatprep.subr.mxu0 0.0
    %1388 = vmatpush1.xpose.msra.mxu0 0.0
    %1389 = vmatprep.subr.mxu0 0.0
    %1390 = vmatpush1.xpose.msra.mxu0 0.0
    %1391 = vmatprep.subr.mxu0 0.0
    %1392 = vmatpush1.xpose.msra.mxu0 0.0
    %1393 = vmatprep.subr.mxu0 0.0
    %1394 = vmatpush1.xpose.msra.mxu0 0.0
    %1395 = vmatprep.subr.mxu0 0.0
    %1396 = vmatpush1.xpose.msra.mxu0 0.0
    %1397 = vmatprep.subr.mxu0 0.0
    %1398 = vmatpush1.xpose.msra.mxu0 0.0
    %1399 = vmatprep.subr.mxu0 0.0
    %1400 = vmatpush1.xpose.msra.mxu0 0.0
    %1401 = vmatprep.subr.mxu0 0.0
    %1402 = vmatpush1.xpose.msra.mxu0 0.0
    %1403 = vmatprep.subr.mxu0 0.0
    %1404 = vmatpush1.xpose.msra.mxu0 0.0
    %1405 = vmatprep.subr.mxu0 0.0
    %1406 = vmatpush1.xpose.msra.mxu0 0.0
    %1407 = vmatprep.subr.mxu0 0.0
    %1408 = vmatpush1.xpose.msra.mxu0 0.0
    %1409 = vmatprep.subr.mxu0 0.0
    %1410 = vmatpush1.xpose.msra.mxu0 0.0
    %1411 = vmatprep.subr.mxu0 0.0
    %1412 = vmatpush1.xpose.msra.mxu0 0.0
    %1413 = vmatprep.mubr.f32.mxu0 0.0
    %1414 = vmatmul.mubr.f32.gmra.mrb[0].mxu0 %v1345
    %v1415 = vpop.f32.mrb[0].mxu0
    %v1416 = vadd.f32 0.0, %v1415
    %v1417 = vpop.f32.mrb[0].mxu0
    %1418 = vdwg.mxu0
    %1419 = vrot.lane.b32.xlu0 %v351, 120
    %v1420 = vpop.permute.xlu0 %1419
    %v1421 = vsel %vm356, %v351, 0
    %v1423 = vsel %vm356, %v1420, 0
    %1425 = vmatprep.subr.mxu0 0.0
    %1426 = vmatpush1.xpose.msra.mxu0 %v1423
    %1427 = vmatprep.subr.mxu0 0.0
    %1428 = vmatpush1.xpose.msra.mxu0 0.0
    %1429 = vmatprep.subr.mxu0 0.0
    %1430 = vmatpush1.xpose.msra.mxu0 0.0
    %1431 = vmatprep.subr.mxu0 0.0
    %1432 = vmatpush1.xpose.msra.mxu0 0.0
    %1433 = vmatprep.subr.mxu0 0.0
    %1434 = vmatpush1.xpose.msra.mxu0 0.0
    %1435 = vmatprep.subr.mxu0 0.0
    %1436 = vmatpush1.xpose.msra.mxu0 0.0
    %1437 = vmatprep.subr.mxu0 0.0
    %1438 = vmatpush1.xpose.msra.mxu0 0.0
    %1439 = vmatprep.subr.mxu0 0.0
    %1440 = vmatpush1.xpose.msra.mxu0 0.0
    %1441 = vmatprep.subr.mxu0 0.0
    %1442 = vmatpush1.xpose.msra.mxu0 0.0
    %1443 = vmatprep.subr.mxu0 0.0
    %1444 = vmatpush1.xpose.msra.mxu0 0.0
    %1445 = vmatprep.subr.mxu0 0.0
    %1446 = vmatpush1.xpose.msra.mxu0 0.0
    %1447 = vmatprep.subr.mxu0 0.0
    %1448 = vmatpush1.xpose.msra.mxu0 0.0
    %1449 = vmatprep.subr.mxu0 0.0
    %1450 = vmatpush1.xpose.msra.mxu0 0.0
    %1451 = vmatprep.subr.mxu0 0.0
    %1452 = vmatpush1.xpose.msra.mxu0 0.0
    %1453 = vmatprep.subr.mxu0 0.0
    %1454 = vmatpush1.xpose.msra.mxu0 0.0
    %1455 = vmatprep.subr.mxu0 0.0
    %1456 = vmatpush1.xpose.msra.mxu0 0.0
    %1457 = vmatprep.subr.mxu0 0.0
    %1458 = vmatpush1.xpose.msra.mxu0 0.0
    %1459 = vmatprep.subr.mxu0 0.0
    %1460 = vmatpush1.xpose.msra.mxu0 0.0
    %1461 = vmatprep.subr.mxu0 0.0
    %1462 = vmatpush1.xpose.msra.mxu0 0.0
    %1463 = vmatprep.subr.mxu0 0.0
    %1464 = vmatpush1.xpose.msra.mxu0 0.0
    %1465 = vmatprep.subr.mxu0 0.0
    %1466 = vmatpush1.xpose.msra.mxu0 0.0
    %1467 = vmatprep.subr.mxu0 0.0
    %1468 = vmatpush1.xpose.msra.mxu0 0.0
    %1469 = vmatprep.subr.mxu0 0.0
    %1470 = vmatpush1.xpose.msra.mxu0 0.0
    %1471 = vmatprep.subr.mxu0 0.0
    %1472 = vmatpush1.xpose.msra.mxu0 0.0
    %1473 = vmatprep.subr.mxu0 0.0
    %1474 = vmatpush1.xpose.msra.mxu0 0.0
    %1475 = vmatprep.subr.mxu0 0.0
    %1476 = vmatpush1.xpose.msra.mxu0 0.0
    %1477 = vmatprep.subr.mxu0 0.0
    %1478 = vmatpush1.xpose.msra.mxu0 0.0
    %1479 = vmatprep.subr.mxu0 0.0
    %1480 = vmatpush1.xpose.msra.mxu0 0.0
    %1481 = vmatprep.subr.mxu0 0.0
    %1482 = vmatpush1.xpose.msra.mxu0 0.0
    %1483 = vmatprep.subr.mxu0 0.0
    %1484 = vmatpush1.xpose.msra.mxu0 0.0
    %1485 = vmatprep.subr.mxu0 0.0
    %1486 = vmatpush1.xpose.msra.mxu0 0.0
    %1487 = vmatprep.subr.mxu0 0.0
    %1488 = vmatpush1.xpose.msra.mxu0 0.0
    %1489 = vmatprep.mubr.f32.mxu0 0.0
    %1490 = vmatmul.mubr.f32.gmra.mrb[0].mxu0 %v1421
    %v1491 = vpop.f32.mrb[0].mxu0
    %v1492 = vadd.f32 0.0, %v1491
    %v1493 = vpop.f32.mrb[0].mxu0
    %1494 = vdwg.mxu0
    %1495 = vrot.lane.b32.xlu0 %v353, 120
    %v1496 = vpop.permute.xlu0 %1495
    %v1497 = vsel %vm356, %v353, 0
    %v1499 = vsel %vm356, %v1496, 0
    %1501 = vmatprep.subr.mxu0 0.0
    %1502 = vmatpush1.xpose.msra.mxu0 %v1499
    %1503 = vmatprep.subr.mxu0 0.0
    %1504 = vmatpush1.xpose.msra.mxu0 0.0
    %1505 = vmatprep.subr.mxu0 0.0
    %1506 = vmatpush1.xpose.msra.mxu0 0.0
    %1507 = vmatprep.subr.mxu0 0.0
    %1508 = vmatpush1.xpose.msra.mxu0 0.0
    %1509 = vmatprep.subr.mxu0 0.0
    %1510 = vmatpush1.xpose.msra.mxu0 0.0
    %1511 = vmatprep.subr.mxu0 0.0
    %1512 = vmatpush1.xpose.msra.mxu0 0.0
    %1513 = vmatprep.subr.mxu0 0.0
    %1514 = vmatpush1.xpose.msra.mxu0 0.0
    %1515 = vmatprep.subr.mxu0 0.0
    %1516 = vmatpush1.xpose.msra.mxu0 0.0
    %1517 = vmatprep.subr.mxu0 0.0
    %1518 = vmatpush1.xpose.msra.mxu0 0.0
    %1519 = vmatprep.subr.mxu0 0.0
    %1520 = vmatpush1.xpose.msra.mxu0 0.0
    %1521 = vmatprep.subr.mxu0 0.0
    %1522 = vmatpush1.xpose.msra.mxu0 0.0
    %1523 = vmatprep.subr.mxu0 0.0
    %1524 = vmatpush1.xpose.msra.mxu0 0.0
    %1525 = vmatprep.subr.mxu0 0.0
    %1526 = vmatpush1.xpose.msra.mxu0 0.0
    %1527 = vmatprep.subr.mxu0 0.0
    %1528 = vmatpush1.xpose.msra.mxu0 0.0
    %1529 = vmatprep.subr.mxu0 0.0
    %1530 = vmatpush1.xpose.msra.mxu0 0.0
    %1531 = vmatprep.subr.mxu0 0.0
    %1532 = vmatpush1.xpose.msra.mxu0 0.0
    %1533 = vmatprep.subr.mxu0 0.0
    %1534 = vmatpush1.xpose.msra.mxu0 0.0
    %1535 = vmatprep.subr.mxu0 0.0
    %1536 = vmatpush1.xpose.msra.mxu0 0.0
    %1537 = vmatprep.subr.mxu0 0.0
    %1538 = vmatpush1.xpose.msra.mxu0 0.0
    %1539 = vmatprep.subr.mxu0 0.0
    %1540 = vmatpush1.xpose.msra.mxu0 0.0
    %1541 = vmatprep.subr.mxu0 0.0
    %1542 = vmatpush1.xpose.msra.mxu0 0.0
    %1543 = vmatprep.subr.mxu0 0.0
    %1544 = vmatpush1.xpose.msra.mxu0 0.0
    %1545 = vmatprep.subr.mxu0 0.0
    %1546 = vmatpush1.xpose.msra.mxu0 0.0
    %1547 = vmatprep.subr.mxu0 0.0
    %1548 = vmatpush1.xpose.msra.mxu0 0.0
    %1549 = vmatprep.subr.mxu0 0.0
    %1550 = vmatpush1.xpose.msra.mxu0 0.0
    %1551 = vmatprep.subr.mxu0 0.0
    %1552 = vmatpush1.xpose.msra.mxu0 0.0
    %1553 = vmatprep.subr.mxu0 0.0
    %1554 = vmatpush1.xpose.msra.mxu0 0.0
    %1555 = vmatprep.subr.mxu0 0.0
    %1556 = vmatpush1.xpose.msra.mxu0 0.0
    %1557 = vmatprep.subr.mxu0 0.0
    %1558 = vmatpush1.xpose.msra.mxu0 0.0
    %1559 = vmatprep.subr.mxu0 0.0
    %1560 = vmatpush1.xpose.msra.mxu0 0.0
    %1561 = vmatprep.subr.mxu0 0.0
    %1562 = vmatpush1.xpose.msra.mxu0 0.0
    %1563 = vmatprep.subr.mxu0 0.0
    %1564 = vmatpush1.xpose.msra.mxu0 0.0
    %1565 = vmatprep.mubr.f32.mxu0 0.0
    %1566 = vmatmul.mubr.f32.gmra.mrb[0].mxu0 %v1497
    %v1567 = vpop.f32.mrb[0].mxu0
    %v1568 = vadd.f32 0.0, %v1567
    %v1569 = vpop.f32.mrb[0].mxu0
    %1570 = vdwg.mxu0
    %v1571 = vlaneseq
    %v1572 = vshrl.u32 %v1571, 7
    %v1573 = vlaneseq
    %v1574 = vand.u32 %v1573, 127
    %vm1575 = vcmp.ge.s32.totalorder %v1572, %v1574
    %v1576 = vsel %vm1575, 1, 0
    %vm1577 = vcmp.eq.s32.totalorder %v1576, 1
    %v1578 = vsel %vm1577, %v428, -1e+30
    %v1579 = vsel %vm1577, %v504, -1e+30
    %v1580 = vsel %vm1577, %v580, -1e+30
    %v1581 = vsel %vm1577, %v656, -1e+30
    %v1582 = vsel %vm1577, %v732, -1e+30
    %v1583 = vsel %vm1577, %v808, -1e+30
    %v1584 = vsel %vm1577, %v884, -1e+30
    %v1585 = vsel %vm1577, %v960, -1e+30
    %v1586 = vsel %vm1577, %v1036, -1e+30
    %v1587 = vsel %vm1577, %v1112, -1e+30
    %v1588 = vsel %vm1577, %v1188, -1e+30
    %v1589 = vsel %vm1577, %v1264, -1e+30
    %v1590 = vsel %vm1577, %v1340, -1e+30
    %v1591 = vsel %vm1577, %v1416, -1e+30
    %v1592 = vsel %vm1577, %v1492, -1e+30
    %v1593 = vsel %vm1577, %v1568, -1e+30
    %v1594 = vsel %vm66, %v1578, -inf
    %1595 = vmax.xlane.f32.xlu0 %v1594
    %v1596 = vpop.xlane.xlu0 %1595
    %v1597 = vsel %vm66, %v1579, -inf
    %1598 = vmax.xlane.f32.xlu0 %v1597
    %v1599 = vpop.xlane.xlu0 %1598
    %v1600 = vsel %vm66, %v1580, -inf
    %1601 = vmax.xlane.f32.xlu0 %v1600
    %v1602 = vpop.xlane.xlu0 %1601
    %v1603 = vsel %vm66, %v1581, -inf
    %1604 = vmax.xlane.f32.xlu0 %v1603
    %v1605 = vpop.xlane.xlu0 %1604
    %v1606 = vsel %vm66, %v1582, -inf
    %1607 = vmax.xlane.f32.xlu0 %v1606
    %v1608 = vpop.xlane.xlu0 %1607
    %v1609 = vsel %vm66, %v1583, -inf
    %1610 = vmax.xlane.f32.xlu0 %v1609
    %v1611 = vpop.xlane.xlu0 %1610
    %v1612 = vsel %vm66, %v1584, -inf
    %1613 = vmax.xlane.f32.xlu0 %v1612
    %v1614 = vpop.xlane.xlu0 %1613
    %v1615 = vsel %vm66, %v1585, -inf
    %1616 = vmax.xlane.f32.xlu0 %v1615
    %v1617 = vpop.xlane.xlu0 %1616
    %v1618 = vsel %vm66, %v1586, -inf
    %1619 = vmax.xlane.f32.xlu0 %v1618
    %v1620 = vpop.xlane.xlu0 %1619
    %v1621 = vsel %vm66, %v1587, -inf
    %1622 = vmax.xlane.f32.xlu0 %v1621
    %v1623 = vpop.xlane.xlu0 %1622
    %v1624 = vsel %vm66, %v1588, -inf
    %1625 = vmax.xlane.f32.xlu0 %v1624
    %v1626 = vpop.xlane.xlu0 %1625
    %v1627 = vsel %vm66, %v1589, -inf
    %1628 = vmax.xlane.f32.xlu0 %v1627
    %v1629 = vpop.xlane.xlu0 %1628
    %v1630 = vsel %vm66, %v1590, -inf
    %1631 = vmax.xlane.f32.xlu0 %v1630
    %v1632 = vpop.xlane.xlu0 %1631
    %v1633 = vsel %vm66, %v1591, -inf
    %1634 = vmax.xlane.f32.xlu0 %v1633
    %v1635 = vpop.xlane.xlu0 %1634
    %v1636 = vsel %vm66, %v1592, -inf
    %1637 = vmax.xlane.f32.xlu0 %v1636
    %v1638 = vpop.xlane.xlu0 %1637
    %v1639 = vsel %vm66, %v1593, -inf
    %1640 = vmax.xlane.f32.xlu0 %v1639
    %v1641 = vpop.xlane.xlu0 %1640
    %v1642 = vsub.f32 %v1578, %v1596
    %v1643 = vsub.f32 %v1579, %v1599
    %v1644 = vsub.f32 %v1580, %v1602
    %v1645 = vsub.f32 %v1581, %v1605
    %v1646 = vsub.f32 %v1582, %v1608
    %v1647 = vsub.f32 %v1583, %v1611
    %v1648 = vsub.f32 %v1584, %v1614
    %v1649 = vsub.f32 %v1585, %v1617
    %v1650 = vsub.f32 %v1586, %v1620
    %v1651 = vsub.f32 %v1587, %v1623
    %v1652 = vsub.f32 %v1588, %v1626
    %v1653 = vsub.f32 %v1589, %v1629
    %v1654 = vsub.f32 %v1590, %v1632
    %v1655 = vsub.f32 %v1591, %v1635
    %v1656 = vsub.f32 %v1592, %v1638
    %v1657 = vsub.f32 %v1593, %v1641
    %v1658 = vmul.f32 %v1642, 1.442695
    %v1659 = vpow.pop %v1658
    %v1660 = vmul.f32 %v1643, 1.442695
    %v1661 = vpow.pop %v1660
    %v1662 = vmul.f32 %v1644, 1.442695
    %v1663 = vpow.pop %v1662
    %v1664 = vmul.f32 %v1645, 1.442695
    %v1665 = vpow.pop %v1664
    %v1666 = vmul.f32 %v1646, 1.442695
    %v1667 = vpow.pop %v1666
    %v1668 = vmul.f32 %v1647, 1.442695
    %v1669 = vpow.pop %v1668
    %v1670 = vmul.f32 %v1648, 1.442695
    %v1671 = vpow.pop %v1670
    %v1672 = vmul.f32 %v1649, 1.442695
    %v1673 = vpow.pop %v1672
    %v1674 = vmul.f32 %v1650, 1.442695
    %v1675 = vpow.pop %v1674
    %v1676 = vmul.f32 %v1651, 1.442695
    %v1677 = vpow.pop %v1676
    %v1678 = vmul.f32 %v1652, 1.442695
    %v1679 = vpow.pop %v1678
    %v1680 = vmul.f32 %v1653, 1.442695
    %v1681 = vpow.pop %v1680
    %v1682 = vmul.f32 %v1654, 1.442695
    %v1683 = vpow.pop %v1682
    %v1684 = vmul.f32 %v1655, 1.442695
    %v1685 = vpow.pop %v1684
    %v1686 = vmul.f32 %v1656, 1.442695
    %v1687 = vpow.pop %v1686
    %v1688 = vmul.f32 %v1657, 1.442695
    %v1689 = vpow.pop %v1688
    %v1690 = vsel %vm66, %v1659, 0.0
    %1691 = vadd.xlane.f32.xlu0 %v1690
    %v1692 = vpop.xlane.xlu0 %1691
    %v1693 = vsel %vm66, %v1661, 0.0
    %1694 = vadd.xlane.f32.xlu0 %v1693
    %v1695 = vpop.xlane.xlu0 %1694
    %v1696 = vsel %vm66, %v1663, 0.0
    %1697 = vadd.xlane.f32.xlu0 %v1696
    %v1698 = vpop.xlane.xlu0 %1697
    %v1699 = vsel %vm66, %v1665, 0.0
    %1700 = vadd.xlane.f32.xlu0 %v1699
    %v1701 = vpop.xlane.xlu0 %1700
    %v1702 = vsel %vm66, %v1667, 0.0
    %1703 = vadd.xlane.f32.xlu0 %v1702
    %v1704 = vpop.xlane.xlu0 %1703
    %v1705 = vsel %vm66, %v1669, 0.0
    %1706 = vadd.xlane.f32.xlu0 %v1705
    %v1707 = vpop.xlane.xlu0 %1706
    %v1708 = vsel %vm66, %v1671, 0.0
    %1709 = vadd.xlane.f32.xlu0 %v1708
    %v1710 = vpop.xlane.xlu0 %1709
    %v1711 = vsel %vm66, %v1673, 0.0
    %1712 = vadd.xlane.f32.xlu0 %v1711
    %v1713 = vpop.xlane.xlu0 %1712
    %v1714 = vsel %vm66, %v1675, 0.0
    %1715 = vadd.xlane.f32.xlu0 %v1714
    %v1716 = vpop.xlane.xlu0 %1715
    %v1717 = vsel %vm66, %v1677, 0.0
    %1718 = vadd.xlane.f32.xlu0 %v1717
    %v1719 = vpop.xlane.xlu0 %1718
    %v1720 = vsel %vm66, %v1679, 0.0
    %1721 = vadd.xlane.f32.xlu0 %v1720
    %v1722 = vpop.xlane.xlu0 %1721
    %v1723 = vsel %vm66, %v1681, 0.0
    %1724 = vadd.xlane.f32.xlu0 %v1723
    %v1725 = vpop.xlane.xlu0 %1724
    %v1726 = vsel %vm66, %v1683, 0.0
    %1727 = vadd.xlane.f32.xlu0 %v1726
    %v1728 = vpop.xlane.xlu0 %1727
    %v1729 = vsel %vm66, %v1685, 0.0
    %1730 = vadd.xlane.f32.xlu0 %v1729
    %v1731 = vpop.xlane.xlu0 %1730
    %v1732 = vsel %vm66, %v1687, 0.0
    %1733 = vadd.xlane.f32.xlu0 %v1732
    %v1734 = vpop.xlane.xlu0 %1733
    %v1735 = vsel %vm66, %v1689, 0.0
    %1736 = vadd.xlane.f32.xlu0 %v1735
    %v1737 = vpop.xlane.xlu0 %1736
    %v1738 = vrcp.pop %v1692
    %v1739 = vrcp.pop %v1695
    %v1740 = vrcp.pop %v1698
    %v1741 = vrcp.pop %v1701
    %v1742 = vrcp.pop %v1704
    %v1743 = vrcp.pop %v1707
    %v1744 = vrcp.pop %v1710
    %v1745 = vrcp.pop %v1713
    %v1746 = vrcp.pop %v1716
    %v1747 = vrcp.pop %v1719
    %v1748 = vrcp.pop %v1722
    %v1749 = vrcp.pop %v1725
    %v1750 = vrcp.pop %v1728
    %v1751 = vrcp.pop %v1731
    %v1752 = vrcp.pop %v1734
    %v1753 = vrcp.pop %v1737
    %v1754 = vmul.f32 %v1659, %v1738
    %v1755 = vmul.f32 %v1661, %v1739
    %v1756 = vmul.f32 %v1663, %v1740
    %v1757 = vmul.f32 %v1665, %v1741
    %v1758 = vmul.f32 %v1667, %v1742
    %v1759 = vmul.f32 %v1669, %v1743
    %v1760 = vmul.f32 %v1671, %v1744
    %v1761 = vmul.f32 %v1673, %v1745
    %v1762 = vmul.f32 %v1675, %v1746
    %v1763 = vmul.f32 %v1677, %v1747
    %v1764 = vmul.f32 %v1679, %v1748
    %v1765 = vmul.f32 %v1681, %v1749
    %v1766 = vmul.f32 %v1683, %v1750
    %v1767 = vmul.f32 %v1685, %v1751
    %v1768 = vmul.f32 %v1687, %v1752
    %v1769 = vmul.f32 %v1689, %v1753
    %1770 = vrot.lane.b32.xlu0 %v292, 112
    %v1771 = vpop.permute.xlu0 %1770
    %v1774 = vsel %vm66, %v1754, 0
    %1776 = vmatprep.subr.mxu0 0.0
    %1777 = vmatpush1.msra.mxu0 %v1771
    %1778 = vmatprep.subr.mxu0 0.0
    %1779 = vmatpush1.msra.mxu0 0.0
    %1780 = vmatprep.subr.mxu0 0.0
    %1781 = vmatpush1.msra.mxu0 0.0
    %1782 = vmatprep.subr.mxu0 0.0
    %1783 = vmatpush1.msra.mxu0 0.0
    %1784 = vmatprep.subr.mxu0 0.0
    %1785 = vmatpush1.msra.mxu0 0.0
    %1786 = vmatprep.subr.mxu0 0.0
    %1787 = vmatpush1.msra.mxu0 0.0
    %1788 = vmatprep.subr.mxu0 0.0
    %1789 = vmatpush1.msra.mxu0 0.0
    %1790 = vmatprep.subr.mxu0 0.0
    %1791 = vmatpush1.msra.mxu0 0.0
    %1792 = vmatprep.subr.mxu0 0.0
    %1793 = vmatpush1.msra.mxu0 0.0
    %1794 = vmatprep.subr.mxu0 0.0
    %1795 = vmatpush1.msra.mxu0 0.0
    %1796 = vmatprep.subr.mxu0 0.0
    %1797 = vmatpush1.msra.mxu0 0.0
    %1798 = vmatprep.subr.mxu0 0.0
    %1799 = vmatpush1.msra.mxu0 0.0
    %1800 = vmatprep.subr.mxu0 0.0
    %1801 = vmatpush1.msra.mxu0 0.0
    %1802 = vmatprep.subr.mxu0 0.0
    %1803 = vmatpush1.msra.mxu0 0.0
    %1804 = vmatprep.subr.mxu0 0.0
    %1805 = vmatpush1.msra.mxu0 0.0
    %1806 = vmatprep.subr.mxu0 0.0
    %1807 = vmatpush1.msra.mxu0 0.0
    %1808 = vmatprep.subr.mxu0 0.0
    %1809 = vmatpush1.msra.mxu0 0.0
    %1810 = vmatprep.subr.mxu0 0.0
    %1811 = vmatpush1.msra.mxu0 0.0
    %1812 = vmatprep.subr.mxu0 0.0
    %1813 = vmatpush1.msra.mxu0 0.0
    %1814 = vmatprep.subr.mxu0 0.0
    %1815 = vmatpush1.msra.mxu0 0.0
    %1816 = vmatprep.subr.mxu0 0.0
    %1817 = vmatpush1.msra.mxu0 0.0
    %1818 = vmatprep.subr.mxu0 0.0
    %1819 = vmatpush1.msra.mxu0 0.0
    %1820 = vmatprep.subr.mxu0 0.0
    %1821 = vmatpush1.msra.mxu0 0.0
    %1822 = vmatprep.subr.mxu0 0.0
    %1823 = vmatpush1.msra.mxu0 0.0
    %1824 = vmatprep.subr.mxu0 0.0
    %1825 = vmatpush1.msra.mxu0 0.0
    %1826 = vmatprep.subr.mxu0 0.0
    %1827 = vmatpush1.msra.mxu0 0.0
    %1828 = vmatprep.subr.mxu0 0.0
    %1829 = vmatpush1.msra.mxu0 0.0
    %1830 = vmatprep.subr.mxu0 0.0
    %1831 = vmatpush1.msra.mxu0 0.0
    %1832 = vmatprep.subr.mxu0 0.0
    %1833 = vmatpush1.msra.mxu0 0.0
    %1834 = vmatprep.subr.mxu0 0.0
    %1835 = vmatpush1.msra.mxu0 0.0
    %1836 = vmatprep.subr.mxu0 0.0
    %1837 = vmatpush1.msra.mxu0 0.0
    %1838 = vmatprep.subr.mxu0 0.0
    %1839 = vmatpush1.msra.mxu0 0.0
    %1840 = vmatprep.mubr.f32.mxu0 0.0
    %1841 = vmatmul.mubr.f32.gmra.mrb[0].mxu0 %v1774
    %v1842 = vpop.f32.mrb[0].mxu0
    %v1843 = vadd.f32 0.0, %v1842
    %v1844 = vpop.f32.mrb[0].mxu0
    %1845 = vdwg.mxu0
    %1846 = vrot.lane.b32.xlu0 %v297, 112
    %v1847 = vpop.permute.xlu0 %1846
    %v1850 = vsel %vm66, %v1755, 0
    %1852 = vmatprep.subr.mxu0 0.0
    %1853 = vmatpush1.msra.mxu0 %v1847
    %1854 = vmatprep.subr.mxu0 0.0
    %1855 = vmatpush1.msra.mxu0 0.0
    %1856 = vmatprep.subr.mxu0 0.0
    %1857 = vmatpush1.msra.mxu0 0.0
    %1858 = vmatprep.subr.mxu0 0.0
    %1859 = vmatpush1.msra.mxu0 0.0
    %1860 = vmatprep.subr.mxu0 0.0
    %1861 = vmatpush1.msra.mxu0 0.0
    %1862 = vmatprep.subr.mxu0 0.0
    %1863 = vmatpush1.msra.mxu0 0.0
    %1864 = vmatprep.subr.mxu0 0.0
    %1865 = vmatpush1.msra.mxu0 0.0
    %1866 = vmatprep.subr.mxu0 0.0
    %1867 = vmatpush1.msra.mxu0 0.0
    %1868 = vmatprep.subr.mxu0 0.0
    %1869 = vmatpush1.msra.mxu0 0.0
    %1870 = vmatprep.subr.mxu0 0.0
    %1871 = vmatpush1.msra.mxu0 0.0
    %1872 = vmatprep.subr.mxu0 0.0
    %1873 = vmatpush1.msra.mxu0 0.0
    %1874 = vmatprep.subr.mxu0 0.0
    %1875 = vmatpush1.msra.mxu0 0.0
    %1876 = vmatprep.subr.mxu0 0.0
    %1877 = vmatpush1.msra.mxu0 0.0
    %1878 = vmatprep.subr.mxu0 0.0
    %1879 = vmatpush1.msra.mxu0 0.0
    %1880 = vmatprep.subr.mxu0 0.0
    %1881 = vmatpush1.msra.mxu0 0.0
    %1882 = vmatprep.subr.mxu0 0.0
    %1883 = vmatpush1.msra.mxu0 0.0
    %1884 = vmatprep.subr.mxu0 0.0
    %1885 = vmatpush1.msra.mxu0 0.0
    %1886 = vmatprep.subr.mxu0 0.0
    %1887 = vmatpush1.msra.mxu0 0.0
    %1888 = vmatprep.subr.mxu0 0.0
    %1889 = vmatpush1.msra.mxu0 0.0
    %1890 = vmatprep.subr.mxu0 0.0
    %1891 = vmatpush1.msra.mxu0 0.0
    %1892 = vmatprep.subr.mxu0 0.0
    %1893 = vmatpush1.msra.mxu0 0.0
    %1894 = vmatprep.subr.mxu0 0.0
    %1895 = vmatpush1.msra.mxu0 0.0
    %1896 = vmatprep.subr.mxu0 0.0
    %1897 = vmatpush1.msra.mxu0 0.0
    %1898 = vmatprep.subr.mxu0 0.0
    %1899 = vmatpush1.msra.mxu0 0.0
    %1900 = vmatprep.subr.mxu0 0.0
    %1901 = vmatpush1.msra.mxu0 0.0
    %1902 = vmatprep.subr.mxu0 0.0
    %1903 = vmatpush1.msra.mxu0 0.0
    %1904 = vmatprep.subr.mxu0 0.0
    %1905 = vmatpush1.msra.mxu0 0.0
    %1906 = vmatprep.subr.mxu0 0.0
    %1907 = vmatpush1.msra.mxu0 0.0
    %1908 = vmatprep.subr.mxu0 0.0
    %1909 = vmatpush1.msra.mxu0 0.0
    %1910 = vmatprep.subr.mxu0 0.0
    %1911 = vmatpush1.msra.mxu0 0.0
    %1912 = vmatprep.subr.mxu0 0.0
    %1913 = vmatpush1.msra.mxu0 0.0
    %1914 = vmatprep.subr.mxu0 0.0
    %1915 = vmatpush1.msra.mxu0 0.0
    %1916 = vmatprep.mubr.f32.mxu0 0.0
    %1917 = vmatmul.mubr.f32.gmra.mrb[0].mxu0 %v1850
    %v1918 = vpop.f32.mrb[0].mxu0
    %v1919 = vadd.f32 0.0, %v1918
    %v1920 = vpop.f32.mrb[0].mxu0
    %1921 = vdwg.mxu0
    %1922 = vrot.lane.b32.xlu0 %v302, 112
    %v1923 = vpop.permute.xlu0 %1922
    %v1926 = vsel %vm66, %v1756, 0
    %1928 = vmatprep.subr.mxu0 0.0
    %1929 = vmatpush1.msra.mxu0 %v1923
    %1930 = vmatprep.subr.mxu0 0.0
    %1931 = vmatpush1.msra.mxu0 0.0
    %1932 = vmatprep.subr.mxu0 0.0
    %1933 = vmatpush1.msra.mxu0 0.0
    %1934 = vmatprep.subr.mxu0 0.0
    %1935 = vmatpush1.msra.mxu0 0.0
    %1936 = vmatprep.subr.mxu0 0.0
    %1937 = vmatpush1.msra.mxu0 0.0
    %1938 = vmatprep.subr.mxu0 0.0
    %1939 = vmatpush1.msra.mxu0 0.0
    %1940 = vmatprep.subr.mxu0 0.0
    %1941 = vmatpush1.msra.mxu0 0.0
    %1942 = vmatprep.subr.mxu0 0.0
    %1943 = vmatpush1.msra.mxu0 0.0
    %1944 = vmatprep.subr.mxu0 0.0
    %1945 = vmatpush1.msra.mxu0 0.0
    %1946 = vmatprep.subr.mxu0 0.0
    %1947 = vmatpush1.msra.mxu0 0.0
    %1948 = vmatprep.subr.mxu0 0.0
    %1949 = vmatpush1.msra.mxu0 0.0
    %1950 = vmatprep.subr.mxu0 0.0
    %1951 = vmatpush1.msra.mxu0 0.0
    %1952 = vmatprep.subr.mxu0 0.0
    %1953 = vmatpush1.msra.mxu0 0.0
    %1954 = vmatprep.subr.mxu0 0.0
    %1955 = vmatpush1.msra.mxu0 0.0
    %1956 = vmatprep.subr.mxu0 0.0
    %1957 = vmatpush1.msra.mxu0 0.0
    %1958 = vmatprep.subr.mxu0 0.0
    %1959 = vmatpush1.msra.mxu0 0.0
    %1960 = vmatprep.subr.mxu0 0.0
    %1961 = vmatpush1.msra.mxu0 0.0
    %1962 = vmatprep.subr.mxu0 0.0
    %1963 = vmatpush1.msra.mxu0 0.0
    %1964 = vmatprep.subr.mxu0 0.0
    %1965 = vmatpush1.msra.mxu0 0.0
    %1966 = vmatprep.subr.mxu0 0.0
    %1967 = vmatpush1.msra.mxu0 0.0
    %1968 = vmatprep.subr.mxu0 0.0
    %1969 = vmatpush1.msra.mxu0 0.0
    %1970 = vmatprep.subr.mxu0 0.0
    %1971 = vmatpush1.msra.mxu0 0.0
    %1972 = vmatprep.subr.mxu0 0.0
    %1973 = vmatpush1.msra.mxu0 0.0
    %1974 = vmatprep.subr.mxu0 0.0
    %1975 = vmatpush1.msra.mxu0 0.0
    %1976 = vmatprep.subr.mxu0 0.0
    %1977 = vmatpush1.msra.mxu0 0.0
    %1978 = vmatprep.subr.mxu0 0.0
    %1979 = vmatpush1.msra.mxu0 0.0
    %1980 = vmatprep.subr.mxu0 0.0
    %1981 = vmatpush1.msra.mxu0 0.0
    %1982 = vmatprep.subr.mxu0 0.0
    %1983 = vmatpush1.msra.mxu0 0.0
    %1984 = vmatprep.subr.mxu0 0.0
    %1985 = vmatpush1.msra.mxu0 0.0
    %1986 = vmatprep.subr.mxu0 0.0
    %1987 = vmatpush1.msra.mxu0 0.0
    %1988 = vmatprep.subr.mxu0 0.0
    %1989 = vmatpush1.msra.mxu0 0.0
    %1990 = vmatprep.subr.mxu0 0.0
    %1991 = vmatpush1.msra.mxu0 0.0
    %1992 = vmatprep.mubr.f32.mxu0 0.0
    %1993 = vmatmul.mubr.f32.gmra.mrb[0].mxu0 %v1926
    %v1994 = vpop.f32.mrb[0].mxu0
    %v1995 = vadd.f32 0.0, %v1994
    %v1996 = vpop.f32.mrb[0].mxu0
    %1997 = vdwg.mxu0
    %1998 = vrot.lane.b32.xlu0 %v307, 112
    %v1999 = vpop.permute.xlu0 %1998
    %v2002 = vsel %vm66, %v1757, 0
    %2004 = vmatprep.subr.mxu0 0.0
    %2005 = vmatpush1.msra.mxu0 %v1999
    %2006 = vmatprep.subr.mxu0 0.0
    %2007 = vmatpush1.msra.mxu0 0.0
    %2008 = vmatprep.subr.mxu0 0.0
    %2009 = vmatpush1.msra.mxu0 0.0
    %2010 = vmatprep.subr.mxu0 0.0
    %2011 = vmatpush1.msra.mxu0 0.0
    %2012 = vmatprep.subr.mxu0 0.0
    %2013 = vmatpush1.msra.mxu0 0.0
    %2014 = vmatprep.subr.mxu0 0.0
    %2015 = vmatpush1.msra.mxu0 0.0
    %2016 = vmatprep.subr.mxu0 0.0
    %2017 = vmatpush1.msra.mxu0 0.0
    %2018 = vmatprep.subr.mxu0 0.0
    %2019 = vmatpush1.msra.mxu0 0.0
    %2020 = vmatprep.subr.mxu0 0.0
    %2021 = vmatpush1.msra.mxu0 0.0
    %2022 = vmatprep.subr.mxu0 0.0
    %2023 = vmatpush1.msra.mxu0 0.0
    %2024 = vmatprep.subr.mxu0 0.0
    %2025 = vmatpush1.msra.mxu0 0.0
    %2026 = vmatprep.subr.mxu0 0.0
    %2027 = vmatpush1.msra.mxu0 0.0
    %2028 = vmatprep.subr.mxu0 0.0
    %2029 = vmatpush1.msra.mxu0 0.0
    %2030 = vmatprep.subr.mxu0 0.0
    %2031 = vmatpush1.msra.mxu0 0.0
    %2032 = vmatprep.subr.mxu0 0.0
    %2033 = vmatpush1.msra.mxu0 0.0
    %2034 = vmatprep.subr.mxu0 0.0
    %2035 = vmatpush1.msra.mxu0 0.0
    %2036 = vmatprep.subr.mxu0 0.0
    %2037 = vmatpush1.msra.mxu0 0.0
    %2038 = vmatprep.subr.mxu0 0.0
    %2039 = vmatpush1.msra.mxu0 0.0
    %2040 = vmatprep.subr.mxu0 0.0
    %2041 = vmatpush1.msra.mxu0 0.0
    %2042 = vmatprep.subr.mxu0 0.0
    %2043 = vmatpush1.msra.mxu0 0.0
    %2044 = vmatprep.subr.mxu0 0.0
    %2045 = vmatpush1.msra.mxu0 0.0
    %2046 = vmatprep.subr.mxu0 0.0
    %2047 = vmatpush1.msra.mxu0 0.0
    %2048 = vmatprep.subr.mxu0 0.0
    %2049 = vmatpush1.msra.mxu0 0.0
    %2050 = vmatprep.subr.mxu0 0.0
    %2051 = vmatpush1.msra.mxu0 0.0
    %2052 = vmatprep.subr.mxu0 0.0
    %2053 = vmatpush1.msra.mxu0 0.0
    %2054 = vmatprep.subr.mxu0 0.0
    %2055 = vmatpush1.msra.mxu0 0.0
    %2056 = vmatprep.subr.mxu0 0.0
    %2057 = vmatpush1.msra.mxu0 0.0
    %2058 = vmatprep.subr.mxu0 0.0
    %2059 = vmatpush1.msra.mxu0 0.0
    %2060 = vmatprep.subr.mxu0 0.0
    %2061 = vmatpush1.msra.mxu0 0.0
    %2062 = vmatprep.subr.mxu0 0.0
    %2063 = vmatpush1.msra.mxu0 0.0
    %2064 = vmatprep.subr.mxu0 0.0
    %2065 = vmatpush1.msra.mxu0 0.0
    %2066 = vmatprep.subr.mxu0 0.0
    %2067 = vmatpush1.msra.mxu0 0.0
    %2068 = vmatprep.mubr.f32.mxu0 0.0
    %2069 = vmatmul.mubr.f32.gmra.mrb[0].mxu0 %v2002
    %v2070 = vpop.f32.mrb[0].mxu0
    %v2071 = vadd.f32 0.0, %v2070
    %v2072 = vpop.f32.mrb[0].mxu0
    %2073 = vdwg.mxu0
    %2074 = vrot.lane.b32.xlu0 %v312, 112
    %v2075 = vpop.permute.xlu0 %2074
    %v2078 = vsel %vm66, %v1758, 0
    %2080 = vmatprep.subr.mxu0 0.0
    %2081 = vmatpush1.msra.mxu0 %v2075
    %2082 = vmatprep.subr.mxu0 0.0
    %2083 = vmatpush1.msra.mxu0 0.0
    %2084 = vmatprep.subr.mxu0 0.0
    %2085 = vmatpush1.msra.mxu0 0.0
    %2086 = vmatprep.subr.mxu0 0.0
    %2087 = vmatpush1.msra.mxu0 0.0
    %2088 = vmatprep.subr.mxu0 0.0
    %2089 = vmatpush1.msra.mxu0 0.0
    %2090 = vmatprep.subr.mxu0 0.0
    %2091 = vmatpush1.msra.mxu0 0.0
    %2092 = vmatprep.subr.mxu0 0.0
    %2093 = vmatpush1.msra.mxu0 0.0
    %2094 = vmatprep.subr.mxu0 0.0
    %2095 = vmatpush1.msra.mxu0 0.0
    %2096 = vmatprep.subr.mxu0 0.0
    %2097 = vmatpush1.msra.mxu0 0.0
    %2098 = vmatprep.subr.mxu0 0.0
    %2099 = vmatpush1.msra.mxu0 0.0
    %2100 = vmatprep.subr.mxu0 0.0
    %2101 = vmatpush1.msra.mxu0 0.0
    %2102 = vmatprep.subr.mxu0 0.0
    %2103 = vmatpush1.msra.mxu0 0.0
    %2104 = vmatprep.subr.mxu0 0.0
    %2105 = vmatpush1.msra.mxu0 0.0
    %2106 = vmatprep.subr.mxu0 0.0
    %2107 = vmatpush1.msra.mxu0 0.0
    %2108 = vmatprep.subr.mxu0 0.0
    %2109 = vmatpush1.msra.mxu0 0.0
    %2110 = vmatprep.subr.mxu0 0.0
    %2111 = vmatpush1.msra.mxu0 0.0
    %2112 = vmatprep.subr.mxu0 0.0
    %2113 = vmatpush1.msra.mxu0 0.0
    %2114 = vmatprep.subr.mxu0 0.0
    %2115 = vmatpush1.msra.mxu0 0.0
    %2116 = vmatprep.subr.mxu0 0.0
    %2117 = vmatpush1.msra.mxu0 0.0
    %2118 = vmatprep.subr.mxu0 0.0
    %2119 = vmatpush1.msra.mxu0 0.0
    %2120 = vmatprep.subr.mxu0 0.0
    %2121 = vmatpush1.msra.mxu0 0.0
    %2122 = vmatprep.subr.mxu0 0.0
    %2123 = vmatpush1.msra.mxu0 0.0
    %2124 = vmatprep.subr.mxu0 0.0
    %2125 = vmatpush1.msra.mxu0 0.0
    %2126 = vmatprep.subr.mxu0 0.0
    %2127 = vmatpush1.msra.mxu0 0.0
    %2128 = vmatprep.subr.mxu0 0.0
    %2129 = vmatpush1.msra.mxu0 0.0
    %2130 = vmatprep.subr.mxu0 0.0
    %2131 = vmatpush1.msra.mxu0 0.0
    %2132 = vmatprep.subr.mxu0 0.0
    %2133 = vmatpush1.msra.mxu0 0.0
    %2134 = vmatprep.subr.mxu0 0.0
    %2135 = vmatpush1.msra.mxu0 0.0
    %2136 = vmatprep.subr.mxu0 0.0
    %2137 = vmatpush1.msra.mxu0 0.0
    %2138 = vmatprep.subr.mxu0 0.0
    %2139 = vmatpush1.msra.mxu0 0.0
    %2140 = vmatprep.subr.mxu0 0.0
    %2141 = vmatpush1.msra.mxu0 0.0
    %2142 = vmatprep.subr.mxu0 0.0
    %2143 = vmatpush1.msra.mxu0 0.0
    %2144 = vmatprep.mubr.f32.mxu0 0.0
    %2145 = vmatmul.mubr.f32.gmra.mrb[0].mxu0 %v2078
    %v2146 = vpop.f32.mrb[0].mxu0
    %v2147 = vadd.f32 0.0, %v2146
    %v2148 = vpop.f32.mrb[0].mxu0
    %2149 = vdwg.mxu0
    %2150 = vrot.lane.b32.xlu0 %v317, 112
    %v2151 = vpop.permute.xlu0 %2150
    %v2154 = vsel %vm66, %v1759, 0
    %2156 = vmatprep.subr.mxu0 0.0
    %2157 = vmatpush1.msra.mxu0 %v2151
    %2158 = vmatprep.subr.mxu0 0.0
    %2159 = vmatpush1.msra.mxu0 0.0
    %2160 = vmatprep.subr.mxu0 0.0
    %2161 = vmatpush1.msra.mxu0 0.0
    %2162 = vmatprep.subr.mxu0 0.0
    %2163 = vmatpush1.msra.mxu0 0.0
    %2164 = vmatprep.subr.mxu0 0.0
    %2165 = vmatpush1.msra.mxu0 0.0
    %2166 = vmatprep.subr.mxu0 0.0
    %2167 = vmatpush1.msra.mxu0 0.0
    %2168 = vmatprep.subr.mxu0 0.0
    %2169 = vmatpush1.msra.mxu0 0.0
    %2170 = vmatprep.subr.mxu0 0.0
    %2171 = vmatpush1.msra.mxu0 0.0
    %2172 = vmatprep.subr.mxu0 0.0
    %2173 = vmatpush1.msra.mxu0 0.0
    %2174 = vmatprep.subr.mxu0 0.0
    %2175 = vmatpush1.msra.mxu0 0.0
    %2176 = vmatprep.subr.mxu0 0.0
    %2177 = vmatpush1.msra.mxu0 0.0
    %2178 = vmatprep.subr.mxu0 0.0
    %2179 = vmatpush1.msra.mxu0 0.0
    %2180 = vmatprep.subr.mxu0 0.0
    %2181 = vmatpush1.msra.mxu0 0.0
    %2182 = vmatprep.subr.mxu0 0.0
    %2183 = vmatpush1.msra.mxu0 0.0
    %2184 = vmatprep.subr.mxu0 0.0
    %2185 = vmatpush1.msra.mxu0 0.0
    %2186 = vmatprep.subr.mxu0 0.0
    %2187 = vmatpush1.msra.mxu0 0.0
    %2188 = vmatprep.subr.mxu0 0.0
    %2189 = vmatpush1.msra.mxu0 0.0
    %2190 = vmatprep.subr.mxu0 0.0
    %2191 = vmatpush1.msra.mxu0 0.0
    %2192 = vmatprep.subr.mxu0 0.0
    %2193 = vmatpush1.msra.mxu0 0.0
    %2194 = vmatprep.subr.mxu0 0.0
    %2195 = vmatpush1.msra.mxu0 0.0
    %2196 = vmatprep.subr.mxu0 0.0
    %2197 = vmatpush1.msra.mxu0 0.0
    %2198 = vmatprep.subr.mxu0 0.0
    %2199 = vmatpush1.msra.mxu0 0.0
    %2200 = vmatprep.subr.mxu0 0.0
    %2201 = vmatpush1.msra.mxu0 0.0
    %2202 = vmatprep.subr.mxu0 0.0
    %2203 = vmatpush1.msra.mxu0 0.0
    %2204 = vmatprep.subr.mxu0 0.0
    %2205 = vmatpush1.msra.mxu0 0.0
    %2206 = vmatprep.subr.mxu0 0.0
    %2207 = vmatpush1.msra.mxu0 0.0
    %2208 = vmatprep.subr.mxu0 0.0
    %2209 = vmatpush1.msra.mxu0 0.0
    %2210 = vmatprep.subr.mxu0 0.0
    %2211 = vmatpush1.msra.mxu0 0.0
    %2212 = vmatprep.subr.mxu0 0.0
    %2213 = vmatpush1.msra.mxu0 0.0
    %2214 = vmatprep.subr.mxu0 0.0
    %2215 = vmatpush1.msra.mxu0 0.0
    %2216 = vmatprep.subr.mxu0 0.0
    %2217 = vmatpush1.msra.mxu0 0.0
    %2218 = vmatprep.subr.mxu0 0.0
    %2219 = vmatpush1.msra.mxu0 0.0
    %2220 = vmatprep.mubr.f32.mxu0 0.0
    %2221 = vmatmul.mubr.f32.gmra.mrb[0].mxu0 %v2154
    %v2222 = vpop.f32.mrb[0].mxu0
    %v2223 = vadd.f32 0.0, %v2222
    %v2224 = vpop.f32.mrb[0].mxu0
    %2225 = vdwg.mxu0
    %2226 = vrot.lane.b32.xlu0 %v322, 112
    %v2227 = vpop.permute.xlu0 %2226
    %v2230 = vsel %vm66, %v1760, 0
    %2232 = vmatprep.subr.mxu0 0.0
    %2233 = vmatpush1.msra.mxu0 %v2227
    %2234 = vmatprep.subr.mxu0 0.0
    %2235 = vmatpush1.msra.mxu0 0.0
    %2236 = vmatprep.subr.mxu0 0.0
    %2237 = vmatpush1.msra.mxu0 0.0
    %2238 = vmatprep.subr.mxu0 0.0
    %2239 = vmatpush1.msra.mxu0 0.0
    %2240 = vmatprep.subr.mxu0 0.0
    %2241 = vmatpush1.msra.mxu0 0.0
    %2242 = vmatprep.subr.mxu0 0.0
    %2243 = vmatpush1.msra.mxu0 0.0
    %2244 = vmatprep.subr.mxu0 0.0
    %2245 = vmatpush1.msra.mxu0 0.0
    %2246 = vmatprep.subr.mxu0 0.0
    %2247 = vmatpush1.msra.mxu0 0.0
    %2248 = vmatprep.subr.mxu0 0.0
    %2249 = vmatpush1.msra.mxu0 0.0
    %2250 = vmatprep.subr.mxu0 0.0
    %2251 = vmatpush1.msra.mxu0 0.0
    %2252 = vmatprep.subr.mxu0 0.0
    %2253 = vmatpush1.msra.mxu0 0.0
    %2254 = vmatprep.subr.mxu0 0.0
    %2255 = vmatpush1.msra.mxu0 0.0
    %2256 = vmatprep.subr.mxu0 0.0
    %2257 = vmatpush1.msra.mxu0 0.0
    %2258 = vmatprep.subr.mxu0 0.0
    %2259 = vmatpush1.msra.mxu0 0.0
    %2260 = vmatprep.subr.mxu0 0.0
    %2261 = vmatpush1.msra.mxu0 0.0
    %2262 = vmatprep.subr.mxu0 0.0
    %2263 = vmatpush1.msra.mxu0 0.0
    %2264 = vmatprep.subr.mxu0 0.0
    %2265 = vmatpush1.msra.mxu0 0.0
    %2266 = vmatprep.subr.mxu0 0.0
    %2267 = vmatpush1.msra.mxu0 0.0
    %2268 = vmatprep.subr.mxu0 0.0
    %2269 = vmatpush1.msra.mxu0 0.0
    %2270 = vmatprep.subr.mxu0 0.0
    %2271 = vmatpush1.msra.mxu0 0.0
    %2272 = vmatprep.subr.mxu0 0.0
    %2273 = vmatpush1.msra.mxu0 0.0
    %2274 = vmatprep.subr.mxu0 0.0
    %2275 = vmatpush1.msra.mxu0 0.0
    %2276 = vmatprep.subr.mxu0 0.0
    %2277 = vmatpush1.msra.mxu0 0.0
    %2278 = vmatprep.subr.mxu0 0.0
    %2279 = vmatpush1.msra.mxu0 0.0
    %2280 = vmatprep.subr.mxu0 0.0
    %2281 = vmatpush1.msra.mxu0 0.0
    %2282 = vmatprep.subr.mxu0 0.0
    %2283 = vmatpush1.msra.mxu0 0.0
    %2284 = vmatprep.subr.mxu0 0.0
    %2285 = vmatpush1.msra.mxu0 0.0
    %2286 = vmatprep.subr.mxu0 0.0
    %2287 = vmatpush1.msra.mxu0 0.0
    %2288 = vmatprep.subr.mxu0 0.0
    %2289 = vmatpush1.msra.mxu0 0.0
    %2290 = vmatprep.subr.mxu0 0.0
    %2291 = vmatpush1.msra.mxu0 0.0
    %2292 = vmatprep.subr.mxu0 0.0
    %2293 = vmatpush1.msra.mxu0 0.0
    %2294 = vmatprep.subr.mxu0 0.0
    %2295 = vmatpush1.msra.mxu0 0.0
    %2296 = vmatprep.mubr.f32.mxu0 0.0
    %2297 = vmatmul.mubr.f32.gmra.mrb[0].mxu0 %v2230
    %v2298 = vpop.f32.mrb[0].mxu0
    %v2299 = vadd.f32 0.0, %v2298
    %v2300 = vpop.f32.mrb[0].mxu0
    %2301 = vdwg.mxu0
    %2302 = vrot.lane.b32.xlu0 %v327, 112
    %v2303 = vpop.permute.xlu0 %2302
    %v2306 = vsel %vm66, %v1761, 0
    %2308 = vmatprep.subr.mxu0 0.0
    %2309 = vmatpush1.msra.mxu0 %v2303
    %2310 = vmatprep.subr.mxu0 0.0
    %2311 = vmatpush1.msra.mxu0 0.0
    %2312 = vmatprep.subr.mxu0 0.0
    %2313 = vmatpush1.msra.mxu0 0.0
    %2314 = vmatprep.subr.mxu0 0.0
    %2315 = vmatpush1.msra.mxu0 0.0
    %2316 = vmatprep.subr.mxu0 0.0
    %2317 = vmatpush1.msra.mxu0 0.0
    %2318 = vmatprep.subr.mxu0 0.0
    %2319 = vmatpush1.msra.mxu0 0.0
    %2320 = vmatprep.subr.mxu0 0.0
    %2321 = vmatpush1.msra.mxu0 0.0
    %2322 = vmatprep.subr.mxu0 0.0
    %2323 = vmatpush1.msra.mxu0 0.0
    %2324 = vmatprep.subr.mxu0 0.0
    %2325 = vmatpush1.msra.mxu0 0.0
    %2326 = vmatprep.subr.mxu0 0.0
    %2327 = vmatpush1.msra.mxu0 0.0
    %2328 = vmatprep.subr.mxu0 0.0
    %2329 = vmatpush1.msra.mxu0 0.0
    %2330 = vmatprep.subr.mxu0 0.0
    %2331 = vmatpush1.msra.mxu0 0.0
    %2332 = vmatprep.subr.mxu0 0.0
    %2333 = vmatpush1.msra.mxu0 0.0
    %2334 = vmatprep.subr.mxu0 0.0
    %2335 = vmatpush1.msra.mxu0 0.0
    %2336 = vmatprep.subr.mxu0 0.0
    %2337 = vmatpush1.msra.mxu0 0.0
    %2338 = vmatprep.subr.mxu0 0.0
    %2339 = vmatpush1.msra.mxu0 0.0
    %2340 = vmatprep.subr.mxu0 0.0
    %2341 = vmatpush1.msra.mxu0 0.0
    %2342 = vmatprep.subr.mxu0 0.0
    %2343 = vmatpush1.msra.mxu0 0.0
    %2344 = vmatprep.subr.mxu0 0.0
    %2345 = vmatpush1.msra.mxu0 0.0
    %2346 = vmatprep.subr.mxu0 0.0
    %2347 = vmatpush1.msra.mxu0 0.0
    %2348 = vmatprep.subr.mxu0 0.0
    %2349 = vmatpush1.msra.mxu0 0.0
    %2350 = vmatprep.subr.mxu0 0.0
    %2351 = vmatpush1.msra.mxu0 0.0
    %2352 = vmatprep.subr.mxu0 0.0
    %2353 = vmatpush1.msra.mxu0 0.0
    %2354 = vmatprep.subr.mxu0 0.0
    %2355 = vmatpush1.msra.mxu0 0.0
    %2356 = vmatprep.subr.mxu0 0.0
    %2357 = vmatpush1.msra.mxu0 0.0
    %2358 = vmatprep.subr.mxu0 0.0
    %2359 = vmatpush1.msra.mxu0 0.0
    %2360 = vmatprep.subr.mxu0 0.0
    %2361 = vmatpush1.msra.mxu0 0.0
    %2362 = vmatprep.subr.mxu0 0.0
    %2363 = vmatpush1.msra.mxu0 0.0
    %2364 = vmatprep.subr.mxu0 0.0
    %2365 = vmatpush1.msra.mxu0 0.0
    %2366 = vmatprep.subr.mxu0 0.0
    %2367 = vmatpush1.msra.mxu0 0.0
    %2368 = vmatprep.subr.mxu0 0.0
    %2369 = vmatpush1.msra.mxu0 0.0
    %2370 = vmatprep.subr.mxu0 0.0
    %2371 = vmatpush1.msra.mxu0 0.0
    %2372 = vmatprep.mubr.f32.mxu0 0.0
    %2373 = vmatmul.mubr.f32.gmra.mrb[0].mxu0 %v2306
    %v2374 = vpop.f32.mrb[0].mxu0
    %v2375 = vadd.f32 0.0, %v2374
    %v2376 = vpop.f32.mrb[0].mxu0
    %2377 = vdwg.mxu0
    %2378 = vrot.lane.b32.xlu0 %v339, 112
    %v2379 = vpop.permute.xlu0 %2378
    %v2382 = vsel %vm66, %v1762, 0
    %2384 = vmatprep.subr.mxu0 0.0
    %2385 = vmatpush1.msra.mxu0 %v2379
    %2386 = vmatprep.subr.mxu0 0.0
    %2387 = vmatpush1.msra.mxu0 0.0
    %2388 = vmatprep.subr.mxu0 0.0
    %2389 = vmatpush1.msra.mxu0 0.0
    %2390 = vmatprep.subr.mxu0 0.0
    %2391 = vmatpush1.msra.mxu0 0.0
    %2392 = vmatprep.subr.mxu0 0.0
    %2393 = vmatpush1.msra.mxu0 0.0
    %2394 = vmatprep.subr.mxu0 0.0
    %2395 = vmatpush1.msra.mxu0 0.0
    %2396 = vmatprep.subr.mxu0 0.0
    %2397 = vmatpush1.msra.mxu0 0.0
    %2398 = vmatprep.subr.mxu0 0.0
    %2399 = vmatpush1.msra.mxu0 0.0
    %2400 = vmatprep.subr.mxu0 0.0
    %2401 = vmatpush1.msra.mxu0 0.0
    %2402 = vmatprep.subr.mxu0 0.0
    %2403 = vmatpush1.msra.mxu0 0.0
    %2404 = vmatprep.subr.mxu0 0.0
    %2405 = vmatpush1.msra.mxu0 0.0
    %2406 = vmatprep.subr.mxu0 0.0
    %2407 = vmatpush1.msra.mxu0 0.0
    %2408 = vmatprep.subr.mxu0 0.0
    %2409 = vmatpush1.msra.mxu0 0.0
    %2410 = vmatprep.subr.mxu0 0.0
    %2411 = vmatpush1.msra.mxu0 0.0
    %2412 = vmatprep.subr.mxu0 0.0
    %2413 = vmatpush1.msra.mxu0 0.0
    %2414 = vmatprep.subr.mxu0 0.0
    %2415 = vmatpush1.msra.mxu0 0.0
    %2416 = vmatprep.subr.mxu0 0.0
    %2417 = vmatpush1.msra.mxu0 0.0
    %2418 = vmatprep.subr.mxu0 0.0
    %2419 = vmatpush1.msra.mxu0 0.0
    %2420 = vmatprep.subr.mxu0 0.0
    %2421 = vmatpush1.msra.mxu0 0.0
    %2422 = vmatprep.subr.mxu0 0.0
    %2423 = vmatpush1.msra.mxu0 0.0
    %2424 = vmatprep.subr.mxu0 0.0
    %2425 = vmatpush1.msra.mxu0 0.0
    %2426 = vmatprep.subr.mxu0 0.0
    %2427 = vmatpush1.msra.mxu0 0.0
    %2428 = vmatprep.subr.mxu0 0.0
    %2429 = vmatpush1.msra.mxu0 0.0
    %2430 = vmatprep.subr.mxu0 0.0
    %2431 = vmatpush1.msra.mxu0 0.0
    %2432 = vmatprep.subr.mxu0 0.0
    %2433 = vmatpush1.msra.mxu0 0.0
    %2434 = vmatprep.subr.mxu0 0.0
    %2435 = vmatpush1.msra.mxu0 0.0
    %2436 = vmatprep.subr.mxu0 0.0
    %2437 = vmatpush1.msra.mxu0 0.0
    %2438 = vmatprep.subr.mxu0 0.0
    %2439 = vmatpush1.msra.mxu0 0.0
    %2440 = vmatprep.subr.mxu0 0.0
    %2441 = vmatpush1.msra.mxu0 0.0
    %2442 = vmatprep.subr.mxu0 0.0
    %2443 = vmatpush1.msra.mxu0 0.0
    %2444 = vmatprep.subr.mxu0 0.0
    %2445 = vmatpush1.msra.mxu0 0.0
    %2446 = vmatprep.subr.mxu0 0.0
    %2447 = vmatpush1.msra.mxu0 0.0
    %2448 = vmatprep.mubr.f32.mxu0 0.0
    %2449 = vmatmul.mubr.f32.gmra.mrb[0].mxu0 %v2382
    %v2450 = vpop.f32.mrb[0].mxu0
    %v2451 = vadd.f32 0.0, %v2450
    %v2452 = vpop.f32.mrb[0].mxu0
    %2453 = vdwg.mxu0
    %2454 = vrot.lane.b32.xlu0 %v341, 112
    %v2455 = vpop.permute.xlu0 %2454
    %v2458 = vsel %vm66, %v1763, 0
    %2460 = vmatprep.subr.mxu0 0.0
    %2461 = vmatpush1.msra.mxu0 %v2455
    %2462 = vmatprep.subr.mxu0 0.0
    %2463 = vmatpush1.msra.mxu0 0.0
    %2464 = vmatprep.subr.mxu0 0.0
    %2465 = vmatpush1.msra.mxu0 0.0
    %2466 = vmatprep.subr.mxu0 0.0
    %2467 = vmatpush1.msra.mxu0 0.0
    %2468 = vmatprep.subr.mxu0 0.0
    %2469 = vmatpush1.msra.mxu0 0.0
    %2470 = vmatprep.subr.mxu0 0.0
    %2471 = vmatpush1.msra.mxu0 0.0
    %2472 = vmatprep.subr.mxu0 0.0
    %2473 = vmatpush1.msra.mxu0 0.0
    %2474 = vmatprep.subr.mxu0 0.0
    %2475 = vmatpush1.msra.mxu0 0.0
    %2476 = vmatprep.subr.mxu0 0.0
    %2477 = vmatpush1.msra.mxu0 0.0
    %2478 = vmatprep.subr.mxu0 0.0
    %2479 = vmatpush1.msra.mxu0 0.0
    %2480 = vmatprep.subr.mxu0 0.0
    %2481 = vmatpush1.msra.mxu0 0.0
    %2482 = vmatprep.subr.mxu0 0.0
    %2483 = vmatpush1.msra.mxu0 0.0
    %2484 = vmatprep.subr.mxu0 0.0
    %2485 = vmatpush1.msra.mxu0 0.0
    %2486 = vmatprep.subr.mxu0 0.0
    %2487 = vmatpush1.msra.mxu0 0.0
    %2488 = vmatprep.subr.mxu0 0.0
    %2489 = vmatpush1.msra.mxu0 0.0
    %2490 = vmatprep.subr.mxu0 0.0
    %2491 = vmatpush1.msra.mxu0 0.0
    %2492 = vmatprep.subr.mxu0 0.0
    %2493 = vmatpush1.msra.mxu0 0.0
    %2494 = vmatprep.subr.mxu0 0.0
    %2495 = vmatpush1.msra.mxu0 0.0
    %2496 = vmatprep.subr.mxu0 0.0
    %2497 = vmatpush1.msra.mxu0 0.0
    %2498 = vmatprep.subr.mxu0 0.0
    %2499 = vmatpush1.msra.mxu0 0.0
    %2500 = vmatprep.subr.mxu0 0.0
    %2501 = vmatpush1.msra.mxu0 0.0
    %2502 = vmatprep.subr.mxu0 0.0
    %2503 = vmatpush1.msra.mxu0 0.0
    %2504 = vmatprep.subr.mxu0 0.0
    %2505 = vmatpush1.msra.mxu0 0.0
    %2506 = vmatprep.subr.mxu0 0.0
    %2507 = vmatpush1.msra.mxu0 0.0
    %2508 = vmatprep.subr.mxu0 0.0
    %2509 = vmatpush1.msra.mxu0 0.0
    %2510 = vmatprep.subr.mxu0 0.0
    %2511 = vmatpush1.msra.mxu0 0.0
    %2512 = vmatprep.subr.mxu0 0.0
    %2513 = vmatpush1.msra.mxu0 0.0
    %2514 = vmatprep.subr.mxu0 0.0
    %2515 = vmatpush1.msra.mxu0 0.0
    %2516 = vmatprep.subr.mxu0 0.0
    %2517 = vmatpush1.msra.mxu0 0.0
    %2518 = vmatprep.subr.mxu0 0.0
    %2519 = vmatpush1.msra.mxu0 0.0
    %2520 = vmatprep.subr.mxu0 0.0
    %2521 = vmatpush1.msra.mxu0 0.0
    %2522 = vmatprep.subr.mxu0 0.0
    %2523 = vmatpush1.msra.mxu0 0.0
    %2524 = vmatprep.mubr.f32.mxu0 0.0
    %2525 = vmatmul.mubr.f32.gmra.mrb[0].mxu0 %v2458
    %v2526 = vpop.f32.mrb[0].mxu0
    %v2527 = vadd.f32 0.0, %v2526
    %v2528 = vpop.f32.mrb[0].mxu0
    %2529 = vdwg.mxu0
    %2530 = vrot.lane.b32.xlu0 %v343, 112
    %v2531 = vpop.permute.xlu0 %2530
    %v2534 = vsel %vm66, %v1764, 0
    %2536 = vmatprep.subr.mxu0 0.0
    %2537 = vmatpush1.msra.mxu0 %v2531
    %2538 = vmatprep.subr.mxu0 0.0
    %2539 = vmatpush1.msra.mxu0 0.0
    %2540 = vmatprep.subr.mxu0 0.0
    %2541 = vmatpush1.msra.mxu0 0.0
    %2542 = vmatprep.subr.mxu0 0.0
    %2543 = vmatpush1.msra.mxu0 0.0
    %2544 = vmatprep.subr.mxu0 0.0
    %2545 = vmatpush1.msra.mxu0 0.0
    %2546 = vmatprep.subr.mxu0 0.0
    %2547 = vmatpush1.msra.mxu0 0.0
    %2548 = vmatprep.subr.mxu0 0.0
    %2549 = vmatpush1.msra.mxu0 0.0
    %2550 = vmatprep.subr.mxu0 0.0
    %2551 = vmatpush1.msra.mxu0 0.0
    %2552 = vmatprep.subr.mxu0 0.0
    %2553 = vmatpush1.msra.mxu0 0.0
    %2554 = vmatprep.subr.mxu0 0.0
    %2555 = vmatpush1.msra.mxu0 0.0
    %2556 = vmatprep.subr.mxu0 0.0
    %2557 = vmatpush1.msra.mxu0 0.0
    %2558 = vmatprep.subr.mxu0 0.0
    %2559 = vmatpush1.msra.mxu0 0.0
    %2560 = vmatprep.subr.mxu0 0.0
    %2561 = vmatpush1.msra.mxu0 0.0
    %2562 = vmatprep.subr.mxu0 0.0
    %2563 = vmatpush1.msra.mxu0 0.0
    %2564 = vmatprep.subr.mxu0 0.0
    %2565 = vmatpush1.msra.mxu0 0.0
    %2566 = vmatprep.subr.mxu0 0.0
    %2567 = vmatpush1.msra.mxu0 0.0
    %2568 = vmatprep.subr.mxu0 0.0
    %2569 = vmatpush1.msra.mxu0 0.0
    %2570 = vmatprep.subr.mxu0 0.0
    %2571 = vmatpush1.msra.mxu0 0.0
    %2572 = vmatprep.subr.mxu0 0.0
    %2573 = vmatpush1.msra.mxu0 0.0
    %2574 = vmatprep.subr.mxu0 0.0
    %2575 = vmatpush1.msra.mxu0 0.0
    %2576 = vmatprep.subr.mxu0 0.0
    %2577 = vmatpush1.msra.mxu0 0.0
    %2578 = vmatprep.subr.mxu0 0.0
    %2579 = vmatpush1.msra.mxu0 0.0
    %2580 = vmatprep.subr.mxu0 0.0
    %2581 = vmatpush1.msra.mxu0 0.0
    %2582 = vmatprep.subr.mxu0 0.0
    %2583 = vmatpush1.msra.mxu0 0.0
    %2584 = vmatprep.subr.mxu0 0.0
    %2585 = vmatpush1.msra.mxu0 0.0
    %2586 = vmatprep.subr.mxu0 0.0
    %2587 = vmatpush1.msra.mxu0 0.0
    %2588 = vmatprep.subr.mxu0 0.0
    %2589 = vmatpush1.msra.mxu0 0.0
    %2590 = vmatprep.subr.mxu0 0.0
    %2591 = vmatpush1.msra.mxu0 0.0
    %2592 = vmatprep.subr.mxu0 0.0
    %2593 = vmatpush1.msra.mxu0 0.0
    %2594 = vmatprep.subr.mxu0 0.0
    %2595 = vmatpush1.msra.mxu0 0.0
    %2596 = vmatprep.subr.mxu0 0.0
    %2597 = vmatpush1.msra.mxu0 0.0
    %2598 = vmatprep.subr.mxu0 0.0
    %2599 = vmatpush1.msra.mxu0 0.0
    %2600 = vmatprep.mubr.f32.mxu0 0.0
    %2601 = vmatmul.mubr.f32.gmra.mrb[0].mxu0 %v2534
    %v2602 = vpop.f32.mrb[0].mxu0
    %v2603 = vadd.f32 0.0, %v2602
    %v2604 = vpop.f32.mrb[0].mxu0
    %2605 = vdwg.mxu0
    %2606 = vrot.lane.b32.xlu0 %v345, 112
    %v2607 = vpop.permute.xlu0 %2606
    %v2610 = vsel %vm66, %v1765, 0
    %2612 = vmatprep.subr.mxu0 0.0
    %2613 = vmatpush1.msra.mxu0 %v2607
    %2614 = vmatprep.subr.mxu0 0.0
    %2615 = vmatpush1.msra.mxu0 0.0
    %2616 = vmatprep.subr.mxu0 0.0
    %2617 = vmatpush1.msra.mxu0 0.0
    %2618 = vmatprep.subr.mxu0 0.0
    %2619 = vmatpush1.msra.mxu0 0.0
    %2620 = vmatprep.subr.mxu0 0.0
    %2621 = vmatpush1.msra.mxu0 0.0
    %2622 = vmatprep.subr.mxu0 0.0
    %2623 = vmatpush1.msra.mxu0 0.0
    %2624 = vmatprep.subr.mxu0 0.0
    %2625 = vmatpush1.msra.mxu0 0.0
    %2626 = vmatprep.subr.mxu0 0.0
    %2627 = vmatpush1.msra.mxu0 0.0
    %2628 = vmatprep.subr.mxu0 0.0
    %2629 = vmatpush1.msra.mxu0 0.0
    %2630 = vmatprep.subr.mxu0 0.0
    %2631 = vmatpush1.msra.mxu0 0.0
    %2632 = vmatprep.subr.mxu0 0.0
    %2633 = vmatpush1.msra.mxu0 0.0
    %2634 = vmatprep.subr.mxu0 0.0
    %2635 = vmatpush1.msra.mxu0 0.0
    %2636 = vmatprep.subr.mxu0 0.0
    %2637 = vmatpush1.msra.mxu0 0.0
    %2638 = vmatprep.subr.mxu0 0.0
    %2639 = vmatpush1.msra.mxu0 0.0
    %2640 = vmatprep.subr.mxu0 0.0
    %2641 = vmatpush1.msra.mxu0 0.0
    %2642 = vmatprep.subr.mxu0 0.0
    %2643 = vmatpush1.msra.mxu0 0.0
    %2644 = vmatprep.subr.mxu0 0.0
    %2645 = vmatpush1.msra.mxu0 0.0
    %2646 = vmatprep.subr.mxu0 0.0
    %2647 = vmatpush1.msra.mxu0 0.0
    %2648 = vmatprep.subr.mxu0 0.0
    %2649 = vmatpush1.msra.mxu0 0.0
    %2650 = vmatprep.subr.mxu0 0.0
    %2651 = vmatpush1.msra.mxu0 0.0
    %2652 = vmatprep.subr.mxu0 0.0
    %2653 = vmatpush1.msra.mxu0 0.0
    %2654 = vmatprep.subr.mxu0 0.0
    %2655 = vmatpush1.msra.mxu0 0.0
    %2656 = vmatprep.subr.mxu0 0.0
    %2657 = vmatpush1.msra.mxu0 0.0
    %2658 = vmatprep.subr.mxu0 0.0
    %2659 = vmatpush1.msra.mxu0 0.0
    %2660 = vmatprep.subr.mxu0 0.0
    %2661 = vmatpush1.msra.mxu0 0.0
    %2662 = vmatprep.subr.mxu0 0.0
    %2663 = vmatpush1.msra.mxu0 0.0
    %2664 = vmatprep.subr.mxu0 0.0
    %2665 = vmatpush1.msra.mxu0 0.0
    %2666 = vmatprep.subr.mxu0 0.0
    %2667 = vmatpush1.msra.mxu0 0.0
    %2668 = vmatprep.subr.mxu0 0.0
    %2669 = vmatpush1.msra.mxu0 0.0
    %2670 = vmatprep.subr.mxu0 0.0
    %2671 = vmatpush1.msra.mxu0 0.0
    %2672 = vmatprep.subr.mxu0 0.0
    %2673 = vmatpush1.msra.mxu0 0.0
    %2674 = vmatprep.subr.mxu0 0.0
    %2675 = vmatpush1.msra.mxu0 0.0
    %2676 = vmatprep.mubr.f32.mxu0 0.0
    %2677 = vmatmul.mubr.f32.gmra.mrb[0].mxu0 %v2610
    %v2678 = vpop.f32.mrb[0].mxu0
    %v2679 = vadd.f32 0.0, %v2678
    %v2680 = vpop.f32.mrb[0].mxu0
    %2681 = vdwg.mxu0
    %2682 = vrot.lane.b32.xlu0 %v347, 112
    %v2683 = vpop.permute.xlu0 %2682
    %v2686 = vsel %vm66, %v1766, 0
    %2688 = vmatprep.subr.mxu0 0.0
    %2689 = vmatpush1.msra.mxu0 %v2683
    %2690 = vmatprep.subr.mxu0 0.0
    %2691 = vmatpush1.msra.mxu0 0.0
    %2692 = vmatprep.subr.mxu0 0.0
    %2693 = vmatpush1.msra.mxu0 0.0
    %2694 = vmatprep.subr.mxu0 0.0
    %2695 = vmatpush1.msra.mxu0 0.0
    %2696 = vmatprep.subr.mxu0 0.0
    %2697 = vmatpush1.msra.mxu0 0.0
    %2698 = vmatprep.subr.mxu0 0.0
    %2699 = vmatpush1.msra.mxu0 0.0
    %2700 = vmatprep.subr.mxu0 0.0
    %2701 = vmatpush1.msra.mxu0 0.0
    %2702 = vmatprep.subr.mxu0 0.0
    %2703 = vmatpush1.msra.mxu0 0.0
    %2704 = vmatprep.subr.mxu0 0.0
    %2705 = vmatpush1.msra.mxu0 0.0
    %2706 = vmatprep.subr.mxu0 0.0
    %2707 = vmatpush1.msra.mxu0 0.0
    %2708 = vmatprep.subr.mxu0 0.0
    %2709 = vmatpush1.msra.mxu0 0.0
    %2710 = vmatprep.subr.mxu0 0.0
    %2711 = vmatpush1.msra.mxu0 0.0
    %2712 = vmatprep.subr.mxu0 0.0
    %2713 = vmatpush1.msra.mxu0 0.0
    %2714 = vmatprep.subr.mxu0 0.0
    %2715 = vmatpush1.msra.mxu0 0.0
    %2716 = vmatprep.subr.mxu0 0.0
    %2717 = vmatpush1.msra.mxu0 0.0
    %2718 = vmatprep.subr.mxu0 0.0
    %2719 = vmatpush1.msra.mxu0 0.0
    %2720 = vmatprep.subr.mxu0 0.0
    %2721 = vmatpush1.msra.mxu0 0.0
    %2722 = vmatprep.subr.mxu0 0.0
    %2723 = vmatpush1.msra.mxu0 0.0
    %2724 = vmatprep.subr.mxu0 0.0
    %2725 = vmatpush1.msra.mxu0 0.0
    %2726 = vmatprep.subr.mxu0 0.0
    %2727 = vmatpush1.msra.mxu0 0.0
    %2728 = vmatprep.subr.mxu0 0.0
    %2729 = vmatpush1.msra.mxu0 0.0
    %2730 = vmatprep.subr.mxu0 0.0
    %2731 = vmatpush1.msra.mxu0 0.0
    %2732 = vmatprep.subr.mxu0 0.0
    %2733 = vmatpush1.msra.mxu0 0.0
    %2734 = vmatprep.subr.mxu0 0.0
    %2735 = vmatpush1.msra.mxu0 0.0
    %2736 = vmatprep.subr.mxu0 0.0
    %2737 = vmatpush1.msra.mxu0 0.0
    %2738 = vmatprep.subr.mxu0 0.0
    %2739 = vmatpush1.msra.mxu0 0.0
    %2740 = vmatprep.subr.mxu0 0.0
    %2741 = vmatpush1.msra.mxu0 0.0
    %2742 = vmatprep.subr.mxu0 0.0
    %2743 = vmatpush1.msra.mxu0 0.0
    %2744 = vmatprep.subr.mxu0 0.0
    %2745 = vmatpush1.msra.mxu0 0.0
    %2746 = vmatprep.subr.mxu0 0.0
    %2747 = vmatpush1.msra.mxu0 0.0
    %2748 = vmatprep.subr.mxu0 0.0
    %2749 = vmatpush1.msra.mxu0 0.0
    %2750 = vmatprep.subr.mxu0 0.0
    %2751 = vmatpush1.msra.mxu0 0.0
    %2752 = vmatprep.mubr.f32.mxu0 0.0
    %2753 = vmatmul.mubr.f32.gmra.mrb[0].mxu0 %v2686
    %v2754 = vpop.f32.mrb[0].mxu0
    %v2755 = vadd.f32 0.0, %v2754
    %v2756 = vpop.f32.mrb[0].mxu0
    %2757 = vdwg.mxu0
    %2758 = vrot.lane.b32.xlu0 %v349, 112
    %v2759 = vpop.permute.xlu0 %2758
    %v2762 = vsel %vm66, %v1767, 0
    %2764 = vmatprep.subr.mxu0 0.0
    %2765 = vmatpush1.msra.mxu0 %v2759
    %2766 = vmatprep.subr.mxu0 0.0
    %2767 = vmatpush1.msra.mxu0 0.0
    %2768 = vmatprep.subr.mxu0 0.0
    %2769 = vmatpush1.msra.mxu0 0.0
    %2770 = vmatprep.subr.mxu0 0.0
    %2771 = vmatpush1.msra.mxu0 0.0
    %2772 = vmatprep.subr.mxu0 0.0
    %2773 = vmatpush1.msra.mxu0 0.0
    %2774 = vmatprep.subr.mxu0 0.0
    %2775 = vmatpush1.msra.mxu0 0.0
    %2776 = vmatprep.subr.mxu0 0.0
    %2777 = vmatpush1.msra.mxu0 0.0
    %2778 = vmatprep.subr.mxu0 0.0
    %2779 = vmatpush1.msra.mxu0 0.0
    %2780 = vmatprep.subr.mxu0 0.0
    %2781 = vmatpush1.msra.mxu0 0.0
    %2782 = vmatprep.subr.mxu0 0.0
    %2783 = vmatpush1.msra.mxu0 0.0
    %2784 = vmatprep.subr.mxu0 0.0
    %2785 = vmatpush1.msra.mxu0 0.0
    %2786 = vmatprep.subr.mxu0 0.0
    %2787 = vmatpush1.msra.mxu0 0.0
    %2788 = vmatprep.subr.mxu0 0.0
    %2789 = vmatpush1.msra.mxu0 0.0
    %2790 = vmatprep.subr.mxu0 0.0
    %2791 = vmatpush1.msra.mxu0 0.0
    %2792 = vmatprep.subr.mxu0 0.0
    %2793 = vmatpush1.msra.mxu0 0.0
    %2794 = vmatprep.subr.mxu0 0.0
    %2795 = vmatpush1.msra.mxu0 0.0
    %2796 = vmatprep.subr.mxu0 0.0
    %2797 = vmatpush1.msra.mxu0 0.0
    %2798 = vmatprep.subr.mxu0 0.0
    %2799 = vmatpush1.msra.mxu0 0.0
    %2800 = vmatprep.subr.mxu0 0.0
    %2801 = vmatpush1.msra.mxu0 0.0
    %2802 = vmatprep.subr.mxu0 0.0
    %2803 = vmatpush1.msra.mxu0 0.0
    %2804 = vmatprep.subr.mxu0 0.0
    %2805 = vmatpush1.msra.mxu0 0.0
    %2806 = vmatprep.subr.mxu0 0.0
    %2807 = vmatpush1.msra.mxu0 0.0
    %2808 = vmatprep.subr.mxu0 0.0
    %2809 = vmatpush1.msra.mxu0 0.0
    %2810 = vmatprep.subr.mxu0 0.0
    %2811 = vmatpush1.msra.mxu0 0.0
    %2812 = vmatprep.subr.mxu0 0.0
    %2813 = vmatpush1.msra.mxu0 0.0
    %2814 = vmatprep.subr.mxu0 0.0
    %2815 = vmatpush1.msra.mxu0 0.0
    %2816 = vmatprep.subr.mxu0 0.0
    %2817 = vmatpush1.msra.mxu0 0.0
    %2818 = vmatprep.subr.mxu0 0.0
    %2819 = vmatpush1.msra.mxu0 0.0
    %2820 = vmatprep.subr.mxu0 0.0
    %2821 = vmatpush1.msra.mxu0 0.0
    %2822 = vmatprep.subr.mxu0 0.0
    %2823 = vmatpush1.msra.mxu0 0.0
    %2824 = vmatprep.subr.mxu0 0.0
    %2825 = vmatpush1.msra.mxu0 0.0
    %2826 = vmatprep.subr.mxu0 0.0
    %2827 = vmatpush1.msra.mxu0 0.0
    %2828 = vmatprep.mubr.f32.mxu0 0.0
    %2829 = vmatmul.mubr.f32.gmra.mrb[0].mxu0 %v2762
    %v2830 = vpop.f32.mrb[0].mxu0
    %v2831 = vadd.f32 0.0, %v2830
    %v2832 = vpop.f32.mrb[0].mxu0
    %2833 = vdwg.mxu0
    %2834 = vrot.lane.b32.xlu0 %v351, 112
    %v2835 = vpop.permute.xlu0 %2834
    %v2838 = vsel %vm66, %v1768, 0
    %2840 = vmatprep.subr.mxu0 0.0
    %2841 = vmatpush1.msra.mxu0 %v2835
    %2842 = vmatprep.subr.mxu0 0.0
    %2843 = vmatpush1.msra.mxu0 0.0
    %2844 = vmatprep.subr.mxu0 0.0
    %2845 = vmatpush1.msra.mxu0 0.0
    %2846 = vmatprep.subr.mxu0 0.0
    %2847 = vmatpush1.msra.mxu0 0.0
    %2848 = vmatprep.subr.mxu0 0.0
    %2849 = vmatpush1.msra.mxu0 0.0
    %2850 = vmatprep.subr.mxu0 0.0
    %2851 = vmatpush1.msra.mxu0 0.0
    %2852 = vmatprep.subr.mxu0 0.0
    %2853 = vmatpush1.msra.mxu0 0.0
    %2854 = vmatprep.subr.mxu0 0.0
    %2855 = vmatpush1.msra.mxu0 0.0
    %2856 = vmatprep.subr.mxu0 0.0
    %2857 = vmatpush1.msra.mxu0 0.0
    %2858 = vmatprep.subr.mxu0 0.0
    %2859 = vmatpush1.msra.mxu0 0.0
    %2860 = vmatprep.subr.mxu0 0.0
    %2861 = vmatpush1.msra.mxu0 0.0
    %2862 = vmatprep.subr.mxu0 0.0
    %2863 = vmatpush1.msra.mxu0 0.0
    %2864 = vmatprep.subr.mxu0 0.0
    %2865 = vmatpush1.msra.mxu0 0.0
    %2866 = vmatprep.subr.mxu0 0.0
    %2867 = vmatpush1.msra.mxu0 0.0
    %2868 = vmatprep.subr.mxu0 0.0
    %2869 = vmatpush1.msra.mxu0 0.0
    %2870 = vmatprep.subr.mxu0 0.0
    %2871 = vmatpush1.msra.mxu0 0.0
    %2872 = vmatprep.subr.mxu0 0.0
    %2873 = vmatpush1.msra.mxu0 0.0
    %2874 = vmatprep.subr.mxu0 0.0
    %2875 = vmatpush1.msra.mxu0 0.0
    %2876 = vmatprep.subr.mxu0 0.0
    %2877 = vmatpush1.msra.mxu0 0.0
    %2878 = vmatprep.subr.mxu0 0.0
    %2879 = vmatpush1.msra.mxu0 0.0
    %2880 = vmatprep.subr.mxu0 0.0
    %2881 = vmatpush1.msra.mxu0 0.0
    %2882 = vmatprep.subr.mxu0 0.0
    %2883 = vmatpush1.msra.mxu0 0.0
    %2884 = vmatprep.subr.mxu0 0.0
    %2885 = vmatpush1.msra.mxu0 0.0
    %2886 = vmatprep.subr.mxu0 0.0
    %2887 = vmatpush1.msra.mxu0 0.0
    %2888 = vmatprep.subr.mxu0 0.0
    %2889 = vmatpush1.msra.mxu0 0.0
    %2890 = vmatprep.subr.mxu0 0.0
    %2891 = vmatpush1.msra.mxu0 0.0
    %2892 = vmatprep.subr.mxu0 0.0
    %2893 = vmatpush1.msra.mxu0 0.0
    %2894 = vmatprep.subr.mxu0 0.0
    %2895 = vmatpush1.msra.mxu0 0.0
    %2896 = vmatprep.subr.mxu0 0.0
    %2897 = vmatpush1.msra.mxu0 0.0
    %2898 = vmatprep.subr.mxu0 0.0
    %2899 = vmatpush1.msra.mxu0 0.0
    %2900 = vmatprep.subr.mxu0 0.0
    %2901 = vmatpush1.msra.mxu0 0.0
    %2902 = vmatprep.subr.mxu0 0.0
    %2903 = vmatpush1.msra.mxu0 0.0
    %2904 = vmatprep.mubr.f32.mxu0 0.0
    %2905 = vmatmul.mubr.f32.gmra.mrb[0].mxu0 %v2838
    %v2906 = vpop.f32.mrb[0].mxu0
    %v2907 = vadd.f32 0.0, %v2906
    %v2908 = vpop.f32.mrb[0].mxu0
    %2909 = vdwg.mxu0
    %2910 = vrot.lane.b32.xlu0 %v353, 112
    %v2911 = vpop.permute.xlu0 %2910
    %v2914 = vsel %vm66, %v1769, 0
    %2916 = vmatprep.subr.mxu0 0.0
    %2917 = vmatpush1.msra.mxu0 %v2911
    %2918 = vmatprep.subr.mxu0 0.0
    %2919 = vmatpush1.msra.mxu0 0.0
    %2920 = vmatprep.subr.mxu0 0.0
    %2921 = vmatpush1.msra.mxu0 0.0
    %2922 = vmatprep.subr.mxu0 0.0
    %2923 = vmatpush1.msra.mxu0 0.0
    %2924 = vmatprep.subr.mxu0 0.0
    %2925 = vmatpush1.msra.mxu0 0.0
    %2926 = vmatprep.subr.mxu0 0.0
    %2927 = vmatpush1.msra.mxu0 0.0
    %2928 = vmatprep.subr.mxu0 0.0
    %2929 = vmatpush1.msra.mxu0 0.0
    %2930 = vmatprep.subr.mxu0 0.0
    %2931 = vmatpush1.msra.mxu0 0.0
    %2932 = vmatprep.subr.mxu0 0.0
    %2933 = vmatpush1.msra.mxu0 0.0
    %2934 = vmatprep.subr.mxu0 0.0
    %2935 = vmatpush1.msra.mxu0 0.0
    %2936 = vmatprep.subr.mxu0 0.0
    %2937 = vmatpush1.msra.mxu0 0.0
    %2938 = vmatprep.subr.mxu0 0.0
    %2939 = vmatpush1.msra.mxu0 0.0
    %2940 = vmatprep.subr.mxu0 0.0
    %2941 = vmatpush1.msra.mxu0 0.0
    %2942 = vmatprep.subr.mxu0 0.0
    %2943 = vmatpush1.msra.mxu0 0.0
    %2944 = vmatprep.subr.mxu0 0.0
    %2945 = vmatpush1.msra.mxu0 0.0
    %2946 = vmatprep.subr.mxu0 0.0
    %2947 = vmatpush1.msra.mxu0 0.0
    %2948 = vmatprep.subr.mxu0 0.0
    %2949 = vmatpush1.msra.mxu0 0.0
    %2950 = vmatprep.subr.mxu0 0.0
    %2951 = vmatpush1.msra.mxu0 0.0
    %2952 = vmatprep.subr.mxu0 0.0
    %2953 = vmatpush1.msra.mxu0 0.0
    %2954 = vmatprep.subr.mxu0 0.0
    %2955 = vmatpush1.msra.mxu0 0.0
    %2956 = vmatprep.subr.mxu0 0.0
    %2957 = vmatpush1.msra.mxu0 0.0
    %2958 = vmatprep.subr.mxu0 0.0
    %2959 = vmatpush1.msra.mxu0 0.0
    %2960 = vmatprep.subr.mxu0 0.0
    %2961 = vmatpush1.msra.mxu0 0.0
    %2962 = vmatprep.subr.mxu0 0.0
    %2963 = vmatpush1.msra.mxu0 0.0
    %2964 = vmatprep.subr.mxu0 0.0
    %2965 = vmatpush1.msra.mxu0 0.0
    %2966 = vmatprep.subr.mxu0 0.0
    %2967 = vmatpush1.msra.mxu0 0.0
    %2968 = vmatprep.subr.mxu0 0.0
    %2969 = vmatpush1.msra.mxu0 0.0
    %2970 = vmatprep.subr.mxu0 0.0
    %2971 = vmatpush1.msra.mxu0 0.0
    %2972 = vmatprep.subr.mxu0 0.0
    %2973 = vmatpush1.msra.mxu0 0.0
    %2974 = vmatprep.subr.mxu0 0.0
    %2975 = vmatpush1.msra.mxu0 0.0
    %2976 = vmatprep.subr.mxu0 0.0
    %2977 = vmatpush1.msra.mxu0 0.0
    %2978 = vmatprep.subr.mxu0 0.0
    %2979 = vmatpush1.msra.mxu0 0.0
    %2980 = vmatprep.mubr.f32.mxu0 0.0
    %2981 = vmatmul.mubr.f32.gmra.mrb[0].mxu0 %v2914
    %v2982 = vpop.f32.mrb[0].mxu0
    %v2983 = vadd.f32 0.0, %v2982
    %v2984 = vpop.f32.mrb[0].mxu0
    %2985 = vdwg.mxu0
    %v2986 = vld [vmem:[%s4] sm:$0xf]
    %s2987 = scalar_lea.vmem %s4, 4
    %v2988 = vld [vmem:[%s2987] sm:$0xf]
    %v2990 = vsel %vm356, %v2451, 0
    %v2993 = vsel %vm356, %v2527, 0
    %v2996 = vsel %vm356, %v2603, 0
    %v2999 = vsel %vm356, %v2679, 0
    %v3002 = vsel %vm356, %v2755, 0
    %v3005 = vsel %vm356, %v2831, 0
    %v3008 = vsel %vm356, %v2907, 0
    %v3011 = vsel %vm356, %v2983, 0
    %vm3013 = vcmask 1043456
    %v3015 = vsel %vm3013, %v2988, 0
    %3017 = vmatprep.subr.mxu0 0.0
    %3018 = vmatpush1.msra.mxu0 %v3015
    %3019 = vmatprep.subr.mxu0 0.0
    %3020 = vmatpush1.msra.mxu0 0.0
    %3021 = vmatprep.subr.mxu0 0.0
    %3022 = vmatpush1.msra.mxu0 0.0
    %3023 = vmatprep.subr.mxu0 0.0
    %3024 = vmatpush1.msra.mxu0 0.0
    %3025 = vmatprep.subr.mxu0 0.0
    %3026 = vmatpush1.msra.mxu0 0.0
    %3027 = vmatprep.subr.mxu0 0.0
    %3028 = vmatpush1.msra.mxu0 0.0
    %3029 = vmatprep.subr.mxu0 0.0
    %3030 = vmatpush1.msra.mxu0 0.0
    %3031 = vmatprep.subr.mxu0 0.0
    %3032 = vmatpush1.msra.mxu0 0.0
    %3033 = vmatprep.subr.mxu0 0.0
    %3034 = vmatpush1.msra.mxu0 0.0
    %3035 = vmatprep.subr.mxu0 0.0
    %3036 = vmatpush1.msra.mxu0 0.0
    %3037 = vmatprep.subr.mxu0 0.0
    %3038 = vmatpush1.msra.mxu0 0.0
    %3039 = vmatprep.subr.mxu0 0.0
    %3040 = vmatpush1.msra.mxu0 0.0
    %3041 = vmatprep.subr.mxu0 0.0
    %3042 = vmatpush1.msra.mxu0 0.0
    %3043 = vmatprep.subr.mxu0 0.0
    %3044 = vmatpush1.msra.mxu0 0.0
    %3045 = vmatprep.subr.mxu0 0.0
    %3046 = vmatpush1.msra.mxu0 0.0
    %3047 = vmatprep.subr.mxu0 0.0
    %3048 = vmatpush1.msra.mxu0 0.0
    %3049 = vmatprep.subr.mxu0 0.0
    %3050 = vmatpush1.msra.mxu0 0.0
    %3051 = vmatprep.subr.mxu0 0.0
    %3052 = vmatpush1.msra.mxu0 0.0
    %3053 = vmatprep.subr.mxu0 0.0
    %3054 = vmatpush1.msra.mxu0 0.0
    %3055 = vmatprep.subr.mxu0 0.0
    %3056 = vmatpush1.msra.mxu0 0.0
    %3057 = vmatprep.subr.mxu0 0.0
    %3058 = vmatpush1.msra.mxu0 0.0
    %3059 = vmatprep.subr.mxu0 0.0
    %3060 = vmatpush1.msra.mxu0 0.0
    %3061 = vmatprep.subr.mxu0 0.0
    %3062 = vmatpush1.msra.mxu0 0.0
    %3063 = vmatprep.subr.mxu0 0.0
    %3064 = vmatpush1.msra.mxu0 0.0
    %3065 = vmatprep.subr.mxu0 0.0
    %3066 = vmatpush1.msra.mxu0 0.0
    %3067 = vmatprep.subr.mxu0 0.0
    %3068 = vmatpush1.msra.mxu0 0.0
    %3069 = vmatprep.subr.mxu0 0.0
    %3070 = vmatpush1.msra.mxu0 0.0
    %3071 = vmatprep.subr.mxu0 0.0
    %3072 = vmatpush1.msra.mxu0 0.0
    %3073 = vmatprep.subr.mxu0 0.0
    %3074 = vmatpush1.msra.mxu0 0.0
    %3075 = vmatprep.subr.mxu0 0.0
    %3076 = vmatpush1.msra.mxu0 0.0
    %3077 = vmatprep.subr.mxu0 0.0
    %3078 = vmatpush1.msra.mxu0 0.0
    %3079 = vmatprep.subr.mxu0 0.0
    %3080 = vmatpush1.msra.mxu0 0.0
    %3081 = vmatprep.mubr.f32.mxu0 0.0
    %3082 = vmatmul.mubr.f32.gmra.mrb[0].mxu0 %v2990
    %v3083 = vpop.f32.mrb[0].mxu0
    %v3084 = vadd.f32 0.0, %v3083
    %v3085 = vpop.f32.mrb[0].mxu0
    %3086 = vmatprep.mubr.f32.mxu0 0.0
    %3087 = vmatmul.mubr.f32.gmra.mrb[0].mxu0 %v2993
    %v3088 = vpop.f32.mrb[0].mxu0
    %v3089 = vadd.f32 0.0, %v3088
    %v3090 = vpop.f32.mrb[0].mxu0
    %3091 = vmatprep.mubr.f32.mxu0 0.0
    %3092 = vmatmul.mubr.f32.gmra.mrb[0].mxu0 %v2996
    %v3093 = vpop.f32.mrb[0].mxu0
    %v3094 = vadd.f32 0.0, %v3093
    %v3095 = vpop.f32.mrb[0].mxu0
    %3096 = vmatprep.mubr.f32.mxu0 0.0
    %3097 = vmatmul.mubr.f32.gmra.mrb[0].mxu0 %v2999
    %v3098 = vpop.f32.mrb[0].mxu0
    %v3099 = vadd.f32 0.0, %v3098
    %v3100 = vpop.f32.mrb[0].mxu0
    %3101 = vmatprep.mubr.f32.mxu0 0.0
    %3102 = vmatmul.mubr.f32.gmra.mrb[0].mxu0 %v3002
    %v3103 = vpop.f32.mrb[0].mxu0
    %v3104 = vadd.f32 0.0, %v3103
    %v3105 = vpop.f32.mrb[0].mxu0
    %3106 = vmatprep.mubr.f32.mxu0 0.0
    %3107 = vmatmul.mubr.f32.gmra.mrb[0].mxu0 %v3005
    %v3108 = vpop.f32.mrb[0].mxu0
    %v3109 = vadd.f32 0.0, %v3108
    %v3110 = vpop.f32.mrb[0].mxu0
    %3111 = vmatprep.mubr.f32.mxu0 0.0
    %3112 = vmatmul.mubr.f32.gmra.mrb[0].mxu0 %v3008
    %v3113 = vpop.f32.mrb[0].mxu0
    %v3114 = vadd.f32 0.0, %v3113
    %v3115 = vpop.f32.mrb[0].mxu0
    %3116 = vmatprep.mubr.f32.mxu0 0.0
    %3117 = vmatmul.mubr.f32.gmra.mrb[0].mxu0 %v3011
    %v3118 = vpop.f32.mrb[0].mxu0
    %v3119 = vadd.f32 0.0, %v3118
    %v3120 = vpop.f32.mrb[0].mxu0
    %3121 = vdwg.mxu0
    %v3123 = vsel %vm356, %v1843, 0
    %v3126 = vsel %vm356, %v1919, 0
    %v3129 = vsel %vm356, %v1995, 0
    %v3132 = vsel %vm356, %v2071, 0
    %v3135 = vsel %vm356, %v2147, 0
    %v3138 = vsel %vm356, %v2223, 0
    %v3141 = vsel %vm356, %v2299, 0
    %v3144 = vsel %vm356, %v2375, 0
    %v3147 = vsel %vm3013, %v2986, 0
    %3149 = vmatprep.subr.mxu0 0.0
    %3150 = vmatpush1.msra.mxu0 %v3147
    %3151 = vmatprep.subr.mxu0 0.0
    %3152 = vmatpush1.msra.mxu0 0.0
    %3153 = vmatprep.subr.mxu0 0.0
    %3154 = vmatpush1.msra.mxu0 0.0
    %3155 = vmatprep.subr.mxu0 0.0
    %3156 = vmatpush1.msra.mxu0 0.0
    %3157 = vmatprep.subr.mxu0 0.0
    %3158 = vmatpush1.msra.mxu0 0.0
    %3159 = vmatprep.subr.mxu0 0.0
    %3160 = vmatpush1.msra.mxu0 0.0
    %3161 = vmatprep.subr.mxu0 0.0
    %3162 = vmatpush1.msra.mxu0 0.0
    %3163 = vmatprep.subr.mxu0 0.0
    %3164 = vmatpush1.msra.mxu0 0.0
    %3165 = vmatprep.subr.mxu0 0.0
    %3166 = vmatpush1.msra.mxu0 0.0
    %3167 = vmatprep.subr.mxu0 0.0
    %3168 = vmatpush1.msra.mxu0 0.0
    %3169 = vmatprep.subr.mxu0 0.0
    %3170 = vmatpush1.msra.mxu0 0.0
    %3171 = vmatprep.subr.mxu0 0.0
    %3172 = vmatpush1.msra.mxu0 0.0
    %3173 = vmatprep.subr.mxu0 0.0
    %3174 = vmatpush1.msra.mxu0 0.0
    %3175 = vmatprep.subr.mxu0 0.0
    %3176 = vmatpush1.msra.mxu0 0.0
    %3177 = vmatprep.subr.mxu0 0.0
    %3178 = vmatpush1.msra.mxu0 0.0
    %3179 = vmatprep.subr.mxu0 0.0
    %3180 = vmatpush1.msra.mxu0 0.0
    %3181 = vmatprep.subr.mxu0 0.0
    %3182 = vmatpush1.msra.mxu0 0.0
    %3183 = vmatprep.subr.mxu0 0.0
    %3184 = vmatpush1.msra.mxu0 0.0
    %3185 = vmatprep.subr.mxu0 0.0
    %3186 = vmatpush1.msra.mxu0 0.0
    %3187 = vmatprep.subr.mxu0 0.0
    %3188 = vmatpush1.msra.mxu0 0.0
    %3189 = vmatprep.subr.mxu0 0.0
    %3190 = vmatpush1.msra.mxu0 0.0
    %3191 = vmatprep.subr.mxu0 0.0
    %3192 = vmatpush1.msra.mxu0 0.0
    %3193 = vmatprep.subr.mxu0 0.0
    %3194 = vmatpush1.msra.mxu0 0.0
    %3195 = vmatprep.subr.mxu0 0.0
    %3196 = vmatpush1.msra.mxu0 0.0
    %3197 = vmatprep.subr.mxu0 0.0
    %3198 = vmatpush1.msra.mxu0 0.0
    %3199 = vmatprep.subr.mxu0 0.0
    %3200 = vmatpush1.msra.mxu0 0.0
    %3201 = vmatprep.subr.mxu0 0.0
    %3202 = vmatpush1.msra.mxu0 0.0
    %3203 = vmatprep.subr.mxu0 0.0
    %3204 = vmatpush1.msra.mxu0 0.0
    %3205 = vmatprep.subr.mxu0 0.0
    %3206 = vmatpush1.msra.mxu0 0.0
    %3207 = vmatprep.subr.mxu0 0.0
    %3208 = vmatpush1.msra.mxu0 0.0
    %3209 = vmatprep.subr.mxu0 0.0
    %3210 = vmatpush1.msra.mxu0 0.0
    %3211 = vmatprep.subr.mxu0 0.0
    %3212 = vmatpush1.msra.mxu0 0.0
    %3213 = vmatprep.mubr.f32.mxu0 0.0
    %3214 = vmatmul.mubr.f32.gmra.mrb[0].mxu0 %v3123
    %v3215 = vpop.f32.mrb[0].mxu0
    %v3216 = vadd.f32 %v3084, %v3215
    %v3217 = vpop.f32.mrb[0].mxu0
    %3218 = vmatprep.mubr.f32.mxu0 0.0
    %3219 = vmatmul.mubr.f32.gmra.mrb[0].mxu0 %v3126
    %v3220 = vpop.f32.mrb[0].mxu0
    %v3221 = vadd.f32 %v3089, %v3220
    %v3222 = vpop.f32.mrb[0].mxu0
    %3223 = vmatprep.mubr.f32.mxu0 0.0
    %3224 = vmatmul.mubr.f32.gmra.mrb[0].mxu0 %v3129
    %v3225 = vpop.f32.mrb[0].mxu0
    %v3226 = vadd.f32 %v3094, %v3225
    %v3227 = vpop.f32.mrb[0].mxu0
    %3228 = vmatprep.mubr.f32.mxu0 0.0
    %3229 = vmatmul.mubr.f32.gmra.mrb[0].mxu0 %v3132
    %v3230 = vpop.f32.mrb[0].mxu0
    %v3231 = vadd.f32 %v3099, %v3230
    %v3232 = vpop.f32.mrb[0].mxu0
    %3233 = vmatprep.mubr.f32.mxu0 0.0
    %3234 = vmatmul.mubr.f32.gmra.mrb[0].mxu0 %v3135
    %v3235 = vpop.f32.mrb[0].mxu0
    %v3236 = vadd.f32 %v3104, %v3235
    %v3237 = vpop.f32.mrb[0].mxu0
    %3238 = vmatprep.mubr.f32.mxu0 0.0
    %3239 = vmatmul.mubr.f32.gmra.mrb[0].mxu0 %v3138
    %v3240 = vpop.f32.mrb[0].mxu0
    %v3241 = vadd.f32 %v3109, %v3240
    %v3242 = vpop.f32.mrb[0].mxu0
    %3243 = vmatprep.mubr.f32.mxu0 0.0
    %3244 = vmatmul.mubr.f32.gmra.mrb[0].mxu0 %v3141
    %v3245 = vpop.f32.mrb[0].mxu0
    %v3246 = vadd.f32 %v3114, %v3245
    %v3247 = vpop.f32.mrb[0].mxu0
    %3248 = vmatprep.mubr.f32.mxu0 0.0
    %3249 = vmatmul.mubr.f32.gmra.mrb[0].mxu0 %v3144
    %v3250 = vpop.f32.mrb[0].mxu0
    %v3251 = vadd.f32 %v3119, %v3250
    %v3252 = vpop.f32.mrb[0].mxu0
    %3253 = vdwg.mxu0
    %v3254 = vadd.f32 %v56, %v3216
    %v3255 = vadd.f32 %v57, %v3221
    %v3256 = vadd.f32 %v58, %v3226
    %v3257 = vadd.f32 %v59, %v3231
    %v3258 = vadd.f32 %v60, %v3236
    %v3259 = vadd.f32 %v61, %v3241
    %v3260 = vadd.f32 %v62, %v3246
    %v3261 = vadd.f32 %v63, %v3251
    %v3262 = vld [vmem:[%s5] sm:$0x1]
    %v3264 = vlaneseq
    %v3265 = vshrl.u32 %v3264, 7
    %v3266 = vsub.s32 0, %v3265
    %v3267 = vrot.slane %v3262, %v3266
    %v3269 = vadd.f32 %v3254, %v3267
    %v3270 = vadd.f32 %v3255, %v3267
    %v3271 = vadd.f32 %v3256, %v3267
    %v3272 = vadd.f32 %v3257, %v3267
    %v3273 = vadd.f32 %v3258, %v3267
    %v3274 = vadd.f32 %v3259, %v3267
    %v3275 = vadd.f32 %v3260, %v3267
    %v3276 = vadd.f32 %v3261, %v3267
    %v3277 = vld [vmem:[%s6] sm:$0x1]
    %v3278 = vld [vmem:[%s7] sm:$0x1]
    %v3279 = vsel %vm66, %v3269, 0.0
    %3280 = vadd.xlane.f32.xlu0 %v3279
    %v3281 = vpop.xlane.xlu0 %3280
    %v3282 = vsel %vm66, %v3270, 0.0
    %3283 = vadd.xlane.f32.xlu0 %v3282
    %v3284 = vpop.xlane.xlu0 %3283
    %v3285 = vsel %vm66, %v3271, 0.0
    %3286 = vadd.xlane.f32.xlu0 %v3285
    %v3287 = vpop.xlane.xlu0 %3286
    %v3288 = vsel %vm66, %v3272, 0.0
    %3289 = vadd.xlane.f32.xlu0 %v3288
    %v3290 = vpop.xlane.xlu0 %3289
    %v3291 = vsel %vm66, %v3273, 0.0
    %3292 = vadd.xlane.f32.xlu0 %v3291
    %v3293 = vpop.xlane.xlu0 %3292
    %v3294 = vsel %vm66, %v3274, 0.0
    %3295 = vadd.xlane.f32.xlu0 %v3294
    %v3296 = vpop.xlane.xlu0 %3295
    %v3297 = vsel %vm66, %v3275, 0.0
    %3298 = vadd.xlane.f32.xlu0 %v3297
    %v3299 = vpop.xlane.xlu0 %3298
    %v3300 = vsel %vm66, %v3276, 0.0
    %3301 = vadd.xlane.f32.xlu0 %v3300
    %v3302 = vpop.xlane.xlu0 %3301
    %v3303 = vmul.f32 %v3281, %v91
    %v3304 = vmul.f32 %v3284, %v91
    %v3305 = vmul.f32 %v3287, %v91
    %v3306 = vmul.f32 %v3290, %v91
    %v3307 = vmul.f32 %v3293, %v91
    %v3308 = vmul.f32 %v3296, %v91
    %v3309 = vmul.f32 %v3299, %v91
    %v3310 = vmul.f32 %v3302, %v91
    %v3311 = vsub.f32 %v3269, %v3303
    %v3312 = vsub.f32 %v3270, %v3304
    %v3313 = vsub.f32 %v3271, %v3305
    %v3314 = vsub.f32 %v3272, %v3306
    %v3315 = vsub.f32 %v3273, %v3307
    %v3316 = vsub.f32 %v3274, %v3308
    %v3317 = vsub.f32 %v3275, %v3309
    %v3318 = vsub.f32 %v3276, %v3310
    %v3319 = vmul.f32 %v3311, %v3311
    %v3320 = vmul.f32 %v3312, %v3312
    %v3321 = vmul.f32 %v3313, %v3313
    %v3322 = vmul.f32 %v3314, %v3314
    %v3323 = vmul.f32 %v3315, %v3315
    %v3324 = vmul.f32 %v3316, %v3316
    %v3325 = vmul.f32 %v3317, %v3317
    %v3326 = vmul.f32 %v3318, %v3318
    %v3327 = vsel %vm66, %v3319, 0.0
    %3328 = vadd.xlane.f32.xlu0 %v3327
    %v3329 = vpop.xlane.xlu0 %3328
    %v3330 = vsel %vm66, %v3320, 0.0
    %3331 = vadd.xlane.f32.xlu0 %v3330
    %v3332 = vpop.xlane.xlu0 %3331
    %v3333 = vsel %vm66, %v3321, 0.0
    %3334 = vadd.xlane.f32.xlu0 %v3333
    %v3335 = vpop.xlane.xlu0 %3334
    %v3336 = vsel %vm66, %v3322, 0.0
    %3337 = vadd.xlane.f32.xlu0 %v3336
    %v3338 = vpop.xlane.xlu0 %3337
    %v3339 = vsel %vm66, %v3323, 0.0
    %3340 = vadd.xlane.f32.xlu0 %v3339
    %v3341 = vpop.xlane.xlu0 %3340
    %v3342 = vsel %vm66, %v3324, 0.0
    %3343 = vadd.xlane.f32.xlu0 %v3342
    %v3344 = vpop.xlane.xlu0 %3343
    %v3345 = vsel %vm66, %v3325, 0.0
    %3346 = vadd.xlane.f32.xlu0 %v3345
    %v3347 = vpop.xlane.xlu0 %3346
    %v3348 = vsel %vm66, %v3326, 0.0
    %3349 = vadd.xlane.f32.xlu0 %v3348
    %v3350 = vpop.xlane.xlu0 %3349
    %v3351 = vmul.f32 %v3329, %v91
    %v3352 = vmul.f32 %v3332, %v91
    %v3353 = vmul.f32 %v3335, %v91
    %v3354 = vmul.f32 %v3338, %v91
    %v3355 = vmul.f32 %v3341, %v91
    %v3356 = vmul.f32 %v3344, %v91
    %v3357 = vmul.f32 %v3347, %v91
    %v3358 = vmul.f32 %v3350, %v91
    %v3359 = vadd.f32 %v3351, 1e-05
    %v3360 = vadd.f32 %v3352, 1e-05
    %v3361 = vadd.f32 %v3353, 1e-05
    %v3362 = vadd.f32 %v3354, 1e-05
    %v3363 = vadd.f32 %v3355, 1e-05
    %v3364 = vadd.f32 %v3356, 1e-05
    %v3365 = vadd.f32 %v3357, 1e-05
    %v3366 = vadd.f32 %v3358, 1e-05
    %v3367 = vrsqrt.pop %v3359
    %v3368 = vrsqrt.pop %v3360
    %v3369 = vrsqrt.pop %v3361
    %v3370 = vrsqrt.pop %v3362
    %v3371 = vrsqrt.pop %v3363
    %v3372 = vrsqrt.pop %v3364
    %v3373 = vrsqrt.pop %v3365
    %v3374 = vrsqrt.pop %v3366
    %v3375 = vmul.f32 %v3311, %v3367
    %v3376 = vmul.f32 %v3312, %v3368
    %v3377 = vmul.f32 %v3313, %v3369
    %v3378 = vmul.f32 %v3314, %v3370
    %v3379 = vmul.f32 %v3315, %v3371
    %v3380 = vmul.f32 %v3316, %v3372
    %v3381 = vmul.f32 %v3317, %v3373
    %v3382 = vmul.f32 %v3318, %v3374
    %v3384 = vlaneseq
    %v3385 = vshrl.u32 %v3384, 7
    %v3386 = vsub.s32 0, %v3385
    %v3387 = vrot.slane %v3277, %v3386
    %v3389 = vmul.f32 %v3375, %v3387
    %v3390 = vmul.f32 %v3376, %v3387
    %v3391 = vmul.f32 %v3377, %v3387
    %v3392 = vmul.f32 %v3378, %v3387
    %v3393 = vmul.f32 %v3379, %v3387
    %v3394 = vmul.f32 %v3380, %v3387
    %v3395 = vmul.f32 %v3381, %v3387
    %v3396 = vmul.f32 %v3382, %v3387
    %v3398 = vlaneseq
    %v3399 = vshrl.u32 %v3398, 7
    %v3400 = vsub.s32 0, %v3399
    %v3401 = vrot.slane %v3278, %v3400
    %v3403 = vadd.f32 %v3389, %v3401
    %v3404 = vadd.f32 %v3390, %v3401
    %v3405 = vadd.f32 %v3391, %v3401
    %v3406 = vadd.f32 %v3392, %v3401
    %v3407 = vadd.f32 %v3393, %v3401
    %v3408 = vadd.f32 %v3394, %v3401
    %v3409 = vadd.f32 %v3395, %v3401
    %v3410 = vadd.f32 %v3396, %v3401
    %v3411 = vld [vmem:[%s8] sm:$0xff]
    %v3412 = vld [vmem:[%s9] sm:$0x1]
    %v3414 = vlaneseq
    %v3415 = vshrl.u32 %v3414, 7
    %v3416 = vsub.s32 0, %v3415
    %v3417 = vrot.slane %v3412, %v3416
    %v3420 = vsel %vm66, %v3403, 0
    %v3423 = vsel %vm66, %v3404, 0
    %v3426 = vsel %vm66, %v3405, 0
    %v3429 = vsel %vm66, %v3406, 0
    %v3432 = vsel %vm66, %v3407, 0
    %v3435 = vsel %vm66, %v3408, 0
    %v3438 = vsel %vm66, %v3409, 0
    %v3441 = vsel %vm66, %v3410, 0
    %3443 = vmatprep.subr.mxu0 0.0
    %3444 = vmatpush1.msra.mxu0 %v3411
    %3445 = vmatprep.subr.mxu0 0.0
    %3446 = vmatpush1.msra.mxu0 0.0
    %3447 = vmatprep.subr.mxu0 0.0
    %3448 = vmatpush1.msra.mxu0 0.0
    %3449 = vmatprep.subr.mxu0 0.0
    %3450 = vmatpush1.msra.mxu0 0.0
    %3451 = vmatprep.subr.mxu0 0.0
    %3452 = vmatpush1.msra.mxu0 0.0
    %3453 = vmatprep.subr.mxu0 0.0
    %3454 = vmatpush1.msra.mxu0 0.0
    %3455 = vmatprep.subr.mxu0 0.0
    %3456 = vmatpush1.msra.mxu0 0.0
    %3457 = vmatprep.subr.mxu0 0.0
    %3458 = vmatpush1.msra.mxu0 0.0
    %3459 = vmatprep.subr.mxu0 0.0
    %3460 = vmatpush1.msra.mxu0 0.0
    %3461 = vmatprep.subr.mxu0 0.0
    %3462 = vmatpush1.msra.mxu0 0.0
    %3463 = vmatprep.subr.mxu0 0.0
    %3464 = vmatpush1.msra.mxu0 0.0
    %3465 = vmatprep.subr.mxu0 0.0
    %3466 = vmatpush1.msra.mxu0 0.0
    %3467 = vmatprep.subr.mxu0 0.0
    %3468 = vmatpush1.msra.mxu0 0.0
    %3469 = vmatprep.subr.mxu0 0.0
    %3470 = vmatpush1.msra.mxu0 0.0
    %3471 = vmatprep.subr.mxu0 0.0
    %3472 = vmatpush1.msra.mxu0 0.0
    %3473 = vmatprep.subr.mxu0 0.0
    %3474 = vmatpush1.msra.mxu0 0.0
    %3475 = vmatprep.subr.mxu0 0.0
    %3476 = vmatpush1.msra.mxu0 0.0
    %3477 = vmatprep.subr.mxu0 0.0
    %3478 = vmatpush1.msra.mxu0 0.0
    %3479 = vmatprep.subr.mxu0 0.0
    %3480 = vmatpush1.msra.mxu0 0.0
    %3481 = vmatprep.subr.mxu0 0.0
    %3482 = vmatpush1.msra.mxu0 0.0
    %3483 = vmatprep.subr.mxu0 0.0
    %3484 = vmatpush1.msra.mxu0 0.0
    %3485 = vmatprep.subr.mxu0 0.0
    %3486 = vmatpush1.msra.mxu0 0.0
    %3487 = vmatprep.subr.mxu0 0.0
    %3488 = vmatpush1.msra.mxu0 0.0
    %3489 = vmatprep.subr.mxu0 0.0
    %3490 = vmatpush1.msra.mxu0 0.0
    %3491 = vmatprep.subr.mxu0 0.0
    %3492 = vmatpush1.msra.mxu0 0.0
    %3493 = vmatprep.subr.mxu0 0.0
    %3494 = vmatpush1.msra.mxu0 0.0
    %3495 = vmatprep.subr.mxu0 0.0
    %3496 = vmatpush1.msra.mxu0 0.0
    %3497 = vmatprep.subr.mxu0 0.0
    %3498 = vmatpush1.msra.mxu0 0.0
    %3499 = vmatprep.subr.mxu0 0.0
    %3500 = vmatpush1.msra.mxu0 0.0
    %3501 = vmatprep.subr.mxu0 0.0
    %3502 = vmatpush1.msra.mxu0 0.0
    %3503 = vmatprep.subr.mxu0 0.0
    %3504 = vmatpush1.msra.mxu0 0.0
    %3505 = vmatprep.subr.mxu0 0.0
    %3506 = vmatpush1.msra.mxu0 0.0
    %3507 = vmatprep.mubr.f32.mxu0 0.0
    %3508 = vmatmul.mubr.f32.gmra.mrb[0].mxu0 %v3420
    %v3509 = vpop.f32.mrb[0].mxu0
    %v3510 = vadd.f32 %v3417, %v3509
    %v3511 = vpop.f32.mrb[0].mxu0
    %3512 = vmatprep.mubr.f32.mxu0 0.0
    %3513 = vmatmul.mubr.f32.gmra.mrb[0].mxu0 %v3423
    %v3514 = vpop.f32.mrb[0].mxu0
    %v3515 = vadd.f32 %v3417, %v3514
    %v3516 = vpop.f32.mrb[0].mxu0
    %3517 = vmatprep.mubr.f32.mxu0 0.0
    %3518 = vmatmul.mubr.f32.gmra.mrb[0].mxu0 %v3426
    %v3519 = vpop.f32.mrb[0].mxu0
    %v3520 = vadd.f32 %v3417, %v3519
    %v3521 = vpop.f32.mrb[0].mxu0
    %3522 = vmatprep.mubr.f32.mxu0 0.0
    %3523 = vmatmul.mubr.f32.gmra.mrb[0].mxu0 %v3429
    %v3524 = vpop.f32.mrb[0].mxu0
    %v3525 = vadd.f32 %v3417, %v3524
    %v3526 = vpop.f32.mrb[0].mxu0
    %3527 = vmatprep.mubr.f32.mxu0 0.0
    %3528 = vmatmul.mubr.f32.gmra.mrb[0].mxu0 %v3432
    %v3529 = vpop.f32.mrb[0].mxu0
    %v3530 = vadd.f32 %v3417, %v3529
    %v3531 = vpop.f32.mrb[0].mxu0
    %3532 = vmatprep.mubr.f32.mxu0 0.0
    %3533 = vmatmul.mubr.f32.gmra.mrb[0].mxu0 %v3435
    %v3534 = vpop.f32.mrb[0].mxu0
    %v3535 = vadd.f32 %v3417, %v3534
    %v3536 = vpop.f32.mrb[0].mxu0
    %3537 = vmatprep.mubr.f32.mxu0 0.0
    %3538 = vmatmul.mubr.f32.gmra.mrb[0].mxu0 %v3438
    %v3539 = vpop.f32.mrb[0].mxu0
    %v3540 = vadd.f32 %v3417, %v3539
    %v3541 = vpop.f32.mrb[0].mxu0
    %3542 = vmatprep.mubr.f32.mxu0 0.0
    %3543 = vmatmul.mubr.f32.gmra.mrb[0].mxu0 %v3441
    %v3544 = vpop.f32.mrb[0].mxu0
    %v3545 = vadd.f32 %v3417, %v3544
    %v3546 = vpop.f32.mrb[0].mxu0
    %3547 = vdwg.mxu0
    %v3548 = vmax.f32 %v3510, 0.0
    %v3549 = vmax.f32 %v3515, 0.0
    %v3550 = vmax.f32 %v3520, 0.0
    %v3551 = vmax.f32 %v3525, 0.0
    %v3552 = vmax.f32 %v3530, 0.0
    %v3553 = vmax.f32 %v3535, 0.0
    %v3554 = vmax.f32 %v3540, 0.0
    %v3555 = vmax.f32 %v3545, 0.0
    %v3556 = vld [vmem:[%s10] sm:$0xff]
    %v3557 = vld [vmem:[%s10 + $0x8] sm:$0xff]
    %v3558 = vld [vmem:[%s10 + $0x10] sm:$0xff]
    %v3559 = vld [vmem:[%s10 + $0x18] sm:$0xff]
    %v3560 = vld [vmem:[%s11] sm:$0x1]
    %v3562 = vlaneseq
    %v3563 = vshrl.u32 %v3562, 7
    %v3564 = vsub.s32 0, %v3563
    %v3565 = vrot.slane %v3560, %v3564
    %vm3567 = vcmask 261120
    %v3569 = vsel %vm3567, %v3548, 0
    %v3572 = vsel %vm3567, %v3549, 0
    %v3575 = vsel %vm3567, %v3550, 0
    %v3578 = vsel %vm3567, %v3551, 0
    %v3581 = vsel %vm3567, %v3552, 0
    %v3584 = vsel %vm3567, %v3553, 0
    %v3587 = vsel %vm3567, %v3554, 0
    %v3590 = vsel %vm3567, %v3555, 0
    %3592 = vmatprep.subr.mxu0 0.0
    %3593 = vmatpush1.msra.mxu0 %v3556
    %3594 = vmatprep.subr.mxu0 0.0
    %3595 = vmatpush1.msra.mxu0 %v3557
    %3596 = vmatprep.subr.mxu0 0.0
    %3597 = vmatpush1.msra.mxu0 %v3558
    %3598 = vmatprep.subr.mxu0 0.0
    %3599 = vmatpush1.msra.mxu0 %v3559
    %3600 = vmatprep.subr.mxu0 0.0
    %3601 = vmatpush1.msra.mxu0 0.0
    %3602 = vmatprep.subr.mxu0 0.0
    %3603 = vmatpush1.msra.mxu0 0.0
    %3604 = vmatprep.subr.mxu0 0.0
    %3605 = vmatpush1.msra.mxu0 0.0
    %3606 = vmatprep.subr.mxu0 0.0
    %3607 = vmatpush1.msra.mxu0 0.0
    %3608 = vmatprep.subr.mxu0 0.0
    %3609 = vmatpush1.msra.mxu0 0.0
    %3610 = vmatprep.subr.mxu0 0.0
    %3611 = vmatpush1.msra.mxu0 0.0
    %3612 = vmatprep.subr.mxu0 0.0
    %3613 = vmatpush1.msra.mxu0 0.0
    %3614 = vmatprep.subr.mxu0 0.0
    %3615 = vmatpush1.msra.mxu0 0.0
    %3616 = vmatprep.subr.mxu0 0.0
    %3617 = vmatpush1.msra.mxu0 0.0
    %3618 = vmatprep.subr.mxu0 0.0
    %3619 = vmatpush1.msra.mxu0 0.0
    %3620 = vmatprep.subr.mxu0 0.0
    %3621 = vmatpush1.msra.mxu0 0.0
    %3622 = vmatprep.subr.mxu0 0.0
    %3623 = vmatpush1.msra.mxu0 0.0
    %3624 = vmatprep.subr.mxu0 0.0
    %3625 = vmatpush1.msra.mxu0 0.0
    %3626 = vmatprep.subr.mxu0 0.0
    %3627 = vmatpush1.msra.mxu0 0.0
    %3628 = vmatprep.subr.mxu0 0.0
    %3629 = vmatpush1.msra.mxu0 0.0
    %3630 = vmatprep.subr.mxu0 0.0
    %3631 = vmatpush1.msra.mxu0 0.0
    %3632 = vmatprep.subr.mxu0 0.0
    %3633 = vmatpush1.msra.mxu0 0.0
    %3634 = vmatprep.subr.mxu0 0.0
    %3635 = vmatpush1.msra.mxu0 0.0
    %3636 = vmatprep.subr.mxu0 0.0
    %3637 = vmatpush1.msra.mxu0 0.0
    %3638 = vmatprep.subr.mxu0 0.0
    %3639 = vmatpush1.msra.mxu0 0.0
    %3640 = vmatprep.subr.mxu0 0.0
    %3641 = vmatpush1.msra.mxu0 0.0
    %3642 = vmatprep.subr.mxu0 0.0
    %3643 = vmatpush1.msra.mxu0 0.0
    %3644 = vmatprep.subr.mxu0 0.0
    %3645 = vmatpush1.msra.mxu0 0.0
    %3646 = vmatprep.subr.mxu0 0.0
    %3647 = vmatpush1.msra.mxu0 0.0
    %3648 = vmatprep.subr.mxu0 0.0
    %3649 = vmatpush1.msra.mxu0 0.0
    %3650 = vmatprep.subr.mxu0 0.0
    %3651 = vmatpush1.msra.mxu0 0.0
    %3652 = vmatprep.subr.mxu0 0.0
    %3653 = vmatpush1.msra.mxu0 0.0
    %3654 = vmatprep.subr.mxu0 0.0
    %3655 = vmatpush1.msra.mxu0 0.0
    %3656 = vmatprep.mubr.f32.mxu0 0.0
    %3657 = vmatmul.mubr.f32.gmra.mrb[0].mxu0 %v3569
    %v3658 = vpop.f32.mrb[0].mxu0
    %v3659 = vadd.f32 %v3565, %v3658
    %v3660 = vpop.f32.mrb[0].mxu0
    %3661 = vmatprep.mubr.f32.mxu0 0.0
    %3662 = vmatmul.mubr.f32.gmra.mrb[0].mxu0 %v3572
    %v3663 = vpop.f32.mrb[0].mxu0
    %v3664 = vadd.f32 %v3565, %v3663
    %v3665 = vpop.f32.mrb[0].mxu0
    %3666 = vmatprep.mubr.f32.mxu0 0.0
    %3667 = vmatmul.mubr.f32.gmra.mrb[0].mxu0 %v3575
    %v3668 = vpop.f32.mrb[0].mxu0
    %v3669 = vadd.f32 %v3565, %v3668
    %v3670 = vpop.f32.mrb[0].mxu0
    %3671 = vmatprep.mubr.f32.mxu0 0.0
    %3672 = vmatmul.mubr.f32.gmra.mrb[0].mxu0 %v3578
    %v3673 = vpop.f32.mrb[0].mxu0
    %v3674 = vadd.f32 %v3565, %v3673
    %v3675 = vpop.f32.mrb[0].mxu0
    %3676 = vmatprep.mubr.f32.mxu0 0.0
    %3677 = vmatmul.mubr.f32.gmra.mrb[0].mxu0 %v3581
    %v3678 = vpop.f32.mrb[0].mxu0
    %v3679 = vadd.f32 %v3565, %v3678
    %v3680 = vpop.f32.mrb[0].mxu0
    %3681 = vmatprep.mubr.f32.mxu0 0.0
    %3682 = vmatmul.mubr.f32.gmra.mrb[0].mxu0 %v3584
    %v3683 = vpop.f32.mrb[0].mxu0
    %v3684 = vadd.f32 %v3565, %v3683
    %v3685 = vpop.f32.mrb[0].mxu0
    %3686 = vmatprep.mubr.f32.mxu0 0.0
    %3687 = vmatmul.mubr.f32.gmra.mrb[0].mxu0 %v3587
    %v3688 = vpop.f32.mrb[0].mxu0
    %v3689 = vadd.f32 %v3565, %v3688
    %v3690 = vpop.f32.mrb[0].mxu0
    %3691 = vmatprep.mubr.f32.mxu0 0.0
    %3692 = vmatmul.mubr.f32.gmra.mrb[0].mxu0 %v3590
    %v3693 = vpop.f32.mrb[0].mxu0
    %v3694 = vadd.f32 %v3565, %v3693
    %v3695 = vpop.f32.mrb[0].mxu0
    %3696 = vdwg.mxu0
    %v3697 = vadd.f32 %v3269, %v3659
    %v3698 = vadd.f32 %v3270, %v3664
    %v3699 = vadd.f32 %v3271, %v3669
    %v3700 = vadd.f32 %v3272, %v3674
    %v3701 = vadd.f32 %v3273, %v3679
    %v3702 = vadd.f32 %v3274, %v3684
    %v3703 = vadd.f32 %v3275, %v3689
    %v3704 = vadd.f32 %v3276, %v3694
    %3705 = vst.msk [vmem:[#allocation5] sm:$0xff] %vm66, %v3697
    %3706 = vst.msk [vmem:[#allocation5 + $0x8] sm:$0xff] %vm66, %v3698
    %3707 = vst.msk [vmem:[#allocation5 + $0x10] sm:$0xff] %vm66, %v3699
    %3708 = vst.msk [vmem:[#allocation5 + $0x18] sm:$0xff] %vm66, %v3700
    %3709 = vst.msk [vmem:[#allocation5 + $0x20] sm:$0xff] %vm66, %v3701
    %3710 = vst.msk [vmem:[#allocation5 + $0x28] sm:$0xff] %vm66, %v3702
    %3711 = vst.msk [vmem:[#allocation5 + $0x30] sm:$0xff] %vm66, %v3703
    %3712 = vst.msk [vmem:[#allocation5 + $0x38] sm:$0xff] %vm66, %v3704
    // Predicated region
    $region54: #{tpu_custom_call.1} parent=1 // pred_check
      _
    $region55: #{tpu_custom_call.1} parent=1 // pred_check_branch
      %3714 = sbr.rel (0) target = $region57
    $region56: #{tpu_custom_call.1} parent=1 // pred_region
      %s3716 = ssub.s32 1024, 1024
      %3717 = vsyncadd [#allocation4], %s3716
      %s3718 = sshll.u32 [#allocation5], 4
      %s3719 = int_to_ptr.vmem [resolvable:$true] %s3718
      %3724 = dma.vmem_to_hbm [thread:$0]  %s3719, 1024, %s12, [#allocation4], 128, 128, 8
    $region57: #{tpu_custom_call.1} parent=1 // pred_fallthru
      _
    // Predicated region
    $region58: #{tpu_custom_call.1} parent=1 // pred_check
      _
    $region59: #{tpu_custom_call.1} parent=1 // pred_check_branch
      %3726 = sbr.rel (0) target = $region61
    $region60: #{tpu_custom_call.1} parent=1 // pred_region
      %3727 = dma.done [#allocation4], 1024
    $region61: #{tpu_custom_call.1} parent=1 // pred_fallthru
      _
    %3728 = vsyncpa [#allocation3], 1
    %3729 = vsyncpa [#allocation4], 1

</llo_original>
